<compile_context>
chip_gen: v7x
topology: tpu7x:2x2x1
jax: 0.10.0
libtpu: 0.0.40
codegen_flags: <defaults>
</compile_context>

<pallas_src>
import functools

import jax
import jax.numpy as jnp
from jax import lax
from jax.experimental import pallas as pl
from jax.experimental.pallas import tpu as pltpu


# ------------------------------ fused kernel -------------------------------- #

def _bottleneck_kernel(x_ref, w1_ref, w2_ref, w3_ref,
                       s1_ref, b1_ref, s2_ref, b2_ref, s3_ref, b3_ref,
                       o_ref, y1p_ref, *, H, W, Cin, C, Cout, TH):
    """Fused Bottleneck for one (batch, row-tile) grid cell.

    x_ref  : (1, H, W, Cin)   full batch element (resident across row tiles)
    w1_ref : (Cin, C)         1x1 conv weight
    w2_ref : (3, 3*C, C)      3x3 conv weight, per-ky im2col layout (kx, cin)
    w3_ref : (C, Cout)        1x1 conv weight, Cout == Cin (downsample=None)
    s*/b*  : (1, C)/(1, Cout) folded eval-mode BatchNorm scale / bias (f32)
    o_ref  : (1, TH, W, Cout) output row tile
    y1p_ref: (TH+2, W, C)     f32 VMEM scratch: conv1 output + 1-row halo
                              (no W padding; column shifts use pltpu.roll)
    """
    row0 = pl.multiple_of(pl.program_id(1) * TH, TH)   # first output row of tile

    # Hoist BN scale/bias and conv1 weight reads (JAX does not CSE broadcasts).
    s1 = s1_ref[...]; b1 = b1_ref[...]
    s2 = s2_ref[...]; b2 = b2_ref[...]
    s3 = s3_ref[...]; b3 = b3_ref[...]
    w1 = w1_ref[...]

    def conv1(x2d):            # (R, Cin) -> (R, C): 1x1 conv + bn1 + relu (f32)
        y = jnp.dot(x2d, w1, preferred_element_type=jnp.float32)
        return jnp.maximum(y * s1 + b1, 0.0)

    # ---- stage 1: conv1 (1x1) + bn1 + relu into the row-padded scratch ------
    # Only the body and the two halo rows are written (no blanket zeroing).
    # The scratch persists across grid steps, so both halo rows are ALWAYS
    # written (computed or zero) to avoid reading stale data.
    xb = x_ref[0, pl.ds(row0, TH), :, :]                       # (TH, W, Cin)
    y1p_ref[pl.ds(1, TH), :, :] = conv1(xb.reshape(TH * W, Cin)).reshape(TH, W, C)

    zero_row = jnp.zeros((W, C), jnp.float32)
    if TH == H:
        # Full-image tile (default): halo rows are always outside the image.
        y1p_ref[0, :, :] = zero_row
        y1p_ref[TH + 1, :, :] = zero_row
    else:
        # Row-tiled fallback path (image does not fit VMEM in one tile).
        @pl.when(row0 > 0)
        def _():
            xr = x_ref[0, pl.ds(row0 - 1, 1), :, :].reshape(W, Cin)
            y1p_ref[0, :, :] = conv1(xr)

        @pl.when(row0 == 0)
        def _():
            y1p_ref[0, :, :] = zero_row

        @pl.when(row0 + TH < H)
        def _():
            xr = x_ref[0, pl.ds(row0 + TH, 1), :, :].reshape(W, Cin)
            y1p_ref[TH + 1, :, :] = conv1(xr)

        @pl.when(row0 + TH == H)
        def _():
            y1p_ref[TH + 1, :, :] = zero_row

    # ---- stage 2: conv2 (3x3, stride 1, pad 1) + bn2 + relu ------------------
    # Column-shifted views built once with XLU rotates (wrapped edge column
    # zeroed), then per-ky im2col slab (TH*W, 3C) x (3C, C) on the MXU.
    y1 = y1p_ref[...]                                          # (TH+2, W, C) f32
    wcol = lax.broadcasted_iota(jnp.int32, (TH + 2, W, C), 1)
    left = jnp.where(wcol != 0, pltpu.roll(y1, 1, 1), 0.0)          # y1[., w-1, .]
    right = jnp.where(wcol != W - 1, pltpu.roll(y1, W - 1, 1), 0.0)  # y1[., w+1, .]

    acc = jnp.zeros((TH * W, C), jnp.float32)
    for ky in range(3):                                        # unrolled
        sl = slice(ky, ky + TH)
        slab = jnp.concatenate([left[sl], y1[sl], right[sl]], axis=-1)
        acc = acc + jnp.dot(slab.reshape(TH * W, 3 * C).astype(w2_ref.dtype),
                            w2_ref[ky], preferred_element_type=jnp.float32)
    y2 = jnp.maximum(acc * s2 + b2, 0.0)                       # (TH*W, C) f32

    # ---- stage 3: conv3 (1x1) + bn3 + identity add + relu --------------------
    y3 = jnp.dot(y2.astype(w3_ref.dtype), w3_ref[...],
                 preferred_element_type=jnp.float32)
    y3 = y3 * s3 + b3
    # Re-read the input tile for the residual add (narrow live range; the
    # stage-1 activation is not carried across the 3x3 accumulation).
    x_res = x_ref[0, pl.ds(row0, TH), :, :].reshape(TH * W, Cin)
    y3 = jnp.maximum(y3 + x_res.astype(jnp.float32), 0.0)
    o_ref[...] = y3.reshape(1, TH, W, Cout).astype(o_ref.dtype)


# --------------------------------- wrappers --------------------------------- #

def fold_bn(gamma, beta, mean, var, eps=1e-5):
    scale = gamma / jnp.sqrt(var + eps)
    bias = beta - mean * scale
    return scale.astype(jnp.float32), bias.astype(jnp.float32)


def _vmem_estimate(H, W, Cin, C, Cout, TH, act_bytes):
    return (2 * H * W * Cin * act_bytes            # resident x, double-buffered
            + 2 * TH * W * Cout * act_bytes        # output tile, double-buffered
            + (TH + 2) * W * C * 4                 # f32 conv1 scratch
            + 2 * (Cin * C + 9 * C * C + C * Cout) * act_bytes)


def _pick_tile_rows(H, W, Cin, C, Cout, act_bytes, budget_bytes=48 * 2**20):
    """Largest row tile (preferably the full image) whose working set fits."""
    cands = [H] + [th for th in range(8 * (H // 16), 7, -8) if H % th == 0]
    for th in cands:
        if _vmem_estimate(H, W, Cin, C, Cout, th, act_bytes) <= budget_bytes:
            return th
    return cands[-1]


def bottleneck_forward_nhwc(x_nhwc, params, *, stride=1, tile_rows=None,
                            compute_dtype=None):
    """Fused Bottleneck forward, NHWC in / NHWC out, single pallas_call."""
    if stride != 1:
        # TODO(synk): stride>1 requires the downsample branch on the residual.
        raise NotImplementedError("downsample=None bottleneck requires stride=1")
    N, H, W, Cin = x_nhwc.shape
    C = params["w1"].shape[1]
    Cout = params["w3"].shape[1]
    assert Cin == Cout, "identity add requires in_channel == out_channel * 4"

    cdt = jnp.dtype(compute_dtype) if compute_dtype is not None else x_nhwc.dtype
    act_bytes = jnp.dtype(cdt).itemsize

    s1, b1 = fold_bn(*params["bn1"])
    s2, b2 = fold_bn(*params["bn2"])
    s3, b3 = fold_bn(*params["bn3"])

    x = x_nhwc.astype(cdt)
    w1 = params["w1"].astype(cdt)
    # (3,3,C,C) -> (3, 3C, C): per-ky im2col weight, (kx, cin) flattened into K.
    w2 = params["w2"].reshape(3, 3 * C, C).astype(cdt)
    w3 = params["w3"].astype(cdt)

    TH = tile_rows if tile_rows is not None else _pick_tile_rows(
        H, W, Cin, C, Cout, act_bytes)
    assert H % TH == 0, (H, TH)
    grid = (N, H // TH)

    est = _vmem_estimate(H, W, Cin, C, Cout, TH, act_bytes)
    vmem_limit = int(min(64 * 2**20, max(32 * 2**20, 2 * est)))  # <= v7x physical

    kern = functools.partial(_bottleneck_kernel, H=H, W=W, Cin=Cin, C=C,
                             Cout=Cout, TH=TH)
    const2 = lambda n, t: (0, 0)
    out = pl.pallas_call(
        kern,
        out_shape=jax.ShapeDtypeStruct((N, H, W, Cout), cdt),
        grid=grid,
        in_specs=[
            # Full batch element; block index constant in t, so x is DMA'd once
            # per image and stays VMEM-resident across its row tiles.
            pl.BlockSpec((1, H, W, Cin), lambda n, t: (n, 0, 0, 0)),
            pl.BlockSpec((Cin, C), const2),
            pl.BlockSpec((3, 3 * C, C), lambda n, t: (0, 0, 0)),
            pl.BlockSpec((C, Cout), const2),
            pl.BlockSpec((1, C), const2),
            pl.BlockSpec((1, C), const2),
            pl.BlockSpec((1, C), const2),
            pl.BlockSpec((1, C), const2),
            pl.BlockSpec((1, Cout), const2),
            pl.BlockSpec((1, Cout), const2),
        ],
        out_specs=pl.BlockSpec((1, TH, W, Cout), lambda n, t: (n, t, 0, 0)),
        scratch_shapes=[pltpu.VMEM((TH + 2, W, C), jnp.float32)],
        compiler_params=pltpu.CompilerParams(
            # t is "arbitrary": megacore shards the batch axis only, so the
            # t-constant x block is not fetched redundantly by both cores.
            dimension_semantics=("parallel", "arbitrary"),
            vmem_limit_bytes=vmem_limit,
        ),
    )(x, w1, w2, w3,
      s1.reshape(1, C), b1.reshape(1, C),
      s2.reshape(1, C), b2.reshape(1, C),
      s3.reshape(1, Cout), b3.reshape(1, Cout))
    return out


def bottleneck_forward(x_nchw, params, stride=1, tile_rows=None,
                       compute_dtype=None):
    """NCHW wrapper matching the PyTorch module layout.

    The two transposes are boundary-only layout plumbing; stay NHWC end-to-end
    (bottleneck_forward_nhwc) to avoid those extra HBM passes.
    """
    x = jnp.transpose(x_nchw, (0, 2, 3, 1))             # NCHW -> NHWC
    out = bottleneck_forward_nhwc(x, params, stride=stride, tile_rows=tile_rows,
                                  compute_dtype=compute_dtype)
    return jnp.transpose(out, (0, 3, 1, 2))             # NHWC -> NCHW


# ------------------------------ reference (JAX) ------------------------------ #

def bottleneck_reference(x_nchw, params, stride=1):
    x = jnp.transpose(x_nchw, (0, 2, 3, 1))
    identity = x
    dn = ("NHWC", "HWIO", "NHWC")
    s1, b1 = fold_bn(*params["bn1"])
    s2, b2 = fold_bn(*params["bn2"])
    s3, b3 = fold_bn(*params["bn3"])

    w1 = params["w1"][None, None]          # (1,1,Cin,C)
    w2 = params["w2"]                      # (3,3,C,C)
    w3 = params["w3"][None, None]          # (1,1,C,4C)

    out = lax.conv_general_dilated(x, w1, (1, 1), "VALID", dimension_numbers=dn)
    out = jnp.maximum(out * s1 + b1, 0.0)
    out = lax.conv_general_dilated(out, w2, (stride, stride), ((1, 1), (1, 1)),
                                   dimension_numbers=dn)
    out = jnp.maximum(out * s2 + b2, 0.0)
    out = lax.conv_general_dilated(out, w3, (1, 1), "VALID", dimension_numbers=dn)
    out = jnp.maximum(out * s3 + b3 + identity, 0.0)
    return jnp.transpose(out, (0, 3, 1, 2))


# ----------------------------------- main ------------------------------------ #

if __name__ == "__main__":
    # Bottleneck(in_channel=32, out_channel=8), expansion=4, stride=1,
    # downsample=None  ->  in_channel == out_channel*4, identity add valid.
    in_channel, out_channel, expansion = 32, 8, 4
    stride = 1
    N, H, W = 2, 16, 16

    key = jax.random.PRNGKey(0)
    ks = jax.random.split(key, 16)

    params = {
        # conv weights stored channels-last: (Cin, Cout) / (kh, kw, Cin, Cout)
        "w1": 0.1 * jax.random.normal(ks[0], (in_channel, out_channel), jnp.float32),
        "w2": 0.1 * jax.random.normal(ks[1], (3, 3, out_channel, out_channel), jnp.float32),
        "w3": 0.1 * jax.random.normal(ks[2], (out_channel, out_channel * expansion), jnp.float32),
        # (gamma, beta, running_mean, running_var)
        "bn1": (jax.random.uniform(ks[3], (out_channel,), minval=0.5, maxval=1.5),
                0.1 * jax.random.normal(ks[4], (out_channel,)),
                0.1 * jax.random.normal(ks[5], (out_channel,)),
                jax.random.uniform(ks[6], (out_channel,), minval=0.5, maxval=1.5)),
        "bn2": (jax.random.uniform(ks[7], (out_channel,), minval=0.5, maxval=1.5),
                0.1 * jax.random.normal(ks[8], (out_channel,)),
                0.1 * jax.random.normal(ks[9], (out_channel,)),
                jax.random.uniform(ks[10], (out_channel,), minval=0.5, maxval=1.5)),
        "bn3": (jax.random.uniform(ks[11], (out_channel * expansion,), minval=0.5, maxval=1.5),
                0.1 * jax.random.normal(ks[12], (out_channel * expansion,)),
                0.1 * jax.random.normal(ks[13], (out_channel * expansion,)),
                jax.random.uniform(ks[14], (out_channel * expansion,), minval=0.5, maxval=1.5)),
    }

    x = jax.random.normal(ks[15], (N, in_channel, H, W), jnp.float32)  # NCHW
    ref = bottleneck_reference(x, params, stride=stride)

    # 1) default path: full-image row tile, f32
    fwd = jax.jit(functools.partial(bottleneck_forward, stride=stride))
    out = jax.block_until_ready(fwd(x, params))
    assert out.shape == (N, out_channel * expansion, H, W), out.shape
    err = float(jnp.max(jnp.abs(out - ref)))
    assert jnp.allclose(out, ref, atol=1e-4, rtol=1e-4), err

    # 2) row-tiled path (TH < H): exercises the pl.when halo conv1 rows
    fwd8 = jax.jit(functools.partial(bottleneck_forward, stride=stride, tile_rows=8))
    out8 = jax.block_until_ready(fwd8(x, params))
    err8 = float(jnp.max(jnp.abs(out8 - ref)))
    assert jnp.allclose(out8, ref, atol=1e-4, rtol=1e-4), err8

    # 3) bf16 activations/weights (f32 accumulation), looser tolerance
    fwd_bf = jax.jit(functools.partial(bottleneck_forward, stride=stride,
                                       compute_dtype=jnp.bfloat16))
    out_bf = jax.block_until_ready(fwd_bf(x, params)).astype(jnp.float32)
    err_bf = float(jnp.max(jnp.abs(out_bf - ref)))
    assert jnp.allclose(out_bf, ref, atol=1e-1, rtol=1e-1), err_bf

    print("KERNEL_OK")
</pallas_src>

<mosaic_0001>
module attributes {stable_mosaic.version = 11 : i64} {
  func.func @_bottleneck_kernel(%arg0: i32, %arg1: i32, %arg2: memref<1x16x16x32xf32, #tpu.memory_space<vmem>>, %arg3: memref<32x8xf32, #tpu.memory_space<vmem>>, %arg4: memref<3x24x8xf32, #tpu.memory_space<vmem>>, %arg5: memref<8x32xf32, #tpu.memory_space<vmem>>, %arg6: memref<1x8xf32, #tpu.memory_space<vmem>>, %arg7: memref<1x8xf32, #tpu.memory_space<vmem>>, %arg8: memref<1x8xf32, #tpu.memory_space<vmem>>, %arg9: memref<1x8xf32, #tpu.memory_space<vmem>>, %arg10: memref<1x32xf32, #tpu.memory_space<vmem>>, %arg11: memref<1x32xf32, #tpu.memory_space<vmem>>, %arg12: memref<1x16x16x32xf32, #tpu.memory_space<vmem>>, %arg13: memref<18x16x8xf32, #tpu.memory_space<vmem>>) attributes {dimension_semantics = [#tpu.dimension_semantics<parallel>, #tpu.dimension_semantics<arbitrary>], iteration_bounds = array<i64: 2, 1>, scalar_prefetch = 0 : i64, scratch_operands = 1 : i64, tpu.core_type = #tpu.core_type<tc>, window_params = [{transform_indices = @transform_0, window_bounds = array<i64: 1, 16, 16, 32>}, {pipeline_mode = #tpu.pipeline_mode<synchronous>, transform_indices = @transform_1, window_bounds = array<i64: 32, 8>}, {pipeline_mode = #tpu.pipeline_mode<synchronous>, transform_indices = @transform_2, window_bounds = array<i64: 3, 24, 8>}, {pipeline_mode = #tpu.pipeline_mode<synchronous>, transform_indices = @transform_3, window_bounds = array<i64: 8, 32>}, {pipeline_mode = #tpu.pipeline_mode<synchronous>, transform_indices = @transform_4, window_bounds = array<i64: 1, 8>}, {pipeline_mode = #tpu.pipeline_mode<synchronous>, transform_indices = @transform_5, window_bounds = array<i64: 1, 8>}, {pipeline_mode = #tpu.pipeline_mode<synchronous>, transform_indices = @transform_6, window_bounds = array<i64: 1, 8>}, {pipeline_mode = #tpu.pipeline_mode<synchronous>, transform_indices = @transform_7, window_bounds = array<i64: 1, 8>}, {pipeline_mode = #tpu.pipeline_mode<synchronous>, transform_indices = @transform_8, window_bounds = array<i64: 1, 32>}, {pipeline_mode = #tpu.pipeline_mode<synchronous>, transform_indices = @transform_9, window_bounds = array<i64: 1, 32>}, {transform_indices = @transform_10, window_bounds = array<i64: 1, 16, 16, 32>}]} {
    %c16_i32 = arith.constant 16 : i32
    %0 = arith.muli %arg1, %c16_i32 : i32
    %1 = tpu.assume_multiple %0, 16 : i32
    %c0 = arith.constant 0 : index
    %c0_0 = arith.constant 0 : index
    %2 = vector.load %arg6[%c0, %c0_0] : memref<1x8xf32, #tpu.memory_space<vmem>>, vector<1x8xf32>
    %c0_1 = arith.constant 0 : index
    %c0_2 = arith.constant 0 : index
    %3 = vector.load %arg7[%c0_1, %c0_2] : memref<1x8xf32, #tpu.memory_space<vmem>>, vector<1x8xf32>
    %c0_3 = arith.constant 0 : index
    %c0_4 = arith.constant 0 : index
    %4 = vector.load %arg8[%c0_3, %c0_4] : memref<1x8xf32, #tpu.memory_space<vmem>>, vector<1x8xf32>
    %c0_5 = arith.constant 0 : index
    %c0_6 = arith.constant 0 : index
    %5 = vector.load %arg9[%c0_5, %c0_6] : memref<1x8xf32, #tpu.memory_space<vmem>>, vector<1x8xf32>
    %c0_7 = arith.constant 0 : index
    %c0_8 = arith.constant 0 : index
    %6 = vector.load %arg10[%c0_7, %c0_8] : memref<1x32xf32, #tpu.memory_space<vmem>>, vector<1x32xf32>
    %c0_9 = arith.constant 0 : index
    %c0_10 = arith.constant 0 : index
    %7 = vector.load %arg11[%c0_9, %c0_10] : memref<1x32xf32, #tpu.memory_space<vmem>>, vector<1x32xf32>
    %c0_11 = arith.constant 0 : index
    %c0_12 = arith.constant 0 : index
    %8 = vector.load %arg3[%c0_11, %c0_12] : memref<32x8xf32, #tpu.memory_space<vmem>>, vector<32x8xf32>
    %c0_13 = arith.constant 0 : index
    %9 = arith.index_cast %1 : i32 to index
    %c0_14 = arith.constant 0 : index
    %c0_15 = arith.constant 0 : index
    %10 = vector.load %arg2[%c0_13, %9, %c0_14, %c0_15] : memref<1x16x16x32xf32, #tpu.memory_space<vmem>>, vector<1x16x16x32xf32>
    %11 = vector.shape_cast %10 : vector<1x16x16x32xf32> to vector<16x16x32xf32>
    %12 = vector.shape_cast %11 : vector<16x16x32xf32> to vector<256x32xf32>
    %cst = arith.constant dense<0.000000e+00> : vector<256x8xf32>
    %13 = tpu.matmul %12, %8, %cst {dimension_numbers = #tpu.dot_dimension_numbers<[1], [0], [0], [1], [0, 0, 1, 1], [], []>} : vector<256x32xf32>, vector<32x8xf32>, vector<256x8xf32> -> vector<256x8xf32>
    %14 = vector.broadcast %2 : vector<1x8xf32> to vector<256x8xf32>
    %15 = arith.mulf %13, %14 : vector<256x8xf32>
    %16 = vector.broadcast %3 : vector<1x8xf32> to vector<256x8xf32>
    %17 = arith.addf %15, %16 : vector<256x8xf32>
    %cst_16 = arith.constant 0.000000e+00 : f32
    %18 = vector.broadcast %cst_16 : f32 to vector<256x8xf32>
    %19 = arith.maximumf %17, %18 : vector<256x8xf32>
    %20 = vector.shape_cast %19 : vector<256x8xf32> to vector<16x16x8xf32>
    %c1 = arith.constant 1 : index
    %c0_17 = arith.constant 0 : index
    %c0_18 = arith.constant 0 : index
    %21 = vector.load %arg13[%c1, %c0_17, %c0_18] : memref<18x16x8xf32, #tpu.memory_space<vmem>>, vector<16x16x8xf32>
    tpu.vector_store %arg13[%c1, %c0_17, %c0_18], %20 {strides = array<i32>} : memref<18x16x8xf32, #tpu.memory_space<vmem>>, vector<16x16x8xf32>,
    %cst_19 = arith.constant 0.000000e+00 : f32
    %22 = vector.broadcast %cst_19 : f32 to vector<16x8xf32>
    %c0_20 = arith.constant 0 : index
    %c0_21 = arith.constant 0 : index
    %c0_22 = arith.constant 0 : index
    %23 = vector.load %arg13[%c0_20, %c0_21, %c0_22] : memref<18x16x8xf32, #tpu.memory_space<vmem>>, vector<1x16x8xf32>
    %24 = vector.shape_cast %23 : vector<1x16x8xf32> to vector<16x8xf32>
    %25 = vector.shape_cast %22 : vector<16x8xf32> to vector<1x16x8xf32>
    tpu.vector_store %arg13[%c0_20, %c0_21, %c0_22], %25 {strides = array<i32>} : memref<18x16x8xf32, #tpu.memory_space<vmem>>, vector<1x16x8xf32>,
    %c17 = arith.constant 17 : index
    %c0_23 = arith.constant 0 : index
    %c0_24 = arith.constant 0 : index
    %26 = vector.load %arg13[%c17, %c0_23, %c0_24] : memref<18x16x8xf32, #tpu.memory_space<vmem>>, vector<1x16x8xf32>
    %27 = vector.shape_cast %26 : vector<1x16x8xf32> to vector<16x8xf32>
    %28 = vector.shape_cast %22 : vector<16x8xf32> to vector<1x16x8xf32>
    tpu.vector_store %arg13[%c17, %c0_23, %c0_24], %28 {strides = array<i32>} : memref<18x16x8xf32, #tpu.memory_space<vmem>>, vector<1x16x8xf32>,
    %c0_25 = arith.constant 0 : index
    %c0_26 = arith.constant 0 : index
    %c0_27 = arith.constant 0 : index
    %29 = vector.load %arg13[%c0_25, %c0_26, %c0_27] : memref<18x16x8xf32, #tpu.memory_space<vmem>>, vector<18x16x8xf32>
    %30 = tpu.iota {dimensions = array<i32: 1>} : vector<18x16x8xi32>
    %c0_i32 = arith.constant 0 : i32
    %31 = vector.broadcast %c0_i32 : i32 to vector<18x16x8xi32>
    %32 = arith.cmpi ne, %30, %31 : vector<18x16x8xi32>
    %c1_i32 = arith.constant 1 : i32
    %33 = tpu.dynamic_rotate %29 by %c1_i32 dim 1 : vector<18x16x8xf32>, i32 -> vector<18x16x8xf32>
    %cst_28 = arith.constant 0.000000e+00 : f32
    %34 = vector.broadcast %cst_28 : f32 to vector<18x16x8xf32>
    %35 = arith.select %32, %33, %34 : vector<18x16x8xi1>, vector<18x16x8xf32>
    %c15_i32 = arith.constant 15 : i32
    %36 = vector.broadcast %c15_i32 : i32 to vector<18x16x8xi32>
    %37 = arith.cmpi ne, %30, %36 : vector<18x16x8xi32>
    %c15_i32_29 = arith.constant 15 : i32
    %38 = tpu.dynamic_rotate %29 by %c15_i32_29 dim 1 : vector<18x16x8xf32>, i32 -> vector<18x16x8xf32>
    %cst_30 = arith.constant 0.000000e+00 : f32
    %39 = vector.broadcast %cst_30 : f32 to vector<18x16x8xf32>
    %40 = arith.select %37, %38, %39 : vector<18x16x8xi1>, vector<18x16x8xf32>
    %cst_31 = arith.constant 0.000000e+00 : f32
    %41 = vector.broadcast %cst_31 : f32 to vector<256x8xf32>
    %42 = vector.extract_strided_slice %35 {offsets = [0, 0, 0], sizes = [16, 16, 8], strides = [1, 1, 1]} : vector<18x16x8xf32> to vector<16x16x8xf32>
    %43 = vector.extract_strided_slice %29 {offsets = [0, 0, 0], sizes = [16, 16, 8], strides = [1, 1, 1]} : vector<18x16x8xf32> to vector<16x16x8xf32>
    %44 = vector.extract_strided_slice %40 {offsets = [0, 0, 0], sizes = [16, 16, 8], strides = [1, 1, 1]} : vector<18x16x8xf32> to vector<16x16x8xf32>
    %45 = tpu.concatenate %42, %43, %44 in 2 : vector<16x16x8xf32>, vector<16x16x8xf32>, vector<16x16x8xf32> -> vector<16x16x24xf32>
    %46 = vector.shape_cast %45 : vector<16x16x24xf32> to vector<256x24xf32>
    %c0_32 = arith.constant 0 : index
    %c0_33 = arith.constant 0 : index
    %c0_34 = arith.constant 0 : index
    %47 = vector.load %arg4[%c0_32, %c0_33, %c0_34] : memref<3x24x8xf32, #tpu.memory_space<vmem>>, vector<1x24x8xf32>
    %48 = vector.shape_cast %47 : vector<1x24x8xf32> to vector<24x8xf32>
    %cst_35 = arith.constant dense<0.000000e+00> : vector<256x8xf32>
    %49 = tpu.matmul %46, %48, %cst_35 {dimension_numbers = #tpu.dot_dimension_numbers<[1], [0], [0], [1], [0, 0, 1, 1], [], []>} : vector<256x24xf32>, vector<24x8xf32>, vector<256x8xf32> -> vector<256x8xf32>
    %50 = arith.addf %41, %49 : vector<256x8xf32>
    %51 = vector.extract_strided_slice %35 {offsets = [1, 0, 0], sizes = [16, 16, 8], strides = [1, 1, 1]} : vector<18x16x8xf32> to vector<16x16x8xf32>
    %52 = vector.extract_strided_slice %29 {offsets = [1, 0, 0], sizes = [16, 16, 8], strides = [1, 1, 1]} : vector<18x16x8xf32> to vector<16x16x8xf32>
    %53 = vector.extract_strided_slice %40 {offsets = [1, 0, 0], sizes = [16, 16, 8], strides = [1, 1, 1]} : vector<18x16x8xf32> to vector<16x16x8xf32>
    %54 = tpu.concatenate %51, %52, %53 in 2 : vector<16x16x8xf32>, vector<16x16x8xf32>, vector<16x16x8xf32> -> vector<16x16x24xf32>
    %55 = vector.shape_cast %54 : vector<16x16x24xf32> to vector<256x24xf32>
    %c1_36 = arith.constant 1 : index
    %c0_37 = arith.constant 0 : index
    %c0_38 = arith.constant 0 : index
    %56 = vector.load %arg4[%c1_36, %c0_37, %c0_38] : memref<3x24x8xf32, #tpu.memory_space<vmem>>, vector<1x24x8xf32>
    %57 = vector.shape_cast %56 : vector<1x24x8xf32> to vector<24x8xf32>
    %cst_39 = arith.constant dense<0.000000e+00> : vector<256x8xf32>
    %58 = tpu.matmul %55, %57, %cst_39 {dimension_numbers = #tpu.dot_dimension_numbers<[1], [0], [0], [1], [0, 0, 1, 1], [], []>} : vector<256x24xf32>, vector<24x8xf32>, vector<256x8xf32> -> vector<256x8xf32>
    %59 = arith.addf %50, %58 : vector<256x8xf32>
    %60 = vector.extract_strided_slice %35 {offsets = [2, 0, 0], sizes = [16, 16, 8], strides = [1, 1, 1]} : vector<18x16x8xf32> to vector<16x16x8xf32>
    %61 = vector.extract_strided_slice %29 {offsets = [2, 0, 0], sizes = [16, 16, 8], strides = [1, 1, 1]} : vector<18x16x8xf32> to vector<16x16x8xf32>
    %62 = vector.extract_strided_slice %40 {offsets = [2, 0, 0], sizes = [16, 16, 8], strides = [1, 1, 1]} : vector<18x16x8xf32> to vector<16x16x8xf32>
    %63 = tpu.concatenate %60, %61, %62 in 2 : vector<16x16x8xf32>, vector<16x16x8xf32>, vector<16x16x8xf32> -> vector<16x16x24xf32>
    %64 = vector.shape_cast %63 : vector<16x16x24xf32> to vector<256x24xf32>
    %c2 = arith.constant 2 : index
    %c0_40 = arith.constant 0 : index
    %c0_41 = arith.constant 0 : index
    %65 = vector.load %arg4[%c2, %c0_40, %c0_41] : memref<3x24x8xf32, #tpu.memory_space<vmem>>, vector<1x24x8xf32>
    %66 = vector.shape_cast %65 : vector<1x24x8xf32> to vector<24x8xf32>
    %cst_42 = arith.constant dense<0.000000e+00> : vector<256x8xf32>
    %67 = tpu.matmul %64, %66, %cst_42 {dimension_numbers = #tpu.dot_dimension_numbers<[1], [0], [0], [1], [0, 0, 1, 1], [], []>} : vector<256x24xf32>, vector<24x8xf32>, vector<256x8xf32> -> vector<256x8xf32>
    %68 = arith.addf %59, %67 : vector<256x8xf32>
    %69 = vector.broadcast %4 : vector<1x8xf32> to vector<256x8xf32>
    %70 = arith.mulf %68, %69 : vector<256x8xf32>
    %71 = vector.broadcast %5 : vector<1x8xf32> to vector<256x8xf32>
    %72 = arith.addf %70, %71 : vector<256x8xf32>
    %cst_43 = arith.constant 0.000000e+00 : f32
    %73 = vector.broadcast %cst_43 : f32 to vector<256x8xf32>
    %74 = arith.maximumf %72, %73 : vector<256x8xf32>
    %c0_44 = arith.constant 0 : index
    %c0_45 = arith.constant 0 : index
    %75 = vector.load %arg5[%c0_44, %c0_45] : memref<8x32xf32, #tpu.memory_space<vmem>>, vector<8x32xf32>
    %cst_46 = arith.constant dense<0.000000e+00> : vector<256x32xf32>
    %76 = tpu.matmul %74, %75, %cst_46 {dimension_numbers = #tpu.dot_dimension_numbers<[1], [0], [0], [1], [0, 0, 1, 1], [], []>} : vector<256x8xf32>, vector<8x32xf32>, vector<256x32xf32> -> vector<256x32xf32>
    %77 = vector.broadcast %6 : vector<1x32xf32> to vector<256x32xf32>
    %78 = arith.mulf %76, %77 : vector<256x32xf32>
    %79 = vector.broadcast %7 : vector<1x32xf32> to vector<256x32xf32>
    %80 = arith.addf %78, %79 : vector<256x32xf32>
    %c0_47 = arith.constant 0 : index
    %81 = arith.index_cast %1 : i32 to index
    %c0_48 = arith.constant 0 : index
    %c0_49 = arith.constant 0 : index
    %82 = vector.load %arg2[%c0_47, %81, %c0_48, %c0_49] : memref<1x16x16x32xf32, #tpu.memory_space<vmem>>, vector<1x16x16x32xf32>
    %83 = vector.shape_cast %82 : vector<1x16x16x32xf32> to vector<16x16x32xf32>
    %84 = vector.shape_cast %83 : vector<16x16x32xf32> to vector<256x32xf32>
    %85 = arith.addf %80, %84 : vector<256x32xf32>
    %cst_50 = arith.constant 0.000000e+00 : f32
    %86 = vector.broadcast %cst_50 : f32 to vector<256x32xf32>
    %87 = arith.maximumf %85, %86 : vector<256x32xf32>
    %88 = vector.shape_cast %87 : vector<256x32xf32> to vector<1x16x16x32xf32>
    %c0_51 = arith.constant 0 : index
    %c0_52 = arith.constant 0 : index
    %c0_53 = arith.constant 0 : index
    %c0_54 = arith.constant 0 : index
    %89 = vector.load %arg12[%c0_51, %c0_52, %c0_53, %c0_54] : memref<1x16x16x32xf32, #tpu.memory_space<vmem>>, vector<1x16x16x32xf32>
    tpu.vector_store %arg12[%c0_51, %c0_52, %c0_53, %c0_54], %88 {strides = array<i32>} : memref<1x16x16x32xf32, #tpu.memory_space<vmem>>, vector<1x16x16x32xf32>,
    return
  }
  func.func @transform_0(%arg0: i32, %arg1: i32) -> (i32, i32, i32, i32) {
    %c0_i32 = arith.constant 0 : i32
    %c0_i32_0 = arith.constant 0 : i32
    %c0_i32_1 = arith.constant 0 : i32
    %c0_i32_2 = arith.constant 0 : i32
    return %arg0, %c0_i32, %c0_i32_0, %c0_i32_1 : i32, i32, i32, i32
  }
  func.func @transform_1(%arg0: i32, %arg1: i32) -> (i32, i32) {
    %c0_i32 = arith.constant 0 : i32
    %c0_i32_0 = arith.constant 0 : i32
    %c0_i32_1 = arith.constant 0 : i32
    return %c0_i32, %c0_i32_0 : i32, i32
  }
  func.func @transform_2(%arg0: i32, %arg1: i32) -> (i32, i32, i32) {
    %c0_i32 = arith.constant 0 : i32
    %c0_i32_0 = arith.constant 0 : i32
    %c0_i32_1 = arith.constant 0 : i32
    %c0_i32_2 = arith.constant 0 : i32
    return %c0_i32, %c0_i32_0, %c0_i32_1 : i32, i32, i32
  }
  func.func @transform_3(%arg0: i32, %arg1: i32) -> (i32, i32) {
    %c0_i32 = arith.constant 0 : i32
    %c0_i32_0 = arith.constant 0 : i32
    %c0_i32_1 = arith.constant 0 : i32
    return %c0_i32, %c0_i32_0 : i32, i32
  }
  func.func @transform_4(%arg0: i32, %arg1: i32) -> (i32, i32) {
    %c0_i32 = arith.constant 0 : i32
    %c0_i32_0 = arith.constant 0 : i32
    %c0_i32_1 = arith.constant 0 : i32
    return %c0_i32, %c0_i32_0 : i32, i32
  }
  func.func @transform_5(%arg0: i32, %arg1: i32) -> (i32, i32) {
    %c0_i32 = arith.constant 0 : i32
    %c0_i32_0 = arith.constant 0 : i32
    %c0_i32_1 = arith.constant 0 : i32
    return %c0_i32, %c0_i32_0 : i32, i32
  }
  func.func @transform_6(%arg0: i32, %arg1: i32) -> (i32, i32) {
    %c0_i32 = arith.constant 0 : i32
    %c0_i32_0 = arith.constant 0 : i32
    %c0_i32_1 = arith.constant 0 : i32
    return %c0_i32, %c0_i32_0 : i32, i32
  }
  func.func @transform_7(%arg0: i32, %arg1: i32) -> (i32, i32) {
    %c0_i32 = arith.constant 0 : i32
    %c0_i32_0 = arith.constant 0 : i32
    %c0_i32_1 = arith.constant 0 : i32
    return %c0_i32, %c0_i32_0 : i32, i32
  }
  func.func @transform_8(%arg0: i32, %arg1: i32) -> (i32, i32) {
    %c0_i32 = arith.constant 0 : i32
    %c0_i32_0 = arith.constant 0 : i32
    %c0_i32_1 = arith.constant 0 : i32
    return %c0_i32, %c0_i32_0 : i32, i32
  }
  func.func @transform_9(%arg0: i32, %arg1: i32) -> (i32, i32) {
    %c0_i32 = arith.constant 0 : i32
    %c0_i32_0 = arith.constant 0 : i32
    %c0_i32_1 = arith.constant 0 : i32
    return %c0_i32, %c0_i32_0 : i32, i32
  }
  func.func @transform_10(%arg0: i32, %arg1: i32) -> (i32, i32, i32, i32) {
    %c0_i32 = arith.constant 0 : i32
    %c0_i32_0 = arith.constant 0 : i32
    %c0_i32_1 = arith.constant 0 : i32
    return %arg0, %arg1, %c0_i32, %c0_i32_0 : i32, i32, i32, i32
  }
}

</mosaic_0001>

<llo_original>
// kernel: bottleneck_forward.1
$region0: #{bottleneck_forward.1}
  #allocation0 [shape = 'u32[]', space=smem, size = 0x4, offset = 0x4, fixed_abs, tag = 'smem constant byte address 0x4 - core index']
  #allocation1 [shape = 'u32[144,128]{1,0:T(1,128)}', space=vmem, size = 0x12000, scoped, tag = 'internal scratch']
  #allocation2 [shape = 'f32[18,16,8]{2,1,0:T(8,128)}', space=vmem, size = 0x24000, scoped, tag = 'scratch operand']
  %s0 = inlined_call_operand.hbm [shape: f32[2,16,16,32], index: 0, kind: input, shape index: {}]
  %s1 = inlined_call_operand.vmem [shape: f32[32,8], index: 1, kind: input, shape index: {}]
  %s2 = inlined_call_operand.vmem [shape: f32[3,24,8], index: 2, kind: input, shape index: {}]
  %s3 = inlined_call_operand.vmem [shape: f32[8,32], index: 3, kind: input, shape index: {}]
  %s4 = inlined_call_operand.vmem [shape: f32[1,8], index: 4, kind: input, shape index: {}]
  %s5 = inlined_call_operand.vmem [shape: f32[1,8], index: 5, kind: input, shape index: {}]
  %s6 = inlined_call_operand.vmem [shape: f32[1,8], index: 6, kind: input, shape index: {}]
  %s7 = inlined_call_operand.vmem [shape: f32[1,8], index: 7, kind: input, shape index: {}]
  %s8 = inlined_call_operand.vmem [shape: f32[1,32], index: 8, kind: input, shape index: {}]
  %s9 = inlined_call_operand.vmem [shape: f32[1,32], index: 9, kind: input, shape index: {}]
  %s10 = inlined_call_operand.hbm [shape: f32[2,16,16,32], index: 10, kind: output, shape index: {}]
  %s11 = sld [smem:[#allocation0]]
  $region77: #{bottleneck_forward.1} parent=0
    _
  %s13 = ssub.s32 1, %s11
  %s14 = scalar_select 0, %s13, %s11
  $region1: #{bottleneck_forward.1} parent=0
    #allocation3 [shape = 'u8[262144]{0}', space=vmem, size = 0x40000, scoped, tag = 'input window, operand 0']
    #allocation4 [shape = 's32[2]{0}', space=sflag, size = 0x8, scoped, tag = 'scoped memory for bottleneck_forward.1']
    #allocation5 [shape = 's32[2]{0}', space=sflag, size = 0x8, scoped, tag = 'scoped memory for bottleneck_forward.1']
    #allocation6 [shape = 'u8[262144]{0}', space=vmem, size = 0x40000, scoped, tag = 'output window, operand 0']
    %15 = vsyncpa [#allocation4], 0
    %s16 = scalar_lea.sflag [#allocation4], 1
    %17 = vsyncpa %s16, 0
    %18 = vsyncpa [#allocation5], 0
    %s19 = scalar_lea.sflag [#allocation5], 1
    %20 = vsyncpa %s19, 0
    loop: start=0, step=1, limit=4
    $region2: #{bottleneck_forward.1} parent=1 // loop_pre_header
      _
    $region3: #{bottleneck_forward.1} parent=1 // loop_header
      %s22 = sphi 0, %s26
      %p23 = scmp.ge.s32.totalorder %s22, 4
      %s29 = sphi 0, %s41
      %s30 = sphi 0, %s37
      %s31 = sphi 0, %s29
      %s32 = sphi 0, %s30
      %s33 = sphi 0, %s31
      %s34 = sphi 0, %s32
      %s44 = sphi 0, %s46
      %s47 = sphi 0, %s44
      %s48 = sphi 0, %s47
      %s64 = sphi 0, %s48
      %s68 = sphi 0, %s68
      %s70 = sphi 0, %s68
      %s71 = sphi 0, %s70
      %s85 = sphi 0, %s71
      %s89 = sphi 0, %s89
      %s91 = sphi 0, %s89
      %s92 = sphi 0, %s91
      %s106 = sphi 0, %s92
      %s110 = sphi 0, %s110
      %s112 = sphi 0, %s110
      %s113 = sphi 0, %s112
      %s127 = sphi 0, %s113
      %s131 = sphi 0, %s131
      %s133 = sphi 0, %s131
      %s134 = sphi 0, %s133
      %s148 = sphi 0, %s134
      %s152 = sphi 0, %s152
      %s154 = sphi 0, %s152
      %s155 = sphi 0, %s154
      %s169 = sphi 0, %s155
      %s173 = sphi 0, %s173
      %s175 = sphi 0, %s173
      %s176 = sphi 0, %s175
      %s190 = sphi 0, %s176
      %s194 = sphi 0, %s194
      %s196 = sphi 0, %s194
      %s197 = sphi 0, %s196
      %s211 = sphi 0, %s197
      %s215 = sphi 0, %s215
      %s217 = sphi 0, %s215
      %s218 = sphi 0, %s217
      %s232 = sphi 0, %s218
      %s236 = sphi 0, %s236
      %s238 = sphi 0, %s236
      %s239 = sphi 0, %s238
      %s253 = sphi 0, %s239
      %s261 = sphi 0, %s263
      %s264 = sphi 0, %s261
      %s265 = sphi 0, %s264
      %s281 = sphi 0, %s265
    $region4: #{bottleneck_forward.1} parent=1 // loop_header_branch
      %25 = sbr.rel (%p23) target = $region8
    $region5: #{bottleneck_forward.1} parent=1 // loop_body
      %s27 = ssub.s32 %s22, 1
      %s28 = ssub.s32 %s22, 2
      %s35 = sadd.s32 1, %s30
      %p36 = scmp.ge.s32.totalorder %s35, 1
      %s37 = scalar_select %p36, 0, %s35
      %s38 = sadd.s32 1, %s29
      %s39 = scalar_select %p36, %s38, %s29
      %p40 = scmp.ge.s32.totalorder %s39, 2
      %s41 = scalar_select %p40, 0, %s39
      %s42 = ssub.s32 %s29, %s41
      %p43 = scmp.eq.s32.totalorder %s42, 0
      %s45 = sadd.s32 %s44, 1
      %s46 = scalar_select %p43, %s44, %s45
      %p49 = pneg %p43
      %p50 = scmp.eq.s32.totalorder %s22, 1
      %p51 = por %p49, %p50
      %p52 = scmp.ne.s32.totalorder %s44, %s47
      %p53 = scmp.eq.s32.totalorder %s22, 0
      %p54 = por %p52, %p53
      %p55 = scmp.ne.s32.totalorder %s44, %s47
      %p56 = scmp.eq.s32.totalorder %s27, 1
      %p57 = por %p55, %p56
      %p58 = scmp.ne.s32.totalorder %s47, %s48
      %p59 = scmp.eq.s32.totalorder %s27, 0
      %p60 = por %p58, %p59
      %p61 = scmp.ne.s32.totalorder %s47, %s48
      %p62 = scmp.eq.s32.totalorder %s28, 1
      %p63 = por %p61, %p62
      %p65 = scmp.ne.s32.totalorder %s48, %s64
      %p66 = scmp.eq.s32.totalorder %s28, 0
      %p67 = por %p65, %p66
      %s69 = sadd.s32 %s68, 1
      %p72 = scmp.eq.s32.totalorder %s22, 1
      %p73 = scmp.ne.s32.totalorder %s68, %s70
      %p74 = scmp.eq.s32.totalorder %s22, 0
      %p75 = por %p73, %p74
      %p76 = scmp.ne.s32.totalorder %s68, %s70
      %p77 = scmp.eq.s32.totalorder %s27, 1
      %p78 = por %p76, %p77
      %p79 = scmp.ne.s32.totalorder %s70, %s71
      %p80 = scmp.eq.s32.totalorder %s27, 0
      %p81 = por %p79, %p80
      %p82 = scmp.ne.s32.totalorder %s70, %s71
      %p83 = scmp.eq.s32.totalorder %s28, 1
      %p84 = por %p82, %p83
      %p86 = scmp.ne.s32.totalorder %s71, %s85
      %p87 = scmp.eq.s32.totalorder %s28, 0
      %p88 = por %p86, %p87
      %s90 = sadd.s32 %s89, 1
      %p93 = scmp.eq.s32.totalorder %s22, 1
      %p94 = scmp.ne.s32.totalorder %s89, %s91
      %p95 = scmp.eq.s32.totalorder %s22, 0
      %p96 = por %p94, %p95
      %p97 = scmp.ne.s32.totalorder %s89, %s91
      %p98 = scmp.eq.s32.totalorder %s27, 1
      %p99 = por %p97, %p98
      %p100 = scmp.ne.s32.totalorder %s91, %s92
      %p101 = scmp.eq.s32.totalorder %s27, 0
      %p102 = por %p100, %p101
      %p103 = scmp.ne.s32.totalorder %s91, %s92
      %p104 = scmp.eq.s32.totalorder %s28, 1
      %p105 = por %p103, %p104
      %p107 = scmp.ne.s32.totalorder %s92, %s106
      %p108 = scmp.eq.s32.totalorder %s28, 0
      %p109 = por %p107, %p108
      %s111 = sadd.s32 %s110, 1
      %p114 = scmp.eq.s32.totalorder %s22, 1
      %p115 = scmp.ne.s32.totalorder %s110, %s112
      %p116 = scmp.eq.s32.totalorder %s22, 0
      %p117 = por %p115, %p116
      %p118 = scmp.ne.s32.totalorder %s110, %s112
      %p119 = scmp.eq.s32.totalorder %s27, 1
      %p120 = por %p118, %p119
      %p121 = scmp.ne.s32.totalorder %s112, %s113
      %p122 = scmp.eq.s32.totalorder %s27, 0
      %p123 = por %p121, %p122
      %p124 = scmp.ne.s32.totalorder %s112, %s113
      %p125 = scmp.eq.s32.totalorder %s28, 1
      %p126 = por %p124, %p125
      %p128 = scmp.ne.s32.totalorder %s113, %s127
      %p129 = scmp.eq.s32.totalorder %s28, 0
      %p130 = por %p128, %p129
      %s132 = sadd.s32 %s131, 1
      %p135 = scmp.eq.s32.totalorder %s22, 1
      %p136 = scmp.ne.s32.totalorder %s131, %s133
      %p137 = scmp.eq.s32.totalorder %s22, 0
      %p138 = por %p136, %p137
      %p139 = scmp.ne.s32.totalorder %s131, %s133
      %p140 = scmp.eq.s32.totalorder %s27, 1
      %p141 = por %p139, %p140
      %p142 = scmp.ne.s32.totalorder %s133, %s134
      %p143 = scmp.eq.s32.totalorder %s27, 0
      %p144 = por %p142, %p143
      %p145 = scmp.ne.s32.totalorder %s133, %s134
      %p146 = scmp.eq.s32.totalorder %s28, 1
      %p147 = por %p145, %p146
      %p149 = scmp.ne.s32.totalorder %s134, %s148
      %p150 = scmp.eq.s32.totalorder %s28, 0
      %p151 = por %p149, %p150
      %s153 = sadd.s32 %s152, 1
      %p156 = scmp.eq.s32.totalorder %s22, 1
      %p157 = scmp.ne.s32.totalorder %s152, %s154
      %p158 = scmp.eq.s32.totalorder %s22, 0
      %p159 = por %p157, %p158
      %p160 = scmp.ne.s32.totalorder %s152, %s154
      %p161 = scmp.eq.s32.totalorder %s27, 1
      %p162 = por %p160, %p161
      %p163 = scmp.ne.s32.totalorder %s154, %s155
      %p164 = scmp.eq.s32.totalorder %s27, 0
      %p165 = por %p163, %p164
      %p166 = scmp.ne.s32.totalorder %s154, %s155
      %p167 = scmp.eq.s32.totalorder %s28, 1
      %p168 = por %p166, %p167
      %p170 = scmp.ne.s32.totalorder %s155, %s169
      %p171 = scmp.eq.s32.totalorder %s28, 0
      %p172 = por %p170, %p171
      %s174 = sadd.s32 %s173, 1
      %p177 = scmp.eq.s32.totalorder %s22, 1
      %p178 = scmp.ne.s32.totalorder %s173, %s175
      %p179 = scmp.eq.s32.totalorder %s22, 0
      %p180 = por %p178, %p179
      %p181 = scmp.ne.s32.totalorder %s173, %s175
      %p182 = scmp.eq.s32.totalorder %s27, 1
      %p183 = por %p181, %p182
      %p184 = scmp.ne.s32.totalorder %s175, %s176
      %p185 = scmp.eq.s32.totalorder %s27, 0
      %p186 = por %p184, %p185
      %p187 = scmp.ne.s32.totalorder %s175, %s176
      %p188 = scmp.eq.s32.totalorder %s28, 1
      %p189 = por %p187, %p188
      %p191 = scmp.ne.s32.totalorder %s176, %s190
      %p192 = scmp.eq.s32.totalorder %s28, 0
      %p193 = por %p191, %p192
      %s195 = sadd.s32 %s194, 1
      %p198 = scmp.eq.s32.totalorder %s22, 1
      %p199 = scmp.ne.s32.totalorder %s194, %s196
      %p200 = scmp.eq.s32.totalorder %s22, 0
      %p201 = por %p199, %p200
      %p202 = scmp.ne.s32.totalorder %s194, %s196
      %p203 = scmp.eq.s32.totalorder %s27, 1
      %p204 = por %p202, %p203
      %p205 = scmp.ne.s32.totalorder %s196, %s197
      %p206 = scmp.eq.s32.totalorder %s27, 0
      %p207 = por %p205, %p206
      %p208 = scmp.ne.s32.totalorder %s196, %s197
      %p209 = scmp.eq.s32.totalorder %s28, 1
      %p210 = por %p208, %p209
      %p212 = scmp.ne.s32.totalorder %s197, %s211
      %p213 = scmp.eq.s32.totalorder %s28, 0
      %p214 = por %p212, %p213
      %s216 = sadd.s32 %s215, 1
      %p219 = scmp.eq.s32.totalorder %s22, 1
      %p220 = scmp.ne.s32.totalorder %s215, %s217
      %p221 = scmp.eq.s32.totalorder %s22, 0
      %p222 = por %p220, %p221
      %p223 = scmp.ne.s32.totalorder %s215, %s217
      %p224 = scmp.eq.s32.totalorder %s27, 1
      %p225 = por %p223, %p224
      %p226 = scmp.ne.s32.totalorder %s217, %s218
      %p227 = scmp.eq.s32.totalorder %s27, 0
      %p228 = por %p226, %p227
      %p229 = scmp.ne.s32.totalorder %s217, %s218
      %p230 = scmp.eq.s32.totalorder %s28, 1
      %p231 = por %p229, %p230
      %p233 = scmp.ne.s32.totalorder %s218, %s232
      %p234 = scmp.eq.s32.totalorder %s28, 0
      %p235 = por %p233, %p234
      %s237 = sadd.s32 %s236, 1
      %p240 = scmp.eq.s32.totalorder %s22, 1
      %p241 = scmp.ne.s32.totalorder %s236, %s238
      %p242 = scmp.eq.s32.totalorder %s22, 0
      %p243 = por %p241, %p242
      %p244 = scmp.ne.s32.totalorder %s236, %s238
      %p245 = scmp.eq.s32.totalorder %s27, 1
      %p246 = por %p244, %p245
      %p247 = scmp.ne.s32.totalorder %s238, %s239
      %p248 = scmp.eq.s32.totalorder %s27, 0
      %p249 = por %p247, %p248
      %p250 = scmp.ne.s32.totalorder %s238, %s239
      %p251 = scmp.eq.s32.totalorder %s28, 1
      %p252 = por %p250, %p251
      %p254 = scmp.ne.s32.totalorder %s239, %s253
      %p255 = scmp.eq.s32.totalorder %s28, 0
      %p256 = por %p254, %p255
      %s257 = ssub.s32 %s29, %s41
      %s258 = ssub.s32 %s30, %s37
      %s259 = sor.u32 %s257, %s258
      %p260 = scmp.eq.s32.totalorder %s259, 0
      %s262 = sadd.s32 %s261, 1
      %s263 = scalar_select %p260, %s261, %s262
      %p266 = pneg %p260
      %p267 = scmp.eq.s32.totalorder %s22, 1
      %p268 = por %p266, %p267
      %p269 = scmp.ne.s32.totalorder %s261, %s264
      %p270 = scmp.eq.s32.totalorder %s22, 0
      %p271 = por %p269, %p270
      %p272 = scmp.ne.s32.totalorder %s261, %s264
      %p273 = scmp.eq.s32.totalorder %s27, 1
      %p274 = por %p272, %p273
      %p275 = scmp.ne.s32.totalorder %s264, %s265
      %p276 = scmp.eq.s32.totalorder %s27, 0
      %p277 = por %p275, %p276
      %p278 = scmp.ne.s32.totalorder %s264, %s265
      %p279 = scmp.eq.s32.totalorder %s28, 1
      %p280 = por %p278, %p279
      %p282 = scmp.ne.s32.totalorder %s265, %s281
      %p283 = scmp.eq.s32.totalorder %s28, 0
      %p284 = por %p282, %p283
      %p285 = scmp.le.s32.totalorder 1, %s22
      %p286 = scmp.lt.s32.totalorder %s22, 3
      %p287 = pnand %p285, %p286
      %p288 = pneg %p287
      // Predicated region
      $region9: #{bottleneck_forward.1} parent=5 // pred_check
        _
      $region10: #{bottleneck_forward.1} parent=5 // pred_check_branch
        %290 = sbr.rel (%p287) target = $region12
      $region11: #{bottleneck_forward.1} parent=5 // pred_region
        %s291 = ssub.s32 %s22, 1
        // Predicated region
        $region13: #{bottleneck_forward.1} parent=11 // pred_check
          %p292 = pneg %p81
        $region14: #{bottleneck_forward.1} parent=11 // pred_check_branch
          %294 = sbr.rel (%p292) target = $region16
        $region15: #{bottleneck_forward.1} parent=11 // pred_region
          _
        $region16: #{bottleneck_forward.1} parent=11 // pred_fallthru
          _
        // Predicated region
        $region17: #{bottleneck_forward.1} parent=11 // pred_check
          %p295 = pneg %p102
        $region18: #{bottleneck_forward.1} parent=11 // pred_check_branch
          %297 = sbr.rel (%p295) target = $region20
        $region19: #{bottleneck_forward.1} parent=11 // pred_region
          _
        $region20: #{bottleneck_forward.1} parent=11 // pred_fallthru
          _
        // Predicated region
        $region21: #{bottleneck_forward.1} parent=11 // pred_check
          %p298 = pneg %p123
        $region22: #{bottleneck_forward.1} parent=11 // pred_check_branch
          %300 = sbr.rel (%p298) target = $region24
        $region23: #{bottleneck_forward.1} parent=11 // pred_region
          _
        $region24: #{bottleneck_forward.1} parent=11 // pred_fallthru
          _
        // Predicated region
        $region25: #{bottleneck_forward.1} parent=11 // pred_check
          %p301 = pneg %p144
        $region26: #{bottleneck_forward.1} parent=11 // pred_check_branch
          %303 = sbr.rel (%p301) target = $region28
        $region27: #{bottleneck_forward.1} parent=11 // pred_region
          _
        $region28: #{bottleneck_forward.1} parent=11 // pred_fallthru
          _
        // Predicated region
        $region29: #{bottleneck_forward.1} parent=11 // pred_check
          %p304 = pneg %p165
        $region30: #{bottleneck_forward.1} parent=11 // pred_check_branch
          %306 = sbr.rel (%p304) target = $region32
        $region31: #{bottleneck_forward.1} parent=11 // pred_region
          _
        $region32: #{bottleneck_forward.1} parent=11 // pred_fallthru
          _
        // Predicated region
        $region33: #{bottleneck_forward.1} parent=11 // pred_check
          %p307 = pneg %p186
        $region34: #{bottleneck_forward.1} parent=11 // pred_check_branch
          %309 = sbr.rel (%p307) target = $region36
        $region35: #{bottleneck_forward.1} parent=11 // pred_region
          _
        $region36: #{bottleneck_forward.1} parent=11 // pred_fallthru
          _
        // Predicated region
        $region37: #{bottleneck_forward.1} parent=11 // pred_check
          %p310 = pneg %p207
        $region38: #{bottleneck_forward.1} parent=11 // pred_check_branch
          %312 = sbr.rel (%p310) target = $region40
        $region39: #{bottleneck_forward.1} parent=11 // pred_region
          _
        $region40: #{bottleneck_forward.1} parent=11 // pred_fallthru
          _
        // Predicated region
        $region41: #{bottleneck_forward.1} parent=11 // pred_check
          %p313 = pneg %p228
        $region42: #{bottleneck_forward.1} parent=11 // pred_check_branch
          %315 = sbr.rel (%p313) target = $region44
        $region43: #{bottleneck_forward.1} parent=11 // pred_region
          _
        $region44: #{bottleneck_forward.1} parent=11 // pred_fallthru
          _
        // Predicated region
        $region45: #{bottleneck_forward.1} parent=11 // pred_check
          %p316 = pneg %p249
        $region46: #{bottleneck_forward.1} parent=11 // pred_check_branch
          %318 = sbr.rel (%p316) target = $region48
        $region47: #{bottleneck_forward.1} parent=11 // pred_region
          _
        $region48: #{bottleneck_forward.1} parent=11 // pred_fallthru
          _
      $region12: #{bottleneck_forward.1} parent=5 // pred_fallthru
        _
      %p319 = scmp.lt.s32.totalorder %s22, 2
      // Predicated region
      $region49: #{bottleneck_forward.1} parent=5 // pred_check
        %p320 = pneg %p319
      $region50: #{bottleneck_forward.1} parent=5 // pred_check_branch
        %322 = sbr.rel (%p320) target = $region52
      $region51: #{bottleneck_forward.1} parent=5 // pred_region
        // Predicated region
        $region53: #{bottleneck_forward.1} parent=51 // pred_check
          %p323 = pneg %p54
        $region54: #{bottleneck_forward.1} parent=51 // pred_check_branch
          %325 = sbr.rel (%p323) target = $region56
        $region55: #{bottleneck_forward.1} parent=51 // pred_region
          %s326 = sand.u32 %s44, 1
          %s327 = scalar_lea.sflag [#allocation4], %s326
          %s328 = sand.u32 %s44, 1
          %s329 = smul.addr %s328, 256
          %s330 = scalar_lea.vmem [#allocation3], %s329
          %s332 = ssub.s32 4096, 4096
          %333 = vsyncadd %s327, %s332
          %s334 = smul.addr %s29, 32
          %s335 = smul.addr %s334, 128
          %s336 = scalar_lea.hbm %s0, %s335
          %s337 = sshll.u32 %s330, 4
          %s338 = int_to_ptr.vmem [resolvable:$true] %s337
          %343 = dma.hbm_to_vmem [thread:$0]  %s336, 4096, %s338, %s327, 128, 128, 8
        $region56: #{bottleneck_forward.1} parent=51 // pred_fallthru
          _
      $region52: #{bottleneck_forward.1} parent=5 // pred_fallthru
        _
      %p344 = scmp.le.s32.totalorder 1, %s22
      %p345 = scmp.lt.s32.totalorder %s22, 3
      %p346 = pnand %p344, %p345
      %p347 = pneg %p346
      // Predicated region
      $region57: #{bottleneck_forward.1} parent=5 // pred_check
        _
      $region58: #{bottleneck_forward.1} parent=5 // pred_check_branch
        %349 = sbr.rel (%p346) target = $region60
      $region59: #{bottleneck_forward.1} parent=5 // pred_region
        %s350 = ssub.s32 %s22, 1
        %s351 = sand.u32 %s47, 1
        %s352 = scalar_lea.sflag [#allocation4], %s351
        %s353 = sand.u32 %s47, 1
        %s354 = smul.addr %s353, 256
        %s355 = scalar_lea.vmem [#allocation3], %s354
        // Predicated region
        $region61: #{bottleneck_forward.1} parent=59 // pred_check
          %p356 = pneg %p60
        $region62: #{bottleneck_forward.1} parent=59 // pred_check_branch
          %358 = sbr.rel (%p356) target = $region64
        $region63: #{bottleneck_forward.1} parent=59 // pred_region
          %359 = dma.done %s352, 4096
        $region64: #{bottleneck_forward.1} parent=59 // pred_fallthru
          _
        %s360 = sand.u32 %s47, 1
        %s361 = scalar_lea.sflag [#allocation4], %s360
        %s362 = sand.u32 %s47, 1
        %s363 = smul.addr %s362, 256
        %s364 = scalar_lea.vmem [#allocation3], %s363
        %p365 = pneg %p60
        %p366 = pneg %p57
        %p367 = pneg %p81
        %p368 = pneg %p78
        %p369 = pneg %p102
        %p370 = pneg %p99
        %p371 = pneg %p123
        %p372 = pneg %p120
        %p373 = pneg %p144
        %p374 = pneg %p141
        %p375 = pneg %p165
        %p376 = pneg %p162
        %p377 = pneg %p186
        %p378 = pneg %p183
        %p379 = pneg %p207
        %p380 = pneg %p204
        %p381 = pneg %p228
        %p382 = pneg %p225
        %p383 = pneg %p249
        %p384 = pneg %p246
        %p385 = pneg %p277
        %p386 = pneg %p274
        %s387 = sand.u32 %s264, 1
        %s388 = scalar_lea.sflag [#allocation5], %s387
        %s389 = sand.u32 %s264, 1
        %s390 = smul.addr %s389, 256
        %s391 = scalar_lea.vmem [#allocation6], %s390
        %s392 = smul.u32 16, %s32
        %s393 = smul.u32 %s32, 16
        %v394 = vld [vmem:[%s4] sm:$0x1]
        %v395 = vld [vmem:[%s5] sm:$0x1]
        %v396 = vld [vmem:[%s6] sm:$0x1]
        %v397 = vld [vmem:[%s7] sm:$0x1]
        %v398 = vld [vmem:[%s8] sm:$0x1]
        %v399 = vld [vmem:[%s9] sm:$0x1]
        %v400 = vld [vmem:[%s1] sm:$0xff]
        %v401 = vld [vmem:[%s1 + $0x8] sm:$0xff]
        %v402 = vld [vmem:[%s1 + $0x10] sm:$0xff]
        %v403 = vld [vmem:[%s1 + $0x18] sm:$0xff]
        %s404 = smul.u32 %s393, 16
        %s405 = scalar_lea.vmem %s355, %s404 [#allocation3]
        %v406 = vld [vmem:[%s405] sm:$0xff]
        %v407 = vld [vmem:[%s405 + $0x8] sm:$0xff]
        %v408 = vld [vmem:[%s405 + $0x10] sm:$0xff]
        %v409 = vld [vmem:[%s405 + $0x18] sm:$0xff]
        %v410 = vld [vmem:[%s405 + $0x20] sm:$0xff]
        %v411 = vld [vmem:[%s405 + $0x28] sm:$0xff]
        %v412 = vld [vmem:[%s405 + $0x30] sm:$0xff]
        %v413 = vld [vmem:[%s405 + $0x38] sm:$0xff]
        %v414 = vld [vmem:[%s405 + $0x40] sm:$0xff]
        %v415 = vld [vmem:[%s405 + $0x48] sm:$0xff]
        %v416 = vld [vmem:[%s405 + $0x50] sm:$0xff]
        %v417 = vld [vmem:[%s405 + $0x58] sm:$0xff]
        %v418 = vld [vmem:[%s405 + $0x60] sm:$0xff]
        %v419 = vld [vmem:[%s405 + $0x68] sm:$0xff]
        %v420 = vld [vmem:[%s405 + $0x70] sm:$0xff]
        %v421 = vld [vmem:[%s405 + $0x78] sm:$0xff]
        %v422 = vld [vmem:[%s405 + $0x80] sm:$0xff]
        %v423 = vld [vmem:[%s405 + $0x88] sm:$0xff]
        %v424 = vld [vmem:[%s405 + $0x90] sm:$0xff]
        %v425 = vld [vmem:[%s405 + $0x98] sm:$0xff]
        %v426 = vld [vmem:[%s405 + $0xa0] sm:$0xff]
        %v427 = vld [vmem:[%s405 + $0xa8] sm:$0xff]
        %v428 = vld [vmem:[%s405 + $0xb0] sm:$0xff]
        %v429 = vld [vmem:[%s405 + $0xb8] sm:$0xff]
        %v430 = vld [vmem:[%s405 + $0xc0] sm:$0xff]
        %v431 = vld [vmem:[%s405 + $0xc8] sm:$0xff]
        %v432 = vld [vmem:[%s405 + $0xd0] sm:$0xff]
        %v433 = vld [vmem:[%s405 + $0xd8] sm:$0xff]
        %v434 = vld [vmem:[%s405 + $0xe0] sm:$0xff]
        %v435 = vld [vmem:[%s405 + $0xe8] sm:$0xff]
        %v436 = vld [vmem:[%s405 + $0xf0] sm:$0xff]
        %v437 = vld [vmem:[%s405 + $0xf8] sm:$0xff]
        %vm438 = vcmask 261120
        %v440 = vsel %vm438, %v406, 0
        %v443 = vsel %vm438, %v407, 0
        %v446 = vsel %vm438, %v408, 0
        %v449 = vsel %vm438, %v409, 0
        %v452 = vsel %vm438, %v410, 0
        %v455 = vsel %vm438, %v411, 0
        %v458 = vsel %vm438, %v412, 0
        %v461 = vsel %vm438, %v413, 0
        %v464 = vsel %vm438, %v414, 0
        %v467 = vsel %vm438, %v415, 0
        %v470 = vsel %vm438, %v416, 0
        %v473 = vsel %vm438, %v417, 0
        %v476 = vsel %vm438, %v418, 0
        %v479 = vsel %vm438, %v419, 0
        %v482 = vsel %vm438, %v420, 0
        %v485 = vsel %vm438, %v421, 0
        %v488 = vsel %vm438, %v422, 0
        %v491 = vsel %vm438, %v423, 0
        %v494 = vsel %vm438, %v424, 0
        %v497 = vsel %vm438, %v425, 0
        %v500 = vsel %vm438, %v426, 0
        %v503 = vsel %vm438, %v427, 0
        %v506 = vsel %vm438, %v428, 0
        %v509 = vsel %vm438, %v429, 0
        %v512 = vsel %vm438, %v430, 0
        %v515 = vsel %vm438, %v431, 0
        %v518 = vsel %vm438, %v432, 0
        %v521 = vsel %vm438, %v433, 0
        %v524 = vsel %vm438, %v434, 0
        %v527 = vsel %vm438, %v435, 0
        %v530 = vsel %vm438, %v436, 0
        %v533 = vsel %vm438, %v437, 0
        %535 = vmatprep.subr.mxu0 0.0
        %536 = vmatpush1.msra.mxu0 %v400
        %537 = vmatprep.subr.mxu0 0.0
        %538 = vmatpush1.msra.mxu0 %v401
        %539 = vmatprep.subr.mxu0 0.0
        %540 = vmatpush1.msra.mxu0 %v402
        %541 = vmatprep.subr.mxu0 0.0
        %542 = vmatpush1.msra.mxu0 %v403
        %543 = vmatprep.subr.mxu0 0.0
        %544 = vmatpush1.msra.mxu0 0.0
        %545 = vmatprep.subr.mxu0 0.0
        %546 = vmatpush1.msra.mxu0 0.0
        %547 = vmatprep.subr.mxu0 0.0
        %548 = vmatpush1.msra.mxu0 0.0
        %549 = vmatprep.subr.mxu0 0.0
        %550 = vmatpush1.msra.mxu0 0.0
        %551 = vmatprep.subr.mxu0 0.0
        %552 = vmatpush1.msra.mxu0 0.0
        %553 = vmatprep.subr.mxu0 0.0
        %554 = vmatpush1.msra.mxu0 0.0
        %555 = vmatprep.subr.mxu0 0.0
        %556 = vmatpush1.msra.mxu0 0.0
        %557 = vmatprep.subr.mxu0 0.0
        %558 = vmatpush1.msra.mxu0 0.0
        %559 = vmatprep.subr.mxu0 0.0
        %560 = vmatpush1.msra.mxu0 0.0
        %561 = vmatprep.subr.mxu0 0.0
        %562 = vmatpush1.msra.mxu0 0.0
        %563 = vmatprep.subr.mxu0 0.0
        %564 = vmatpush1.msra.mxu0 0.0
        %565 = vmatprep.subr.mxu0 0.0
        %566 = vmatpush1.msra.mxu0 0.0
        %567 = vmatprep.subr.mxu0 0.0
        %568 = vmatpush1.msra.mxu0 0.0
        %569 = vmatprep.subr.mxu0 0.0
        %570 = vmatpush1.msra.mxu0 0.0
        %571 = vmatprep.subr.mxu0 0.0
        %572 = vmatpush1.msra.mxu0 0.0
        %573 = vmatprep.subr.mxu0 0.0
        %574 = vmatpush1.msra.mxu0 0.0
        %575 = vmatprep.subr.mxu0 0.0
        %576 = vmatpush1.msra.mxu0 0.0
        %577 = vmatprep.subr.mxu0 0.0
        %578 = vmatpush1.msra.mxu0 0.0
        %579 = vmatprep.subr.mxu0 0.0
        %580 = vmatpush1.msra.mxu0 0.0
        %581 = vmatprep.subr.mxu0 0.0
        %582 = vmatpush1.msra.mxu0 0.0
        %583 = vmatprep.subr.mxu0 0.0
        %584 = vmatpush1.msra.mxu0 0.0
        %585 = vmatprep.subr.mxu0 0.0
        %586 = vmatpush1.msra.mxu0 0.0
        %587 = vmatprep.subr.mxu0 0.0
        %588 = vmatpush1.msra.mxu0 0.0
        %589 = vmatprep.subr.mxu0 0.0
        %590 = vmatpush1.msra.mxu0 0.0
        %591 = vmatprep.subr.mxu0 0.0
        %592 = vmatpush1.msra.mxu0 0.0
        %593 = vmatprep.subr.mxu0 0.0
        %594 = vmatpush1.msra.mxu0 0.0
        %595 = vmatprep.subr.mxu0 0.0
        %596 = vmatpush1.msra.mxu0 0.0
        %597 = vmatprep.subr.mxu0 0.0
        %598 = vmatpush1.msra.mxu0 0.0
        %599 = vmatprep.mubr.f32.mxu0 0.0
        %600 = vmatmul.mubr.f32.gmra.mrb[0].mxu0 %v440
        %v601 = vpop.f32.mrb[0].mxu0
        %v602 = vadd.f32 0.0, %v601
        %v603 = vpop.f32.mrb[0].mxu0
        %604 = vmatprep.mubr.f32.mxu0 0.0
        %605 = vmatmul.mubr.f32.gmra.mrb[0].mxu0 %v443
        %v606 = vpop.f32.mrb[0].mxu0
        %v607 = vadd.f32 0.0, %v606
        %v608 = vpop.f32.mrb[0].mxu0
        %609 = vmatprep.mubr.f32.mxu0 0.0
        %610 = vmatmul.mubr.f32.gmra.mrb[0].mxu0 %v446
        %v611 = vpop.f32.mrb[0].mxu0
        %v612 = vadd.f32 0.0, %v611
        %v613 = vpop.f32.mrb[0].mxu0
        %614 = vmatprep.mubr.f32.mxu0 0.0
        %615 = vmatmul.mubr.f32.gmra.mrb[0].mxu0 %v449
        %v616 = vpop.f32.mrb[0].mxu0
        %v617 = vadd.f32 0.0, %v616
        %v618 = vpop.f32.mrb[0].mxu0
        %619 = vmatprep.mubr.f32.mxu0 0.0
        %620 = vmatmul.mubr.f32.gmra.mrb[0].mxu0 %v452
        %v621 = vpop.f32.mrb[0].mxu0
        %v622 = vadd.f32 0.0, %v621
        %v623 = vpop.f32.mrb[0].mxu0
        %624 = vmatprep.mubr.f32.mxu0 0.0
        %625 = vmatmul.mubr.f32.gmra.mrb[0].mxu0 %v455
        %v626 = vpop.f32.mrb[0].mxu0
        %v627 = vadd.f32 0.0, %v626
        %v628 = vpop.f32.mrb[0].mxu0
        %629 = vmatprep.mubr.f32.mxu0 0.0
        %630 = vmatmul.mubr.f32.gmra.mrb[0].mxu0 %v458
        %v631 = vpop.f32.mrb[0].mxu0
        %v632 = vadd.f32 0.0, %v631
        %v633 = vpop.f32.mrb[0].mxu0
        %634 = vmatprep.mubr.f32.mxu0 0.0
        %635 = vmatmul.mubr.f32.gmra.mrb[0].mxu0 %v461
        %v636 = vpop.f32.mrb[0].mxu0
        %v637 = vadd.f32 0.0, %v636
        %v638 = vpop.f32.mrb[0].mxu0
        %639 = vmatprep.mubr.f32.mxu0 0.0
        %640 = vmatmul.mubr.f32.gmra.mrb[0].mxu0 %v464
        %v641 = vpop.f32.mrb[0].mxu0
        %v642 = vadd.f32 0.0, %v641
        %v643 = vpop.f32.mrb[0].mxu0
        %644 = vmatprep.mubr.f32.mxu0 0.0
        %645 = vmatmul.mubr.f32.gmra.mrb[0].mxu0 %v467
        %v646 = vpop.f32.mrb[0].mxu0
        %v647 = vadd.f32 0.0, %v646
        %v648 = vpop.f32.mrb[0].mxu0
        %649 = vmatprep.mubr.f32.mxu0 0.0
        %650 = vmatmul.mubr.f32.gmra.mrb[0].mxu0 %v470
        %v651 = vpop.f32.mrb[0].mxu0
        %v652 = vadd.f32 0.0, %v651
        %v653 = vpop.f32.mrb[0].mxu0
        %654 = vmatprep.mubr.f32.mxu0 0.0
        %655 = vmatmul.mubr.f32.gmra.mrb[0].mxu0 %v473
        %v656 = vpop.f32.mrb[0].mxu0
        %v657 = vadd.f32 0.0, %v656
        %v658 = vpop.f32.mrb[0].mxu0
        %659 = vmatprep.mubr.f32.mxu0 0.0
        %660 = vmatmul.mubr.f32.gmra.mrb[0].mxu0 %v476
        %v661 = vpop.f32.mrb[0].mxu0
        %v662 = vadd.f32 0.0, %v661
        %v663 = vpop.f32.mrb[0].mxu0
        %664 = vmatprep.mubr.f32.mxu0 0.0
        %665 = vmatmul.mubr.f32.gmra.mrb[0].mxu0 %v479
        %v666 = vpop.f32.mrb[0].mxu0
        %v667 = vadd.f32 0.0, %v666
        %v668 = vpop.f32.mrb[0].mxu0
        %669 = vmatprep.mubr.f32.mxu0 0.0
        %670 = vmatmul.mubr.f32.gmra.mrb[0].mxu0 %v482
        %v671 = vpop.f32.mrb[0].mxu0
        %v672 = vadd.f32 0.0, %v671
        %v673 = vpop.f32.mrb[0].mxu0
        %674 = vmatprep.mubr.f32.mxu0 0.0
        %675 = vmatmul.mubr.f32.gmra.mrb[0].mxu0 %v485
        %v676 = vpop.f32.mrb[0].mxu0
        %v677 = vadd.f32 0.0, %v676
        %v678 = vpop.f32.mrb[0].mxu0
        %679 = vmatprep.mubr.f32.mxu0 0.0
        %680 = vmatmul.mubr.f32.gmra.mrb[0].mxu0 %v488
        %v681 = vpop.f32.mrb[0].mxu0
        %v682 = vadd.f32 0.0, %v681
        %v683 = vpop.f32.mrb[0].mxu0
        %684 = vmatprep.mubr.f32.mxu0 0.0
        %685 = vmatmul.mubr.f32.gmra.mrb[0].mxu0 %v491
        %v686 = vpop.f32.mrb[0].mxu0
        %v687 = vadd.f32 0.0, %v686
        %v688 = vpop.f32.mrb[0].mxu0
        %689 = vmatprep.mubr.f32.mxu0 0.0
        %690 = vmatmul.mubr.f32.gmra.mrb[0].mxu0 %v494
        %v691 = vpop.f32.mrb[0].mxu0
        %v692 = vadd.f32 0.0, %v691
        %v693 = vpop.f32.mrb[0].mxu0
        %694 = vmatprep.mubr.f32.mxu0 0.0
        %695 = vmatmul.mubr.f32.gmra.mrb[0].mxu0 %v497
        %v696 = vpop.f32.mrb[0].mxu0
        %v697 = vadd.f32 0.0, %v696
        %v698 = vpop.f32.mrb[0].mxu0
        %699 = vmatprep.mubr.f32.mxu0 0.0
        %700 = vmatmul.mubr.f32.gmra.mrb[0].mxu0 %v500
        %v701 = vpop.f32.mrb[0].mxu0
        %v702 = vadd.f32 0.0, %v701
        %v703 = vpop.f32.mrb[0].mxu0
        %704 = vmatprep.mubr.f32.mxu0 0.0
        %705 = vmatmul.mubr.f32.gmra.mrb[0].mxu0 %v503
        %v706 = vpop.f32.mrb[0].mxu0
        %v707 = vadd.f32 0.0, %v706
        %v708 = vpop.f32.mrb[0].mxu0
        %709 = vmatprep.mubr.f32.mxu0 0.0
        %710 = vmatmul.mubr.f32.gmra.mrb[0].mxu0 %v506
        %v711 = vpop.f32.mrb[0].mxu0
        %v712 = vadd.f32 0.0, %v711
        %v713 = vpop.f32.mrb[0].mxu0
        %714 = vmatprep.mubr.f32.mxu0 0.0
        %715 = vmatmul.mubr.f32.gmra.mrb[0].mxu0 %v509
        %v716 = vpop.f32.mrb[0].mxu0
        %v717 = vadd.f32 0.0, %v716
        %v718 = vpop.f32.mrb[0].mxu0
        %719 = vmatprep.mubr.f32.mxu0 0.0
        %720 = vmatmul.mubr.f32.gmra.mrb[0].mxu0 %v512
        %v721 = vpop.f32.mrb[0].mxu0
        %v722 = vadd.f32 0.0, %v721
        %v723 = vpop.f32.mrb[0].mxu0
        %724 = vmatprep.mubr.f32.mxu0 0.0
        %725 = vmatmul.mubr.f32.gmra.mrb[0].mxu0 %v515
        %v726 = vpop.f32.mrb[0].mxu0
        %v727 = vadd.f32 0.0, %v726
        %v728 = vpop.f32.mrb[0].mxu0
        %729 = vmatprep.mubr.f32.mxu0 0.0
        %730 = vmatmul.mubr.f32.gmra.mrb[0].mxu0 %v518
        %v731 = vpop.f32.mrb[0].mxu0
        %v732 = vadd.f32 0.0, %v731
        %v733 = vpop.f32.mrb[0].mxu0
        %734 = vmatprep.mubr.f32.mxu0 0.0
        %735 = vmatmul.mubr.f32.gmra.mrb[0].mxu0 %v521
        %v736 = vpop.f32.mrb[0].mxu0
        %v737 = vadd.f32 0.0, %v736
        %v738 = vpop.f32.mrb[0].mxu0
        %739 = vmatprep.mubr.f32.mxu0 0.0
        %740 = vmatmul.mubr.f32.gmra.mrb[0].mxu0 %v524
        %v741 = vpop.f32.mrb[0].mxu0
        %v742 = vadd.f32 0.0, %v741
        %v743 = vpop.f32.mrb[0].mxu0
        %744 = vmatprep.mubr.f32.mxu0 0.0
        %745 = vmatmul.mubr.f32.gmra.mrb[0].mxu0 %v527
        %v746 = vpop.f32.mrb[0].mxu0
        %v747 = vadd.f32 0.0, %v746
        %v748 = vpop.f32.mrb[0].mxu0
        %749 = vmatprep.mubr.f32.mxu0 0.0
        %750 = vmatmul.mubr.f32.gmra.mrb[0].mxu0 %v530
        %v751 = vpop.f32.mrb[0].mxu0
        %v752 = vadd.f32 0.0, %v751
        %v753 = vpop.f32.mrb[0].mxu0
        %754 = vmatprep.mubr.f32.mxu0 0.0
        %755 = vmatmul.mubr.f32.gmra.mrb[0].mxu0 %v533
        %v756 = vpop.f32.mrb[0].mxu0
        %v757 = vadd.f32 0.0, %v756
        %v758 = vpop.f32.mrb[0].mxu0
        %759 = vdwg.mxu0
        %v761 = vlaneseq
        %v762 = vshrl.u32 %v761, 7
        %v763 = vsub.s32 0, %v762
        %v764 = vrot.slane %v394, %v763
        %v766 = vmul.f32 %v602, %v764
        %v767 = vmul.f32 %v607, %v764
        %v768 = vmul.f32 %v612, %v764
        %v769 = vmul.f32 %v617, %v764
        %v770 = vmul.f32 %v622, %v764
        %v771 = vmul.f32 %v627, %v764
        %v772 = vmul.f32 %v632, %v764
        %v773 = vmul.f32 %v637, %v764
        %v774 = vmul.f32 %v642, %v764
        %v775 = vmul.f32 %v647, %v764
        %v776 = vmul.f32 %v652, %v764
        %v777 = vmul.f32 %v657, %v764
        %v778 = vmul.f32 %v662, %v764
        %v779 = vmul.f32 %v667, %v764
        %v780 = vmul.f32 %v672, %v764
        %v781 = vmul.f32 %v677, %v764
        %v782 = vmul.f32 %v682, %v764
        %v783 = vmul.f32 %v687, %v764
        %v784 = vmul.f32 %v692, %v764
        %v785 = vmul.f32 %v697, %v764
        %v786 = vmul.f32 %v702, %v764
        %v787 = vmul.f32 %v707, %v764
        %v788 = vmul.f32 %v712, %v764
        %v789 = vmul.f32 %v717, %v764
        %v790 = vmul.f32 %v722, %v764
        %v791 = vmul.f32 %v727, %v764
        %v792 = vmul.f32 %v732, %v764
        %v793 = vmul.f32 %v737, %v764
        %v794 = vmul.f32 %v742, %v764
        %v795 = vmul.f32 %v747, %v764
        %v796 = vmul.f32 %v752, %v764
        %v797 = vmul.f32 %v757, %v764
        %v799 = vlaneseq
        %v800 = vshrl.u32 %v799, 7
        %v801 = vsub.s32 0, %v800
        %v802 = vrot.slane %v395, %v801
        %v804 = vadd.f32 %v766, %v802
        %v805 = vadd.f32 %v767, %v802
        %v806 = vadd.f32 %v768, %v802
        %v807 = vadd.f32 %v769, %v802
        %v808 = vadd.f32 %v770, %v802
        %v809 = vadd.f32 %v771, %v802
        %v810 = vadd.f32 %v772, %v802
        %v811 = vadd.f32 %v773, %v802
        %v812 = vadd.f32 %v774, %v802
        %v813 = vadd.f32 %v775, %v802
        %v814 = vadd.f32 %v776, %v802
        %v815 = vadd.f32 %v777, %v802
        %v816 = vadd.f32 %v778, %v802
        %v817 = vadd.f32 %v779, %v802
        %v818 = vadd.f32 %v780, %v802
        %v819 = vadd.f32 %v781, %v802
        %v820 = vadd.f32 %v782, %v802
        %v821 = vadd.f32 %v783, %v802
        %v822 = vadd.f32 %v784, %v802
        %v823 = vadd.f32 %v785, %v802
        %v824 = vadd.f32 %v786, %v802
        %v825 = vadd.f32 %v787, %v802
        %v826 = vadd.f32 %v788, %v802
        %v827 = vadd.f32 %v789, %v802
        %v828 = vadd.f32 %v790, %v802
        %v829 = vadd.f32 %v791, %v802
        %v830 = vadd.f32 %v792, %v802
        %v831 = vadd.f32 %v793, %v802
        %v832 = vadd.f32 %v794, %v802
        %v833 = vadd.f32 %v795, %v802
        %v834 = vadd.f32 %v796, %v802
        %v835 = vadd.f32 %v797, %v802
        %v836 = vmax.f32 %v804, 0.0
        %v837 = vmax.f32 %v805, 0.0
        %v838 = vmax.f32 %v806, 0.0
        %v839 = vmax.f32 %v807, 0.0
        %v840 = vmax.f32 %v808, 0.0
        %v841 = vmax.f32 %v809, 0.0
        %v842 = vmax.f32 %v810, 0.0
        %v843 = vmax.f32 %v811, 0.0
        %v844 = vmax.f32 %v812, 0.0
        %v845 = vmax.f32 %v813, 0.0
        %v846 = vmax.f32 %v814, 0.0
        %v847 = vmax.f32 %v815, 0.0
        %v848 = vmax.f32 %v816, 0.0
        %v849 = vmax.f32 %v817, 0.0
        %v850 = vmax.f32 %v818, 0.0
        %v851 = vmax.f32 %v819, 0.0
        %v852 = vmax.f32 %v820, 0.0
        %v853 = vmax.f32 %v821, 0.0
        %v854 = vmax.f32 %v822, 0.0
        %v855 = vmax.f32 %v823, 0.0
        %v856 = vmax.f32 %v824, 0.0
        %v857 = vmax.f32 %v825, 0.0
        %v858 = vmax.f32 %v826, 0.0
        %v859 = vmax.f32 %v827, 0.0
        %v860 = vmax.f32 %v828, 0.0
        %v861 = vmax.f32 %v829, 0.0
        %v862 = vmax.f32 %v830, 0.0
        %v863 = vmax.f32 %v831, 0.0
        %v864 = vmax.f32 %v832, 0.0
        %v865 = vmax.f32 %v833, 0.0
        %v866 = vmax.f32 %v834, 0.0
        %v867 = vmax.f32 %v835, 0.0
        %s868 = scalar_lea.vmem [#allocation2], 16
        %vm869 = vcmask 64512
        %870 = vst.msk [vmem:[%s868] sm:$0xff] %vm869, %v836
        %871 = vst.msk [vmem:[%s868 + $0x8] sm:$0xff] %vm869, %v837
        %872 = vst.msk [vmem:[%s868 + $0x10] sm:$0xff] %vm869, %v838
        %873 = vst.msk [vmem:[%s868 + $0x18] sm:$0xff] %vm869, %v839
        %874 = vst.msk [vmem:[%s868 + $0x20] sm:$0xff] %vm869, %v840
        %875 = vst.msk [vmem:[%s868 + $0x28] sm:$0xff] %vm869, %v841
        %876 = vst.msk [vmem:[%s868 + $0x30] sm:$0xff] %vm869, %v842
        %877 = vst.msk [vmem:[%s868 + $0x38] sm:$0xff] %vm869, %v843
        %878 = vst.msk [vmem:[%s868 + $0x40] sm:$0xff] %vm869, %v844
        %879 = vst.msk [vmem:[%s868 + $0x48] sm:$0xff] %vm869, %v845
        %880 = vst.msk [vmem:[%s868 + $0x50] sm:$0xff] %vm869, %v846
        %881 = vst.msk [vmem:[%s868 + $0x58] sm:$0xff] %vm869, %v847
        %882 = vst.msk [vmem:[%s868 + $0x60] sm:$0xff] %vm869, %v848
        %883 = vst.msk [vmem:[%s868 + $0x68] sm:$0xff] %vm869, %v849
        %884 = vst.msk [vmem:[%s868 + $0x70] sm:$0xff] %vm869, %v850
        %885 = vst.msk [vmem:[%s868 + $0x78] sm:$0xff] %vm869, %v851
        %886 = vst.msk [vmem:[%s868 + $0x80] sm:$0xff] %vm869, %v852
        %887 = vst.msk [vmem:[%s868 + $0x88] sm:$0xff] %vm869, %v853
        %888 = vst.msk [vmem:[%s868 + $0x90] sm:$0xff] %vm869, %v854
        %889 = vst.msk [vmem:[%s868 + $0x98] sm:$0xff] %vm869, %v855
        %890 = vst.msk [vmem:[%s868 + $0xa0] sm:$0xff] %vm869, %v856
        %891 = vst.msk [vmem:[%s868 + $0xa8] sm:$0xff] %vm869, %v857
        %892 = vst.msk [vmem:[%s868 + $0xb0] sm:$0xff] %vm869, %v858
        %893 = vst.msk [vmem:[%s868 + $0xb8] sm:$0xff] %vm869, %v859
        %894 = vst.msk [vmem:[%s868 + $0xc0] sm:$0xff] %vm869, %v860
        %895 = vst.msk [vmem:[%s868 + $0xc8] sm:$0xff] %vm869, %v861
        %896 = vst.msk [vmem:[%s868 + $0xd0] sm:$0xff] %vm869, %v862
        %897 = vst.msk [vmem:[%s868 + $0xd8] sm:$0xff] %vm869, %v863
        %898 = vst.msk [vmem:[%s868 + $0xe0] sm:$0xff] %vm869, %v864
        %899 = vst.msk [vmem:[%s868 + $0xe8] sm:$0xff] %vm869, %v865
        %900 = vst.msk [vmem:[%s868 + $0xf0] sm:$0xff] %vm869, %v866
        %901 = vst.msk [vmem:[%s868 + $0xf8] sm:$0xff] %vm869, %v867
        %902 = vst.msk [vmem:[#allocation2] sm:$0xff] %vm869, 0.0
        %903 = vst.msk [vmem:[#allocation2 + $0x8] sm:$0xff] %vm869, 0.0
        %s904 = scalar_lea.vmem [#allocation2], 272
        %905 = vst.msk [vmem:[%s904] sm:$0xff] %vm869, 0.0
        %906 = vst.msk [vmem:[%s904 + $0x8] sm:$0xff] %vm869, 0.0
        %v907 = vld [vmem:[#allocation2] sm:$0xff]
        %v908 = vld [vmem:[#allocation2 + $0x8] sm:$0xff]
        %v909 = vld [vmem:[#allocation2 + $0x10] sm:$0xff]
        %v910 = vld [vmem:[#allocation2 + $0x18] sm:$0xff]
        %v911 = vld [vmem:[#allocation2 + $0x20] sm:$0xff]
        %v912 = vld [vmem:[#allocation2 + $0x28] sm:$0xff]
        %v913 = vld [vmem:[#allocation2 + $0x30] sm:$0xff]
        %v914 = vld [vmem:[#allocation2 + $0x38] sm:$0xff]
        %v915 = vld [vmem:[#allocation2 + $0x40] sm:$0xff]
        %v916 = vld [vmem:[#allocation2 + $0x48] sm:$0xff]
        %v917 = vld [vmem:[#allocation2 + $0x50] sm:$0xff]
        %v918 = vld [vmem:[#allocation2 + $0x58] sm:$0xff]
        %v919 = vld [vmem:[#allocation2 + $0x60] sm:$0xff]
        %v920 = vld [vmem:[#allocation2 + $0x68] sm:$0xff]
        %v921 = vld [vmem:[#allocation2 + $0x70] sm:$0xff]
        %v922 = vld [vmem:[#allocation2 + $0x78] sm:$0xff]
        %v923 = vld [vmem:[#allocation2 + $0x80] sm:$0xff]
        %v924 = vld [vmem:[#allocation2 + $0x88] sm:$0xff]
        %v925 = vld [vmem:[#allocation2 + $0x90] sm:$0xff]
        %v926 = vld [vmem:[#allocation2 + $0x98] sm:$0xff]
        %v927 = vld [vmem:[#allocation2 + $0xa0] sm:$0xff]
        %v928 = vld [vmem:[#allocation2 + $0xa8] sm:$0xff]
        %v929 = vld [vmem:[#allocation2 + $0xb0] sm:$0xff]
        %v930 = vld [vmem:[#allocation2 + $0xb8] sm:$0xff]
        %v931 = vld [vmem:[#allocation2 + $0xc0] sm:$0xff]
        %v932 = vld [vmem:[#allocation2 + $0xc8] sm:$0xff]
        %v933 = vld [vmem:[#allocation2 + $0xd0] sm:$0xff]
        %v934 = vld [vmem:[#allocation2 + $0xd8] sm:$0xff]
        %v935 = vld [vmem:[#allocation2 + $0xe0] sm:$0xff]
        %v936 = vld [vmem:[#allocation2 + $0xe8] sm:$0xff]
        %v937 = vld [vmem:[#allocation2 + $0xf0] sm:$0xff]
        %v938 = vld [vmem:[#allocation2 + $0xf8] sm:$0xff]
        %v939 = vld [vmem:[#allocation2 + $0x100] sm:$0xff]
        %v940 = vld [vmem:[#allocation2 + $0x108] sm:$0xff]
        %v941 = vld [vmem:[#allocation2 + $0x110] sm:$0xff]
        %v942 = vld [vmem:[#allocation2 + $0x118] sm:$0xff]
        %v943 = vlaneseq
        %v944 = vshrl.u32 %v943, 7
        %v945 = vadd.s32 %v944, 8
        %vm946 = vcmp.ne.s32.totalorder %v944, 0
        %vm947 = vcmp.ne.s32.totalorder %v945, 0
        %v948 = vrot.slane %v907, 7
        %v949 = vrot.slane %v909, 7
        %v950 = vrot.slane %v911, 7
        %v951 = vrot.slane %v913, 7
        %v952 = vrot.slane %v915, 7
        %v953 = vrot.slane %v917, 7
        %v954 = vrot.slane %v919, 7
        %v955 = vrot.slane %v921, 7
        %v956 = vrot.slane %v923, 7
        %v957 = vrot.slane %v925, 7
        %v958 = vrot.slane %v927, 7
        %v959 = vrot.slane %v929, 7
        %v960 = vrot.slane %v931, 7
        %v961 = vrot.slane %v933, 7
        %v962 = vrot.slane %v935, 7
        %v963 = vrot.slane %v937, 7
        %v964 = vrot.slane %v939, 7
        %v965 = vrot.slane %v941, 7
        %v966 = vrot.slane %v908, 7
        %v967 = vrot.slane %v910, 7
        %v968 = vrot.slane %v912, 7
        %v969 = vrot.slane %v914, 7
        %v970 = vrot.slane %v916, 7
        %v971 = vrot.slane %v918, 7
        %v972 = vrot.slane %v920, 7
        %v973 = vrot.slane %v922, 7
        %v974 = vrot.slane %v924, 7
        %v975 = vrot.slane %v926, 7
        %v976 = vrot.slane %v928, 7
        %v977 = vrot.slane %v930, 7
        %v978 = vrot.slane %v932, 7
        %v979 = vrot.slane %v934, 7
        %v980 = vrot.slane %v936, 7
        %v981 = vrot.slane %v938, 7
        %v982 = vrot.slane %v940, 7
        %v983 = vrot.slane %v942, 7
        %vm984 = vcmp.lt.s32.totalorder %v944, 1
        %v985 = vsel %vm984, %v948, %v966
        %v986 = vsel %vm984, %v949, %v967
        %v987 = vsel %vm984, %v950, %v968
        %v988 = vsel %vm984, %v951, %v969
        %v989 = vsel %vm984, %v952, %v970
        %v990 = vsel %vm984, %v953, %v971
        %v991 = vsel %vm984, %v954, %v972
        %v992 = vsel %vm984, %v955, %v973
        %v993 = vsel %vm984, %v956, %v974
        %v994 = vsel %vm984, %v957, %v975
        %v995 = vsel %vm984, %v958, %v976
        %v996 = vsel %vm984, %v959, %v977
        %v997 = vsel %vm984, %v960, %v978
        %v998 = vsel %vm984, %v961, %v979
        %v999 = vsel %vm984, %v962, %v980
        %v1000 = vsel %vm984, %v963, %v981
        %v1001 = vsel %vm984, %v964, %v982
        %v1002 = vsel %vm984, %v965, %v983
        %v1003 = vsel %vm984, %v966, %v948
        %v1004 = vsel %vm984, %v967, %v949
        %v1005 = vsel %vm984, %v968, %v950
        %v1006 = vsel %vm984, %v969, %v951
        %v1007 = vsel %vm984, %v970, %v952
        %v1008 = vsel %vm984, %v971, %v953
        %v1009 = vsel %vm984, %v972, %v954
        %v1010 = vsel %vm984, %v973, %v955
        %v1011 = vsel %vm984, %v974, %v956
        %v1012 = vsel %vm984, %v975, %v957
        %v1013 = vsel %vm984, %v976, %v958
        %v1014 = vsel %vm984, %v977, %v959
        %v1015 = vsel %vm984, %v978, %v960
        %v1016 = vsel %vm984, %v979, %v961
        %v1017 = vsel %vm984, %v980, %v962
        %v1018 = vsel %vm984, %v981, %v963
        %v1019 = vsel %vm984, %v982, %v964
        %v1020 = vsel %vm984, %v983, %v965
        %v1021 = vsel %vm946, %v1003, 0.0
        %v1022 = vsel %vm947, %v985, 0.0
        %v1023 = vsel %vm946, %v1004, 0.0
        %v1024 = vsel %vm947, %v986, 0.0
        %v1025 = vsel %vm946, %v1005, 0.0
        %v1026 = vsel %vm947, %v987, 0.0
        %v1027 = vsel %vm946, %v1006, 0.0
        %v1028 = vsel %vm947, %v988, 0.0
        %v1029 = vsel %vm946, %v1007, 0.0
        %v1030 = vsel %vm947, %v989, 0.0
        %v1031 = vsel %vm946, %v1008, 0.0
        %v1032 = vsel %vm947, %v990, 0.0
        %v1033 = vsel %vm946, %v1009, 0.0
        %v1034 = vsel %vm947, %v991, 0.0
        %v1035 = vsel %vm946, %v1010, 0.0
        %v1036 = vsel %vm947, %v992, 0.0
        %v1037 = vsel %vm946, %v1011, 0.0
        %v1038 = vsel %vm947, %v993, 0.0
        %v1039 = vsel %vm946, %v1012, 0.0
        %v1040 = vsel %vm947, %v994, 0.0
        %v1041 = vsel %vm946, %v1013, 0.0
        %v1042 = vsel %vm947, %v995, 0.0
        %v1043 = vsel %vm946, %v1014, 0.0
        %v1044 = vsel %vm947, %v996, 0.0
        %v1045 = vsel %vm946, %v1015, 0.0
        %v1046 = vsel %vm947, %v997, 0.0
        %v1047 = vsel %vm946, %v1016, 0.0
        %v1048 = vsel %vm947, %v998, 0.0
        %v1049 = vsel %vm946, %v1017, 0.0
        %v1050 = vsel %vm947, %v999, 0.0
        %v1051 = vsel %vm946, %v1018, 0.0
        %v1052 = vsel %vm947, %v1000, 0.0
        %v1053 = vsel %vm946, %v1019, 0.0
        %v1054 = vsel %vm947, %v1001, 0.0
        %v1055 = vsel %vm946, %v1020, 0.0
        %v1056 = vsel %vm947, %v1002, 0.0
        %vm1057 = vcmp.ne.s32.totalorder %v944, 15
        %vm1058 = vcmp.ne.s32.totalorder %v945, 15
        %v1059 = vrot.slane %v907, 1
        %v1060 = vrot.slane %v909, 1
        %v1061 = vrot.slane %v911, 1
        %v1062 = vrot.slane %v913, 1
        %v1063 = vrot.slane %v915, 1
        %v1064 = vrot.slane %v917, 1
        %v1065 = vrot.slane %v919, 1
        %v1066 = vrot.slane %v921, 1
        %v1067 = vrot.slane %v923, 1
        %v1068 = vrot.slane %v925, 1
        %v1069 = vrot.slane %v927, 1
        %v1070 = vrot.slane %v929, 1
        %v1071 = vrot.slane %v931, 1
        %v1072 = vrot.slane %v933, 1
        %v1073 = vrot.slane %v935, 1
        %v1074 = vrot.slane %v937, 1
        %v1075 = vrot.slane %v939, 1
        %v1076 = vrot.slane %v941, 1
        %v1077 = vrot.slane %v908, 1
        %v1078 = vrot.slane %v910, 1
        %v1079 = vrot.slane %v912, 1
        %v1080 = vrot.slane %v914, 1
        %v1081 = vrot.slane %v916, 1
        %v1082 = vrot.slane %v918, 1
        %v1083 = vrot.slane %v920, 1
        %v1084 = vrot.slane %v922, 1
        %v1085 = vrot.slane %v924, 1
        %v1086 = vrot.slane %v926, 1
        %v1087 = vrot.slane %v928, 1
        %v1088 = vrot.slane %v930, 1
        %v1089 = vrot.slane %v932, 1
        %v1090 = vrot.slane %v934, 1
        %v1091 = vrot.slane %v936, 1
        %v1092 = vrot.slane %v938, 1
        %v1093 = vrot.slane %v940, 1
        %v1094 = vrot.slane %v942, 1
        %vm1095 = vcmp.lt.s32.totalorder %v944, 7
        %v1096 = vsel %vm1095, %v1059, %v1077
        %v1097 = vsel %vm1095, %v1060, %v1078
        %v1098 = vsel %vm1095, %v1061, %v1079
        %v1099 = vsel %vm1095, %v1062, %v1080
        %v1100 = vsel %vm1095, %v1063, %v1081
        %v1101 = vsel %vm1095, %v1064, %v1082
        %v1102 = vsel %vm1095, %v1065, %v1083
        %v1103 = vsel %vm1095, %v1066, %v1084
        %v1104 = vsel %vm1095, %v1067, %v1085
        %v1105 = vsel %vm1095, %v1068, %v1086
        %v1106 = vsel %vm1095, %v1069, %v1087
        %v1107 = vsel %vm1095, %v1070, %v1088
        %v1108 = vsel %vm1095, %v1071, %v1089
        %v1109 = vsel %vm1095, %v1072, %v1090
        %v1110 = vsel %vm1095, %v1073, %v1091
        %v1111 = vsel %vm1095, %v1074, %v1092
        %v1112 = vsel %vm1095, %v1075, %v1093
        %v1113 = vsel %vm1095, %v1076, %v1094
        %v1114 = vsel %vm1095, %v1077, %v1059
        %v1115 = vsel %vm1095, %v1078, %v1060
        %v1116 = vsel %vm1095, %v1079, %v1061
        %v1117 = vsel %vm1095, %v1080, %v1062
        %v1118 = vsel %vm1095, %v1081, %v1063
        %v1119 = vsel %vm1095, %v1082, %v1064
        %v1120 = vsel %vm1095, %v1083, %v1065
        %v1121 = vsel %vm1095, %v1084, %v1066
        %v1122 = vsel %vm1095, %v1085, %v1067
        %v1123 = vsel %vm1095, %v1086, %v1068
        %v1124 = vsel %vm1095, %v1087, %v1069
        %v1125 = vsel %vm1095, %v1088, %v1070
        %v1126 = vsel %vm1095, %v1089, %v1071
        %v1127 = vsel %vm1095, %v1090, %v1072
        %v1128 = vsel %vm1095, %v1091, %v1073
        %v1129 = vsel %vm1095, %v1092, %v1074
        %v1130 = vsel %vm1095, %v1093, %v1075
        %v1131 = vsel %vm1095, %v1094, %v1076
        %v1132 = vsel %vm1057, %v1096, 0.0
        %v1133 = vsel %vm1058, %v1114, 0.0
        %v1134 = vsel %vm1057, %v1097, 0.0
        %v1135 = vsel %vm1058, %v1115, 0.0
        %v1136 = vsel %vm1057, %v1098, 0.0
        %v1137 = vsel %vm1058, %v1116, 0.0
        %v1138 = vsel %vm1057, %v1099, 0.0
        %v1139 = vsel %vm1058, %v1117, 0.0
        %v1140 = vsel %vm1057, %v1100, 0.0
        %v1141 = vsel %vm1058, %v1118, 0.0
        %v1142 = vsel %vm1057, %v1101, 0.0
        %v1143 = vsel %vm1058, %v1119, 0.0
        %v1144 = vsel %vm1057, %v1102, 0.0
        %v1145 = vsel %vm1058, %v1120, 0.0
        %v1146 = vsel %vm1057, %v1103, 0.0
        %v1147 = vsel %vm1058, %v1121, 0.0
        %v1148 = vsel %vm1057, %v1104, 0.0
        %v1149 = vsel %vm1058, %v1122, 0.0
        %v1150 = vsel %vm1057, %v1105, 0.0
        %v1151 = vsel %vm1058, %v1123, 0.0
        %v1152 = vsel %vm1057, %v1106, 0.0
        %v1153 = vsel %vm1058, %v1124, 0.0
        %v1154 = vsel %vm1057, %v1107, 0.0
        %v1155 = vsel %vm1058, %v1125, 0.0
        %v1156 = vsel %vm1057, %v1108, 0.0
        %v1157 = vsel %vm1058, %v1126, 0.0
        %v1158 = vsel %vm1057, %v1109, 0.0
        %v1159 = vsel %vm1058, %v1127, 0.0
        %v1160 = vsel %vm1057, %v1110, 0.0
        %v1161 = vsel %vm1058, %v1128, 0.0
        %v1162 = vsel %vm1057, %v1111, 0.0
        %v1163 = vsel %vm1058, %v1129, 0.0
        %v1164 = vsel %vm1057, %v1112, 0.0
        %v1165 = vsel %vm1058, %v1130, 0.0
        %v1166 = vsel %vm1057, %v1113, 0.0
        %v1167 = vsel %vm1058, %v1131, 0.0
        %1200 = vrot.lane.b32.xlu0 %v907, 8
        %v1201 = vpop.permute.xlu0 %1200
        %1202 = vrot.lane.b32.xlu0 %v908, 8
        %v1203 = vpop.permute.xlu0 %1202
        %1204 = vrot.lane.b32.xlu0 %v909, 8
        %v1205 = vpop.permute.xlu0 %1204
        %1206 = vrot.lane.b32.xlu0 %v910, 8
        %v1207 = vpop.permute.xlu0 %1206
        %1208 = vrot.lane.b32.xlu0 %v911, 8
        %v1209 = vpop.permute.xlu0 %1208
        %1210 = vrot.lane.b32.xlu0 %v912, 8
        %v1211 = vpop.permute.xlu0 %1210
        %1212 = vrot.lane.b32.xlu0 %v913, 8
        %v1213 = vpop.permute.xlu0 %1212
        %1214 = vrot.lane.b32.xlu0 %v914, 8
        %v1215 = vpop.permute.xlu0 %1214
        %1216 = vrot.lane.b32.xlu0 %v915, 8
        %v1217 = vpop.permute.xlu0 %1216
        %1218 = vrot.lane.b32.xlu0 %v916, 8
        %v1219 = vpop.permute.xlu0 %1218
        %1220 = vrot.lane.b32.xlu0 %v917, 8
        %v1221 = vpop.permute.xlu0 %1220
        %1222 = vrot.lane.b32.xlu0 %v918, 8
        %v1223 = vpop.permute.xlu0 %1222
        %1224 = vrot.lane.b32.xlu0 %v919, 8
        %v1225 = vpop.permute.xlu0 %1224
        %1226 = vrot.lane.b32.xlu0 %v920, 8
        %v1227 = vpop.permute.xlu0 %1226
        %1228 = vrot.lane.b32.xlu0 %v921, 8
        %v1229 = vpop.permute.xlu0 %1228
        %1230 = vrot.lane.b32.xlu0 %v922, 8
        %v1231 = vpop.permute.xlu0 %1230
        %1232 = vrot.lane.b32.xlu0 %v923, 8
        %v1233 = vpop.permute.xlu0 %1232
        %1234 = vrot.lane.b32.xlu0 %v924, 8
        %v1235 = vpop.permute.xlu0 %1234
        %1236 = vrot.lane.b32.xlu0 %v925, 8
        %v1237 = vpop.permute.xlu0 %1236
        %1238 = vrot.lane.b32.xlu0 %v926, 8
        %v1239 = vpop.permute.xlu0 %1238
        %1240 = vrot.lane.b32.xlu0 %v927, 8
        %v1241 = vpop.permute.xlu0 %1240
        %1242 = vrot.lane.b32.xlu0 %v928, 8
        %v1243 = vpop.permute.xlu0 %1242
        %1244 = vrot.lane.b32.xlu0 %v929, 8
        %v1245 = vpop.permute.xlu0 %1244
        %1246 = vrot.lane.b32.xlu0 %v930, 8
        %v1247 = vpop.permute.xlu0 %1246
        %1248 = vrot.lane.b32.xlu0 %v931, 8
        %v1249 = vpop.permute.xlu0 %1248
        %1250 = vrot.lane.b32.xlu0 %v932, 8
        %v1251 = vpop.permute.xlu0 %1250
        %1252 = vrot.lane.b32.xlu0 %v933, 8
        %v1253 = vpop.permute.xlu0 %1252
        %1254 = vrot.lane.b32.xlu0 %v934, 8
        %v1255 = vpop.permute.xlu0 %1254
        %1256 = vrot.lane.b32.xlu0 %v935, 8
        %v1257 = vpop.permute.xlu0 %1256
        %1258 = vrot.lane.b32.xlu0 %v936, 8
        %v1259 = vpop.permute.xlu0 %1258
        %1260 = vrot.lane.b32.xlu0 %v937, 8
        %v1261 = vpop.permute.xlu0 %1260
        %1262 = vrot.lane.b32.xlu0 %v938, 8
        %v1263 = vpop.permute.xlu0 %1262
        %1328 = vrot.lane.b32.xlu0 %v1132, 16
        %v1329 = vpop.permute.xlu0 %1328
        %1330 = vrot.lane.b32.xlu0 %v1133, 16
        %v1331 = vpop.permute.xlu0 %1330
        %1332 = vrot.lane.b32.xlu0 %v1134, 16
        %v1333 = vpop.permute.xlu0 %1332
        %1334 = vrot.lane.b32.xlu0 %v1135, 16
        %v1335 = vpop.permute.xlu0 %1334
        %1336 = vrot.lane.b32.xlu0 %v1136, 16
        %v1337 = vpop.permute.xlu0 %1336
        %1338 = vrot.lane.b32.xlu0 %v1137, 16
        %v1339 = vpop.permute.xlu0 %1338
        %1340 = vrot.lane.b32.xlu0 %v1138, 16
        %v1341 = vpop.permute.xlu0 %1340
        %1342 = vrot.lane.b32.xlu0 %v1139, 16
        %v1343 = vpop.permute.xlu0 %1342
        %1344 = vrot.lane.b32.xlu0 %v1140, 16
        %v1345 = vpop.permute.xlu0 %1344
        %1346 = vrot.lane.b32.xlu0 %v1141, 16
        %v1347 = vpop.permute.xlu0 %1346
        %1348 = vrot.lane.b32.xlu0 %v1142, 16
        %v1349 = vpop.permute.xlu0 %1348
        %1350 = vrot.lane.b32.xlu0 %v1143, 16
        %v1351 = vpop.permute.xlu0 %1350
        %1352 = vrot.lane.b32.xlu0 %v1144, 16
        %v1353 = vpop.permute.xlu0 %1352
        %1354 = vrot.lane.b32.xlu0 %v1145, 16
        %v1355 = vpop.permute.xlu0 %1354
        %1356 = vrot.lane.b32.xlu0 %v1146, 16
        %v1357 = vpop.permute.xlu0 %1356
        %1358 = vrot.lane.b32.xlu0 %v1147, 16
        %v1359 = vpop.permute.xlu0 %1358
        %1360 = vrot.lane.b32.xlu0 %v1148, 16
        %v1361 = vpop.permute.xlu0 %1360
        %1362 = vrot.lane.b32.xlu0 %v1149, 16
        %v1363 = vpop.permute.xlu0 %1362
        %1364 = vrot.lane.b32.xlu0 %v1150, 16
        %v1365 = vpop.permute.xlu0 %1364
        %1366 = vrot.lane.b32.xlu0 %v1151, 16
        %v1367 = vpop.permute.xlu0 %1366
        %1368 = vrot.lane.b32.xlu0 %v1152, 16
        %v1369 = vpop.permute.xlu0 %1368
        %1370 = vrot.lane.b32.xlu0 %v1153, 16
        %v1371 = vpop.permute.xlu0 %1370
        %1372 = vrot.lane.b32.xlu0 %v1154, 16
        %v1373 = vpop.permute.xlu0 %1372
        %1374 = vrot.lane.b32.xlu0 %v1155, 16
        %v1375 = vpop.permute.xlu0 %1374
        %1376 = vrot.lane.b32.xlu0 %v1156, 16
        %v1377 = vpop.permute.xlu0 %1376
        %1378 = vrot.lane.b32.xlu0 %v1157, 16
        %v1379 = vpop.permute.xlu0 %1378
        %1380 = vrot.lane.b32.xlu0 %v1158, 16
        %v1381 = vpop.permute.xlu0 %1380
        %1382 = vrot.lane.b32.xlu0 %v1159, 16
        %v1383 = vpop.permute.xlu0 %1382
        %1384 = vrot.lane.b32.xlu0 %v1160, 16
        %v1385 = vpop.permute.xlu0 %1384
        %1386 = vrot.lane.b32.xlu0 %v1161, 16
        %v1387 = vpop.permute.xlu0 %1386
        %1388 = vrot.lane.b32.xlu0 %v1162, 16
        %v1389 = vpop.permute.xlu0 %1388
        %1390 = vrot.lane.b32.xlu0 %v1163, 16
        %v1391 = vpop.permute.xlu0 %1390
        %v1424 = vsel %vm869, %v1021, %v1201
        %v1425 = vsel %vm869, %v1022, %v1203
        %v1426 = vsel %vm869, %v1023, %v1205
        %v1427 = vsel %vm869, %v1024, %v1207
        %v1428 = vsel %vm869, %v1025, %v1209
        %v1429 = vsel %vm869, %v1026, %v1211
        %v1430 = vsel %vm869, %v1027, %v1213
        %v1431 = vsel %vm869, %v1028, %v1215
        %v1432 = vsel %vm869, %v1029, %v1217
        %v1433 = vsel %vm869, %v1030, %v1219
        %v1434 = vsel %vm869, %v1031, %v1221
        %v1435 = vsel %vm869, %v1032, %v1223
        %v1436 = vsel %vm869, %v1033, %v1225
        %v1437 = vsel %vm869, %v1034, %v1227
        %v1438 = vsel %vm869, %v1035, %v1229
        %v1439 = vsel %vm869, %v1036, %v1231
        %v1440 = vsel %vm869, %v1037, %v1233
        %v1441 = vsel %vm869, %v1038, %v1235
        %v1442 = vsel %vm869, %v1039, %v1237
        %v1443 = vsel %vm869, %v1040, %v1239
        %v1444 = vsel %vm869, %v1041, %v1241
        %v1445 = vsel %vm869, %v1042, %v1243
        %v1446 = vsel %vm869, %v1043, %v1245
        %v1447 = vsel %vm869, %v1044, %v1247
        %v1448 = vsel %vm869, %v1045, %v1249
        %v1449 = vsel %vm869, %v1046, %v1251
        %v1450 = vsel %vm869, %v1047, %v1253
        %v1451 = vsel %vm869, %v1048, %v1255
        %v1452 = vsel %vm869, %v1049, %v1257
        %v1453 = vsel %vm869, %v1050, %v1259
        %v1454 = vsel %vm869, %v1051, %v1261
        %v1455 = vsel %vm869, %v1052, %v1263
        %vm1456 = vcmask 130048
        %v1457 = vsel %vm1456, %v1424, %v1329
        %v1458 = vsel %vm1456, %v1425, %v1331
        %v1459 = vsel %vm1456, %v1426, %v1333
        %v1460 = vsel %vm1456, %v1427, %v1335
        %v1461 = vsel %vm1456, %v1428, %v1337
        %v1462 = vsel %vm1456, %v1429, %v1339
        %v1463 = vsel %vm1456, %v1430, %v1341
        %v1464 = vsel %vm1456, %v1431, %v1343
        %v1465 = vsel %vm1456, %v1432, %v1345
        %v1466 = vsel %vm1456, %v1433, %v1347
        %v1467 = vsel %vm1456, %v1434, %v1349
        %v1468 = vsel %vm1456, %v1435, %v1351
        %v1469 = vsel %vm1456, %v1436, %v1353
        %v1470 = vsel %vm1456, %v1437, %v1355
        %v1471 = vsel %vm1456, %v1438, %v1357
        %v1472 = vsel %vm1456, %v1439, %v1359
        %v1473 = vsel %vm1456, %v1440, %v1361
        %v1474 = vsel %vm1456, %v1441, %v1363
        %v1475 = vsel %vm1456, %v1442, %v1365
        %v1476 = vsel %vm1456, %v1443, %v1367
        %v1477 = vsel %vm1456, %v1444, %v1369
        %v1478 = vsel %vm1456, %v1445, %v1371
        %v1479 = vsel %vm1456, %v1446, %v1373
        %v1480 = vsel %vm1456, %v1447, %v1375
        %v1481 = vsel %vm1456, %v1448, %v1377
        %v1482 = vsel %vm1456, %v1449, %v1379
        %v1483 = vsel %vm1456, %v1450, %v1381
        %v1484 = vsel %vm1456, %v1451, %v1383
        %v1485 = vsel %vm1456, %v1452, %v1385
        %v1486 = vsel %vm1456, %v1453, %v1387
        %v1487 = vsel %vm1456, %v1454, %v1389
        %v1488 = vsel %vm1456, %v1455, %v1391
        %v1489 = vld [vmem:[%s2] sm:$0xff]
        %v1490 = vld [vmem:[%s2 + $0x8] sm:$0xff]
        %v1491 = vld [vmem:[%s2 + $0x10] sm:$0xff]
        %1494 = vrot.lane.b32.xlu0 %v939, 8
        %v1495 = vpop.permute.xlu0 %1494
        %1496 = vrot.lane.b32.xlu0 %v940, 8
        %v1497 = vpop.permute.xlu0 %1496
        %1502 = vrot.lane.b32.xlu0 %v1164, 16
        %v1503 = vpop.permute.xlu0 %1502
        %1504 = vrot.lane.b32.xlu0 %v1165, 16
        %v1505 = vpop.permute.xlu0 %1504
        %v1508 = vsel %vm869, %v1053, %v1495
        %v1509 = vsel %vm869, %v1054, %v1497
        %v1510 = vsel %vm1456, %v1508, %v1503
        %v1511 = vsel %vm1456, %v1509, %v1505
        %s1512 = scalar_lea.vmem %s2, 24
        %v1513 = vld [vmem:[%s1512] sm:$0xff]
        %v1514 = vld [vmem:[%s1512 + $0x8] sm:$0xff]
        %v1515 = vld [vmem:[%s1512 + $0x10] sm:$0xff]
        %vm1516 = vcmask 195584
        %v1518 = vsel %vm1516, %v1459, 0
        %v1521 = vsel %vm1516, %v1460, 0
        %v1524 = vsel %vm1516, %v1461, 0
        %v1527 = vsel %vm1516, %v1462, 0
        %v1530 = vsel %vm1516, %v1463, 0
        %v1533 = vsel %vm1516, %v1464, 0
        %v1536 = vsel %vm1516, %v1465, 0
        %v1539 = vsel %vm1516, %v1466, 0
        %v1542 = vsel %vm1516, %v1467, 0
        %v1545 = vsel %vm1516, %v1468, 0
        %v1548 = vsel %vm1516, %v1469, 0
        %v1551 = vsel %vm1516, %v1470, 0
        %v1554 = vsel %vm1516, %v1471, 0
        %v1557 = vsel %vm1516, %v1472, 0
        %v1560 = vsel %vm1516, %v1473, 0
        %v1563 = vsel %vm1516, %v1474, 0
        %v1566 = vsel %vm1516, %v1475, 0
        %v1569 = vsel %vm1516, %v1476, 0
        %v1572 = vsel %vm1516, %v1477, 0
        %v1575 = vsel %vm1516, %v1478, 0
        %v1578 = vsel %vm1516, %v1479, 0
        %v1581 = vsel %vm1516, %v1480, 0
        %v1584 = vsel %vm1516, %v1481, 0
        %v1587 = vsel %vm1516, %v1482, 0
        %v1590 = vsel %vm1516, %v1483, 0
        %v1593 = vsel %vm1516, %v1484, 0
        %v1596 = vsel %vm1516, %v1485, 0
        %v1599 = vsel %vm1516, %v1486, 0
        %v1602 = vsel %vm1516, %v1487, 0
        %v1605 = vsel %vm1516, %v1488, 0
        %v1608 = vsel %vm1516, %v1510, 0
        %v1611 = vsel %vm1516, %v1511, 0
        %1613 = vmatprep.subr.mxu0 0.0
        %1614 = vmatpush1.msra.mxu0 %v1513
        %1615 = vmatprep.subr.mxu0 0.0
        %1616 = vmatpush1.msra.mxu0 %v1514
        %1617 = vmatprep.subr.mxu0 0.0
        %1618 = vmatpush1.msra.mxu0 %v1515
        %1619 = vmatprep.subr.mxu0 0.0
        %1620 = vmatpush1.msra.mxu0 0.0
        %1621 = vmatprep.subr.mxu0 0.0
        %1622 = vmatpush1.msra.mxu0 0.0
        %1623 = vmatprep.subr.mxu0 0.0
        %1624 = vmatpush1.msra.mxu0 0.0
        %1625 = vmatprep.subr.mxu0 0.0
        %1626 = vmatpush1.msra.mxu0 0.0
        %1627 = vmatprep.subr.mxu0 0.0
        %1628 = vmatpush1.msra.mxu0 0.0
        %1629 = vmatprep.subr.mxu0 0.0
        %1630 = vmatpush1.msra.mxu0 0.0
        %1631 = vmatprep.subr.mxu0 0.0
        %1632 = vmatpush1.msra.mxu0 0.0
        %1633 = vmatprep.subr.mxu0 0.0
        %1634 = vmatpush1.msra.mxu0 0.0
        %1635 = vmatprep.subr.mxu0 0.0
        %1636 = vmatpush1.msra.mxu0 0.0
        %1637 = vmatprep.subr.mxu0 0.0
        %1638 = vmatpush1.msra.mxu0 0.0
        %1639 = vmatprep.subr.mxu0 0.0
        %1640 = vmatpush1.msra.mxu0 0.0
        %1641 = vmatprep.subr.mxu0 0.0
        %1642 = vmatpush1.msra.mxu0 0.0
        %1643 = vmatprep.subr.mxu0 0.0
        %1644 = vmatpush1.msra.mxu0 0.0
        %1645 = vmatprep.subr.mxu0 0.0
        %1646 = vmatpush1.msra.mxu0 0.0
        %1647 = vmatprep.subr.mxu0 0.0
        %1648 = vmatpush1.msra.mxu0 0.0
        %1649 = vmatprep.subr.mxu0 0.0
        %1650 = vmatpush1.msra.mxu0 0.0
        %1651 = vmatprep.subr.mxu0 0.0
        %1652 = vmatpush1.msra.mxu0 0.0
        %1653 = vmatprep.subr.mxu0 0.0
        %1654 = vmatpush1.msra.mxu0 0.0
        %1655 = vmatprep.subr.mxu0 0.0
        %1656 = vmatpush1.msra.mxu0 0.0
        %1657 = vmatprep.subr.mxu0 0.0
        %1658 = vmatpush1.msra.mxu0 0.0
        %1659 = vmatprep.subr.mxu0 0.0
        %1660 = vmatpush1.msra.mxu0 0.0
        %1661 = vmatprep.subr.mxu0 0.0
        %1662 = vmatpush1.msra.mxu0 0.0
        %1663 = vmatprep.subr.mxu0 0.0
        %1664 = vmatpush1.msra.mxu0 0.0
        %1665 = vmatprep.subr.mxu0 0.0
        %1666 = vmatpush1.msra.mxu0 0.0
        %1667 = vmatprep.subr.mxu0 0.0
        %1668 = vmatpush1.msra.mxu0 0.0
        %1669 = vmatprep.subr.mxu0 0.0
        %1670 = vmatpush1.msra.mxu0 0.0
        %1671 = vmatprep.subr.mxu0 0.0
        %1672 = vmatpush1.msra.mxu0 0.0
        %1673 = vmatprep.subr.mxu0 0.0
        %1674 = vmatpush1.msra.mxu0 0.0
        %1675 = vmatprep.subr.mxu0 0.0
        %1676 = vmatpush1.msra.mxu0 0.0
        %1677 = vmatprep.mubr.f32.mxu0 0.0
        %1678 = vmatmul.mubr.f32.gmra.mrb[0].mxu0 %v1518
        %v1679 = vpop.f32.mrb[0].mxu0
        %v1680 = vadd.f32 0.0, %v1679
        %v1681 = vpop.f32.mrb[0].mxu0
        %1682 = vmatprep.mubr.f32.mxu0 0.0
        %1683 = vmatmul.mubr.f32.gmra.mrb[0].mxu0 %v1521
        %v1684 = vpop.f32.mrb[0].mxu0
        %v1685 = vadd.f32 0.0, %v1684
        %v1686 = vpop.f32.mrb[0].mxu0
        %1687 = vmatprep.mubr.f32.mxu0 0.0
        %1688 = vmatmul.mubr.f32.gmra.mrb[0].mxu0 %v1524
        %v1689 = vpop.f32.mrb[0].mxu0
        %v1690 = vadd.f32 0.0, %v1689
        %v1691 = vpop.f32.mrb[0].mxu0
        %1692 = vmatprep.mubr.f32.mxu0 0.0
        %1693 = vmatmul.mubr.f32.gmra.mrb[0].mxu0 %v1527
        %v1694 = vpop.f32.mrb[0].mxu0
        %v1695 = vadd.f32 0.0, %v1694
        %v1696 = vpop.f32.mrb[0].mxu0
        %1697 = vmatprep.mubr.f32.mxu0 0.0
        %1698 = vmatmul.mubr.f32.gmra.mrb[0].mxu0 %v1530
        %v1699 = vpop.f32.mrb[0].mxu0
        %v1700 = vadd.f32 0.0, %v1699
        %v1701 = vpop.f32.mrb[0].mxu0
        %1702 = vmatprep.mubr.f32.mxu0 0.0
        %1703 = vmatmul.mubr.f32.gmra.mrb[0].mxu0 %v1533
        %v1704 = vpop.f32.mrb[0].mxu0
        %v1705 = vadd.f32 0.0, %v1704
        %v1706 = vpop.f32.mrb[0].mxu0
        %1707 = vmatprep.mubr.f32.mxu0 0.0
        %1708 = vmatmul.mubr.f32.gmra.mrb[0].mxu0 %v1536
        %v1709 = vpop.f32.mrb[0].mxu0
        %v1710 = vadd.f32 0.0, %v1709
        %v1711 = vpop.f32.mrb[0].mxu0
        %1712 = vmatprep.mubr.f32.mxu0 0.0
        %1713 = vmatmul.mubr.f32.gmra.mrb[0].mxu0 %v1539
        %v1714 = vpop.f32.mrb[0].mxu0
        %v1715 = vadd.f32 0.0, %v1714
        %v1716 = vpop.f32.mrb[0].mxu0
        %1717 = vmatprep.mubr.f32.mxu0 0.0
        %1718 = vmatmul.mubr.f32.gmra.mrb[0].mxu0 %v1542
        %v1719 = vpop.f32.mrb[0].mxu0
        %v1720 = vadd.f32 0.0, %v1719
        %v1721 = vpop.f32.mrb[0].mxu0
        %1722 = vmatprep.mubr.f32.mxu0 0.0
        %1723 = vmatmul.mubr.f32.gmra.mrb[0].mxu0 %v1545
        %v1724 = vpop.f32.mrb[0].mxu0
        %v1725 = vadd.f32 0.0, %v1724
        %v1726 = vpop.f32.mrb[0].mxu0
        %1727 = vmatprep.mubr.f32.mxu0 0.0
        %1728 = vmatmul.mubr.f32.gmra.mrb[0].mxu0 %v1548
        %v1729 = vpop.f32.mrb[0].mxu0
        %v1730 = vadd.f32 0.0, %v1729
        %v1731 = vpop.f32.mrb[0].mxu0
        %1732 = vmatprep.mubr.f32.mxu0 0.0
        %1733 = vmatmul.mubr.f32.gmra.mrb[0].mxu0 %v1551
        %v1734 = vpop.f32.mrb[0].mxu0
        %v1735 = vadd.f32 0.0, %v1734
        %v1736 = vpop.f32.mrb[0].mxu0
        %1737 = vmatprep.mubr.f32.mxu0 0.0
        %1738 = vmatmul.mubr.f32.gmra.mrb[0].mxu0 %v1554
        %v1739 = vpop.f32.mrb[0].mxu0
        %v1740 = vadd.f32 0.0, %v1739
        %v1741 = vpop.f32.mrb[0].mxu0
        %1742 = vmatprep.mubr.f32.mxu0 0.0
        %1743 = vmatmul.mubr.f32.gmra.mrb[0].mxu0 %v1557
        %v1744 = vpop.f32.mrb[0].mxu0
        %v1745 = vadd.f32 0.0, %v1744
        %v1746 = vpop.f32.mrb[0].mxu0
        %1747 = vmatprep.mubr.f32.mxu0 0.0
        %1748 = vmatmul.mubr.f32.gmra.mrb[0].mxu0 %v1560
        %v1749 = vpop.f32.mrb[0].mxu0
        %v1750 = vadd.f32 0.0, %v1749
        %v1751 = vpop.f32.mrb[0].mxu0
        %1752 = vmatprep.mubr.f32.mxu0 0.0
        %1753 = vmatmul.mubr.f32.gmra.mrb[0].mxu0 %v1563
        %v1754 = vpop.f32.mrb[0].mxu0
        %v1755 = vadd.f32 0.0, %v1754
        %v1756 = vpop.f32.mrb[0].mxu0
        %1757 = vmatprep.mubr.f32.mxu0 0.0
        %1758 = vmatmul.mubr.f32.gmra.mrb[0].mxu0 %v1566
        %v1759 = vpop.f32.mrb[0].mxu0
        %v1760 = vadd.f32 0.0, %v1759
        %v1761 = vpop.f32.mrb[0].mxu0
        %1762 = vmatprep.mubr.f32.mxu0 0.0
        %1763 = vmatmul.mubr.f32.gmra.mrb[0].mxu0 %v1569
        %v1764 = vpop.f32.mrb[0].mxu0
        %v1765 = vadd.f32 0.0, %v1764
        %v1766 = vpop.f32.mrb[0].mxu0
        %1767 = vmatprep.mubr.f32.mxu0 0.0
        %1768 = vmatmul.mubr.f32.gmra.mrb[0].mxu0 %v1572
        %v1769 = vpop.f32.mrb[0].mxu0
        %v1770 = vadd.f32 0.0, %v1769
        %v1771 = vpop.f32.mrb[0].mxu0
        %1772 = vmatprep.mubr.f32.mxu0 0.0
        %1773 = vmatmul.mubr.f32.gmra.mrb[0].mxu0 %v1575
        %v1774 = vpop.f32.mrb[0].mxu0
        %v1775 = vadd.f32 0.0, %v1774
        %v1776 = vpop.f32.mrb[0].mxu0
        %1777 = vmatprep.mubr.f32.mxu0 0.0
        %1778 = vmatmul.mubr.f32.gmra.mrb[0].mxu0 %v1578
        %v1779 = vpop.f32.mrb[0].mxu0
        %v1780 = vadd.f32 0.0, %v1779
        %v1781 = vpop.f32.mrb[0].mxu0
        %1782 = vmatprep.mubr.f32.mxu0 0.0
        %1783 = vmatmul.mubr.f32.gmra.mrb[0].mxu0 %v1581
        %v1784 = vpop.f32.mrb[0].mxu0
        %v1785 = vadd.f32 0.0, %v1784
        %v1786 = vpop.f32.mrb[0].mxu0
        %1787 = vmatprep.mubr.f32.mxu0 0.0
        %1788 = vmatmul.mubr.f32.gmra.mrb[0].mxu0 %v1584
        %v1789 = vpop.f32.mrb[0].mxu0
        %v1790 = vadd.f32 0.0, %v1789
        %v1791 = vpop.f32.mrb[0].mxu0
        %1792 = vmatprep.mubr.f32.mxu0 0.0
        %1793 = vmatmul.mubr.f32.gmra.mrb[0].mxu0 %v1587
        %v1794 = vpop.f32.mrb[0].mxu0
        %v1795 = vadd.f32 0.0, %v1794
        %v1796 = vpop.f32.mrb[0].mxu0
        %1797 = vmatprep.mubr.f32.mxu0 0.0
        %1798 = vmatmul.mubr.f32.gmra.mrb[0].mxu0 %v1590
        %v1799 = vpop.f32.mrb[0].mxu0
        %v1800 = vadd.f32 0.0, %v1799
        %v1801 = vpop.f32.mrb[0].mxu0
        %1802 = vmatprep.mubr.f32.mxu0 0.0
        %1803 = vmatmul.mubr.f32.gmra.mrb[0].mxu0 %v1593
        %v1804 = vpop.f32.mrb[0].mxu0
        %v1805 = vadd.f32 0.0, %v1804
        %v1806 = vpop.f32.mrb[0].mxu0
        %1807 = vmatprep.mubr.f32.mxu0 0.0
        %1808 = vmatmul.mubr.f32.gmra.mrb[0].mxu0 %v1596
        %v1809 = vpop.f32.mrb[0].mxu0
        %v1810 = vadd.f32 0.0, %v1809
        %v1811 = vpop.f32.mrb[0].mxu0
        %1812 = vmatprep.mubr.f32.mxu0 0.0
        %1813 = vmatmul.mubr.f32.gmra.mrb[0].mxu0 %v1599
        %v1814 = vpop.f32.mrb[0].mxu0
        %v1815 = vadd.f32 0.0, %v1814
        %v1816 = vpop.f32.mrb[0].mxu0
        %1817 = vmatprep.mubr.f32.mxu0 0.0
        %1818 = vmatmul.mubr.f32.gmra.mrb[0].mxu0 %v1602
        %v1819 = vpop.f32.mrb[0].mxu0
        %v1820 = vadd.f32 0.0, %v1819
        %v1821 = vpop.f32.mrb[0].mxu0
        %1822 = vmatprep.mubr.f32.mxu0 0.0
        %1823 = vmatmul.mubr.f32.gmra.mrb[0].mxu0 %v1605
        %v1824 = vpop.f32.mrb[0].mxu0
        %v1825 = vadd.f32 0.0, %v1824
        %v1826 = vpop.f32.mrb[0].mxu0
        %1827 = vmatprep.mubr.f32.mxu0 0.0
        %1828 = vmatmul.mubr.f32.gmra.mrb[0].mxu0 %v1608
        %v1829 = vpop.f32.mrb[0].mxu0
        %v1830 = vadd.f32 0.0, %v1829
        %v1831 = vpop.f32.mrb[0].mxu0
        %1832 = vmatprep.mubr.f32.mxu0 0.0
        %1833 = vmatmul.mubr.f32.gmra.mrb[0].mxu0 %v1611
        %v1834 = vpop.f32.mrb[0].mxu0
        %v1835 = vadd.f32 0.0, %v1834
        %v1836 = vpop.f32.mrb[0].mxu0
        %1837 = vdwg.mxu0
        %v1839 = vsel %vm1516, %v1457, 0
        %v1842 = vsel %vm1516, %v1458, 0
        %1844 = vmatprep.subr.mxu0 0.0
        %1845 = vmatpush1.msra.mxu0 %v1489
        %1846 = vmatprep.subr.mxu0 0.0
        %1847 = vmatpush1.msra.mxu0 %v1490
        %1848 = vmatprep.subr.mxu0 0.0
        %1849 = vmatpush1.msra.mxu0 %v1491
        %1850 = vmatprep.subr.mxu0 0.0
        %1851 = vmatpush1.msra.mxu0 0.0
        %1852 = vmatprep.subr.mxu0 0.0
        %1853 = vmatpush1.msra.mxu0 0.0
        %1854 = vmatprep.subr.mxu0 0.0
        %1855 = vmatpush1.msra.mxu0 0.0
        %1856 = vmatprep.subr.mxu0 0.0
        %1857 = vmatpush1.msra.mxu0 0.0
        %1858 = vmatprep.subr.mxu0 0.0
        %1859 = vmatpush1.msra.mxu0 0.0
        %1860 = vmatprep.subr.mxu0 0.0
        %1861 = vmatpush1.msra.mxu0 0.0
        %1862 = vmatprep.subr.mxu0 0.0
        %1863 = vmatpush1.msra.mxu0 0.0
        %1864 = vmatprep.subr.mxu0 0.0
        %1865 = vmatpush1.msra.mxu0 0.0
        %1866 = vmatprep.subr.mxu0 0.0
        %1867 = vmatpush1.msra.mxu0 0.0
        %1868 = vmatprep.subr.mxu0 0.0
        %1869 = vmatpush1.msra.mxu0 0.0
        %1870 = vmatprep.subr.mxu0 0.0
        %1871 = vmatpush1.msra.mxu0 0.0
        %1872 = vmatprep.subr.mxu0 0.0
        %1873 = vmatpush1.msra.mxu0 0.0
        %1874 = vmatprep.subr.mxu0 0.0
        %1875 = vmatpush1.msra.mxu0 0.0
        %1876 = vmatprep.subr.mxu0 0.0
        %1877 = vmatpush1.msra.mxu0 0.0
        %1878 = vmatprep.subr.mxu0 0.0
        %1879 = vmatpush1.msra.mxu0 0.0
        %1880 = vmatprep.subr.mxu0 0.0
        %1881 = vmatpush1.msra.mxu0 0.0
        %1882 = vmatprep.subr.mxu0 0.0
        %1883 = vmatpush1.msra.mxu0 0.0
        %1884 = vmatprep.subr.mxu0 0.0
        %1885 = vmatpush1.msra.mxu0 0.0
        %1886 = vmatprep.subr.mxu0 0.0
        %1887 = vmatpush1.msra.mxu0 0.0
        %1888 = vmatprep.subr.mxu0 0.0
        %1889 = vmatpush1.msra.mxu0 0.0
        %1890 = vmatprep.subr.mxu0 0.0
        %1891 = vmatpush1.msra.mxu0 0.0
        %1892 = vmatprep.subr.mxu0 0.0
        %1893 = vmatpush1.msra.mxu0 0.0
        %1894 = vmatprep.subr.mxu0 0.0
        %1895 = vmatpush1.msra.mxu0 0.0
        %1896 = vmatprep.subr.mxu0 0.0
        %1897 = vmatpush1.msra.mxu0 0.0
        %1898 = vmatprep.subr.mxu0 0.0
        %1899 = vmatpush1.msra.mxu0 0.0
        %1900 = vmatprep.subr.mxu0 0.0
        %1901 = vmatpush1.msra.mxu0 0.0
        %1902 = vmatprep.subr.mxu0 0.0
        %1903 = vmatpush1.msra.mxu0 0.0
        %1904 = vmatprep.subr.mxu0 0.0
        %1905 = vmatpush1.msra.mxu0 0.0
        %1906 = vmatprep.subr.mxu0 0.0
        %1907 = vmatpush1.msra.mxu0 0.0
        %1908 = vmatprep.mubr.f32.mxu0 0.0
        %1909 = vmatmul.mubr.f32.gmra.mrb[0].mxu0 %v1839
        %v1910 = vpop.f32.mrb[0].mxu0
        %v1911 = vadd.f32 %v1680, %v1910
        %v1912 = vpop.f32.mrb[0].mxu0
        %1913 = vmatprep.mubr.f32.mxu0 0.0
        %1914 = vmatmul.mubr.f32.gmra.mrb[0].mxu0 %v1842
        %v1915 = vpop.f32.mrb[0].mxu0
        %v1916 = vadd.f32 %v1685, %v1915
        %v1917 = vpop.f32.mrb[0].mxu0
        %1918 = vmatprep.mubr.f32.mxu0 0.0
        %1919 = vmatmul.mubr.f32.gmra.mrb[0].mxu0 %v1518
        %v1920 = vpop.f32.mrb[0].mxu0
        %v1921 = vadd.f32 %v1690, %v1920
        %v1922 = vpop.f32.mrb[0].mxu0
        %1923 = vmatprep.mubr.f32.mxu0 0.0
        %1924 = vmatmul.mubr.f32.gmra.mrb[0].mxu0 %v1521
        %v1925 = vpop.f32.mrb[0].mxu0
        %v1926 = vadd.f32 %v1695, %v1925
        %v1927 = vpop.f32.mrb[0].mxu0
        %1928 = vmatprep.mubr.f32.mxu0 0.0
        %1929 = vmatmul.mubr.f32.gmra.mrb[0].mxu0 %v1524
        %v1930 = vpop.f32.mrb[0].mxu0
        %v1931 = vadd.f32 %v1700, %v1930
        %v1932 = vpop.f32.mrb[0].mxu0
        %1933 = vmatprep.mubr.f32.mxu0 0.0
        %1934 = vmatmul.mubr.f32.gmra.mrb[0].mxu0 %v1527
        %v1935 = vpop.f32.mrb[0].mxu0
        %v1936 = vadd.f32 %v1705, %v1935
        %v1937 = vpop.f32.mrb[0].mxu0
        %1938 = vmatprep.mubr.f32.mxu0 0.0
        %1939 = vmatmul.mubr.f32.gmra.mrb[0].mxu0 %v1530
        %v1940 = vpop.f32.mrb[0].mxu0
        %v1941 = vadd.f32 %v1710, %v1940
        %v1942 = vpop.f32.mrb[0].mxu0
        %1943 = vmatprep.mubr.f32.mxu0 0.0
        %1944 = vmatmul.mubr.f32.gmra.mrb[0].mxu0 %v1533
        %v1945 = vpop.f32.mrb[0].mxu0
        %v1946 = vadd.f32 %v1715, %v1945
        %v1947 = vpop.f32.mrb[0].mxu0
        %1948 = vmatprep.mubr.f32.mxu0 0.0
        %1949 = vmatmul.mubr.f32.gmra.mrb[0].mxu0 %v1536
        %v1950 = vpop.f32.mrb[0].mxu0
        %v1951 = vadd.f32 %v1720, %v1950
        %v1952 = vpop.f32.mrb[0].mxu0
        %1953 = vmatprep.mubr.f32.mxu0 0.0
        %1954 = vmatmul.mubr.f32.gmra.mrb[0].mxu0 %v1539
        %v1955 = vpop.f32.mrb[0].mxu0
        %v1956 = vadd.f32 %v1725, %v1955
        %v1957 = vpop.f32.mrb[0].mxu0
        %1958 = vmatprep.mubr.f32.mxu0 0.0
        %1959 = vmatmul.mubr.f32.gmra.mrb[0].mxu0 %v1542
        %v1960 = vpop.f32.mrb[0].mxu0
        %v1961 = vadd.f32 %v1730, %v1960
        %v1962 = vpop.f32.mrb[0].mxu0
        %1963 = vmatprep.mubr.f32.mxu0 0.0
        %1964 = vmatmul.mubr.f32.gmra.mrb[0].mxu0 %v1545
        %v1965 = vpop.f32.mrb[0].mxu0
        %v1966 = vadd.f32 %v1735, %v1965
        %v1967 = vpop.f32.mrb[0].mxu0
        %1968 = vmatprep.mubr.f32.mxu0 0.0
        %1969 = vmatmul.mubr.f32.gmra.mrb[0].mxu0 %v1548
        %v1970 = vpop.f32.mrb[0].mxu0
        %v1971 = vadd.f32 %v1740, %v1970
        %v1972 = vpop.f32.mrb[0].mxu0
        %1973 = vmatprep.mubr.f32.mxu0 0.0
        %1974 = vmatmul.mubr.f32.gmra.mrb[0].mxu0 %v1551
        %v1975 = vpop.f32.mrb[0].mxu0
        %v1976 = vadd.f32 %v1745, %v1975
        %v1977 = vpop.f32.mrb[0].mxu0
        %1978 = vmatprep.mubr.f32.mxu0 0.0
        %1979 = vmatmul.mubr.f32.gmra.mrb[0].mxu0 %v1554
        %v1980 = vpop.f32.mrb[0].mxu0
        %v1981 = vadd.f32 %v1750, %v1980
        %v1982 = vpop.f32.mrb[0].mxu0
        %1983 = vmatprep.mubr.f32.mxu0 0.0
        %1984 = vmatmul.mubr.f32.gmra.mrb[0].mxu0 %v1557
        %v1985 = vpop.f32.mrb[0].mxu0
        %v1986 = vadd.f32 %v1755, %v1985
        %v1987 = vpop.f32.mrb[0].mxu0
        %1988 = vmatprep.mubr.f32.mxu0 0.0
        %1989 = vmatmul.mubr.f32.gmra.mrb[0].mxu0 %v1560
        %v1990 = vpop.f32.mrb[0].mxu0
        %v1991 = vadd.f32 %v1760, %v1990
        %v1992 = vpop.f32.mrb[0].mxu0
        %1993 = vmatprep.mubr.f32.mxu0 0.0
        %1994 = vmatmul.mubr.f32.gmra.mrb[0].mxu0 %v1563
        %v1995 = vpop.f32.mrb[0].mxu0
        %v1996 = vadd.f32 %v1765, %v1995
        %v1997 = vpop.f32.mrb[0].mxu0
        %1998 = vmatprep.mubr.f32.mxu0 0.0
        %1999 = vmatmul.mubr.f32.gmra.mrb[0].mxu0 %v1566
        %v2000 = vpop.f32.mrb[0].mxu0
        %v2001 = vadd.f32 %v1770, %v2000
        %v2002 = vpop.f32.mrb[0].mxu0
        %2003 = vmatprep.mubr.f32.mxu0 0.0
        %2004 = vmatmul.mubr.f32.gmra.mrb[0].mxu0 %v1569
        %v2005 = vpop.f32.mrb[0].mxu0
        %v2006 = vadd.f32 %v1775, %v2005
        %v2007 = vpop.f32.mrb[0].mxu0
        %2008 = vmatprep.mubr.f32.mxu0 0.0
        %2009 = vmatmul.mubr.f32.gmra.mrb[0].mxu0 %v1572
        %v2010 = vpop.f32.mrb[0].mxu0
        %v2011 = vadd.f32 %v1780, %v2010
        %v2012 = vpop.f32.mrb[0].mxu0
        %2013 = vmatprep.mubr.f32.mxu0 0.0
        %2014 = vmatmul.mubr.f32.gmra.mrb[0].mxu0 %v1575
        %v2015 = vpop.f32.mrb[0].mxu0
        %v2016 = vadd.f32 %v1785, %v2015
        %v2017 = vpop.f32.mrb[0].mxu0
        %2018 = vmatprep.mubr.f32.mxu0 0.0
        %2019 = vmatmul.mubr.f32.gmra.mrb[0].mxu0 %v1578
        %v2020 = vpop.f32.mrb[0].mxu0
        %v2021 = vadd.f32 %v1790, %v2020
        %v2022 = vpop.f32.mrb[0].mxu0
        %2023 = vmatprep.mubr.f32.mxu0 0.0
        %2024 = vmatmul.mubr.f32.gmra.mrb[0].mxu0 %v1581
        %v2025 = vpop.f32.mrb[0].mxu0
        %v2026 = vadd.f32 %v1795, %v2025
        %v2027 = vpop.f32.mrb[0].mxu0
        %2028 = vmatprep.mubr.f32.mxu0 0.0
        %2029 = vmatmul.mubr.f32.gmra.mrb[0].mxu0 %v1584
        %v2030 = vpop.f32.mrb[0].mxu0
        %v2031 = vadd.f32 %v1800, %v2030
        %v2032 = vpop.f32.mrb[0].mxu0
        %2033 = vmatprep.mubr.f32.mxu0 0.0
        %2034 = vmatmul.mubr.f32.gmra.mrb[0].mxu0 %v1587
        %v2035 = vpop.f32.mrb[0].mxu0
        %v2036 = vadd.f32 %v1805, %v2035
        %v2037 = vpop.f32.mrb[0].mxu0
        %2038 = vmatprep.mubr.f32.mxu0 0.0
        %2039 = vmatmul.mubr.f32.gmra.mrb[0].mxu0 %v1590
        %v2040 = vpop.f32.mrb[0].mxu0
        %v2041 = vadd.f32 %v1810, %v2040
        %v2042 = vpop.f32.mrb[0].mxu0
        %2043 = vmatprep.mubr.f32.mxu0 0.0
        %2044 = vmatmul.mubr.f32.gmra.mrb[0].mxu0 %v1593
        %v2045 = vpop.f32.mrb[0].mxu0
        %v2046 = vadd.f32 %v1815, %v2045
        %v2047 = vpop.f32.mrb[0].mxu0
        %2048 = vmatprep.mubr.f32.mxu0 0.0
        %2049 = vmatmul.mubr.f32.gmra.mrb[0].mxu0 %v1596
        %v2050 = vpop.f32.mrb[0].mxu0
        %v2051 = vadd.f32 %v1820, %v2050
        %v2052 = vpop.f32.mrb[0].mxu0
        %2053 = vmatprep.mubr.f32.mxu0 0.0
        %2054 = vmatmul.mubr.f32.gmra.mrb[0].mxu0 %v1599
        %v2055 = vpop.f32.mrb[0].mxu0
        %v2056 = vadd.f32 %v1825, %v2055
        %v2057 = vpop.f32.mrb[0].mxu0
        %2058 = vmatprep.mubr.f32.mxu0 0.0
        %2059 = vmatmul.mubr.f32.gmra.mrb[0].mxu0 %v1602
        %v2060 = vpop.f32.mrb[0].mxu0
        %v2061 = vadd.f32 %v1830, %v2060
        %v2062 = vpop.f32.mrb[0].mxu0
        %2063 = vmatprep.mubr.f32.mxu0 0.0
        %2064 = vmatmul.mubr.f32.gmra.mrb[0].mxu0 %v1605
        %v2065 = vpop.f32.mrb[0].mxu0
        %v2066 = vadd.f32 %v1835, %v2065
        %v2067 = vpop.f32.mrb[0].mxu0
        %2068 = vdwg.mxu0
        %2071 = vrot.lane.b32.xlu0 %v941, 8
        %v2072 = vpop.permute.xlu0 %2071
        %2073 = vrot.lane.b32.xlu0 %v942, 8
        %v2074 = vpop.permute.xlu0 %2073
        %2079 = vrot.lane.b32.xlu0 %v1166, 16
        %v2080 = vpop.permute.xlu0 %2079
        %2081 = vrot.lane.b32.xlu0 %v1167, 16
        %v2082 = vpop.permute.xlu0 %2081
        %v2085 = vsel %vm869, %v1055, %v2072
        %v2086 = vsel %vm869, %v1056, %v2074
        %v2087 = vsel %vm1456, %v2085, %v2080
        %v2088 = vsel %vm1456, %v2086, %v2082
        %s2089 = scalar_lea.vmem %s2, 48
        %v2090 = vld [vmem:[%s2089] sm:$0xff]
        %v2091 = vld [vmem:[%s2089 + $0x8] sm:$0xff]
        %v2092 = vld [vmem:[%s2089 + $0x10] sm:$0xff]
        %v2094 = vsel %vm1516, %v2087, 0
        %v2097 = vsel %vm1516, %v2088, 0
        %2099 = vmatprep.subr.mxu0 0.0
        %2100 = vmatpush1.msra.mxu0 %v2090
        %2101 = vmatprep.subr.mxu0 0.0
        %2102 = vmatpush1.msra.mxu0 %v2091
        %2103 = vmatprep.subr.mxu0 0.0
        %2104 = vmatpush1.msra.mxu0 %v2092
        %2105 = vmatprep.subr.mxu0 0.0
        %2106 = vmatpush1.msra.mxu0 0.0
        %2107 = vmatprep.subr.mxu0 0.0
        %2108 = vmatpush1.msra.mxu0 0.0
        %2109 = vmatprep.subr.mxu0 0.0
        %2110 = vmatpush1.msra.mxu0 0.0
        %2111 = vmatprep.subr.mxu0 0.0
        %2112 = vmatpush1.msra.mxu0 0.0
        %2113 = vmatprep.subr.mxu0 0.0
        %2114 = vmatpush1.msra.mxu0 0.0
        %2115 = vmatprep.subr.mxu0 0.0
        %2116 = vmatpush1.msra.mxu0 0.0
        %2117 = vmatprep.subr.mxu0 0.0
        %2118 = vmatpush1.msra.mxu0 0.0
        %2119 = vmatprep.subr.mxu0 0.0
        %2120 = vmatpush1.msra.mxu0 0.0
        %2121 = vmatprep.subr.mxu0 0.0
        %2122 = vmatpush1.msra.mxu0 0.0
        %2123 = vmatprep.subr.mxu0 0.0
        %2124 = vmatpush1.msra.mxu0 0.0
        %2125 = vmatprep.subr.mxu0 0.0
        %2126 = vmatpush1.msra.mxu0 0.0
        %2127 = vmatprep.subr.mxu0 0.0
        %2128 = vmatpush1.msra.mxu0 0.0
        %2129 = vmatprep.subr.mxu0 0.0
        %2130 = vmatpush1.msra.mxu0 0.0
        %2131 = vmatprep.subr.mxu0 0.0
        %2132 = vmatpush1.msra.mxu0 0.0
        %2133 = vmatprep.subr.mxu0 0.0
        %2134 = vmatpush1.msra.mxu0 0.0
        %2135 = vmatprep.subr.mxu0 0.0
        %2136 = vmatpush1.msra.mxu0 0.0
        %2137 = vmatprep.subr.mxu0 0.0
        %2138 = vmatpush1.msra.mxu0 0.0
        %2139 = vmatprep.subr.mxu0 0.0
        %2140 = vmatpush1.msra.mxu0 0.0
        %2141 = vmatprep.subr.mxu0 0.0
        %2142 = vmatpush1.msra.mxu0 0.0
        %2143 = vmatprep.subr.mxu0 0.0
        %2144 = vmatpush1.msra.mxu0 0.0
        %2145 = vmatprep.subr.mxu0 0.0
        %2146 = vmatpush1.msra.mxu0 0.0
        %2147 = vmatprep.subr.mxu0 0.0
        %2148 = vmatpush1.msra.mxu0 0.0
        %2149 = vmatprep.subr.mxu0 0.0
        %2150 = vmatpush1.msra.mxu0 0.0
        %2151 = vmatprep.subr.mxu0 0.0
        %2152 = vmatpush1.msra.mxu0 0.0
        %2153 = vmatprep.subr.mxu0 0.0
        %2154 = vmatpush1.msra.mxu0 0.0
        %2155 = vmatprep.subr.mxu0 0.0
        %2156 = vmatpush1.msra.mxu0 0.0
        %2157 = vmatprep.subr.mxu0 0.0
        %2158 = vmatpush1.msra.mxu0 0.0
        %2159 = vmatprep.subr.mxu0 0.0
        %2160 = vmatpush1.msra.mxu0 0.0
        %2161 = vmatprep.subr.mxu0 0.0
        %2162 = vmatpush1.msra.mxu0 0.0
        %2163 = vmatprep.mubr.f32.mxu0 0.0
        %2164 = vmatmul.mubr.f32.gmra.mrb[0].mxu0 %v1524
        %v2165 = vpop.f32.mrb[0].mxu0
        %v2166 = vadd.f32 0.0, %v2165
        %v2167 = vpop.f32.mrb[0].mxu0
        %2168 = vmatprep.mubr.f32.mxu0 0.0
        %2169 = vmatmul.mubr.f32.gmra.mrb[0].mxu0 %v1527
        %v2170 = vpop.f32.mrb[0].mxu0
        %v2171 = vadd.f32 0.0, %v2170
        %v2172 = vpop.f32.mrb[0].mxu0
        %2173 = vmatprep.mubr.f32.mxu0 0.0
        %2174 = vmatmul.mubr.f32.gmra.mrb[0].mxu0 %v1530
        %v2175 = vpop.f32.mrb[0].mxu0
        %v2176 = vadd.f32 0.0, %v2175
        %v2177 = vpop.f32.mrb[0].mxu0
        %2178 = vmatprep.mubr.f32.mxu0 0.0
        %2179 = vmatmul.mubr.f32.gmra.mrb[0].mxu0 %v1533
        %v2180 = vpop.f32.mrb[0].mxu0
        %v2181 = vadd.f32 0.0, %v2180
        %v2182 = vpop.f32.mrb[0].mxu0
        %2183 = vmatprep.mubr.f32.mxu0 0.0
        %2184 = vmatmul.mubr.f32.gmra.mrb[0].mxu0 %v1536
        %v2185 = vpop.f32.mrb[0].mxu0
        %v2186 = vadd.f32 0.0, %v2185
        %v2187 = vpop.f32.mrb[0].mxu0
        %2188 = vmatprep.mubr.f32.mxu0 0.0
        %2189 = vmatmul.mubr.f32.gmra.mrb[0].mxu0 %v1539
        %v2190 = vpop.f32.mrb[0].mxu0
        %v2191 = vadd.f32 0.0, %v2190
        %v2192 = vpop.f32.mrb[0].mxu0
        %2193 = vmatprep.mubr.f32.mxu0 0.0
        %2194 = vmatmul.mubr.f32.gmra.mrb[0].mxu0 %v1542
        %v2195 = vpop.f32.mrb[0].mxu0
        %v2196 = vadd.f32 0.0, %v2195
        %v2197 = vpop.f32.mrb[0].mxu0
        %2198 = vmatprep.mubr.f32.mxu0 0.0
        %2199 = vmatmul.mubr.f32.gmra.mrb[0].mxu0 %v1545
        %v2200 = vpop.f32.mrb[0].mxu0
        %v2201 = vadd.f32 0.0, %v2200
        %v2202 = vpop.f32.mrb[0].mxu0
        %2203 = vmatprep.mubr.f32.mxu0 0.0
        %2204 = vmatmul.mubr.f32.gmra.mrb[0].mxu0 %v1548
        %v2205 = vpop.f32.mrb[0].mxu0
        %v2206 = vadd.f32 0.0, %v2205
        %v2207 = vpop.f32.mrb[0].mxu0
        %2208 = vmatprep.mubr.f32.mxu0 0.0
        %2209 = vmatmul.mubr.f32.gmra.mrb[0].mxu0 %v1551
        %v2210 = vpop.f32.mrb[0].mxu0
        %v2211 = vadd.f32 0.0, %v2210
        %v2212 = vpop.f32.mrb[0].mxu0
        %2213 = vmatprep.mubr.f32.mxu0 0.0
        %2214 = vmatmul.mubr.f32.gmra.mrb[0].mxu0 %v1554
        %v2215 = vpop.f32.mrb[0].mxu0
        %v2216 = vadd.f32 0.0, %v2215
        %v2217 = vpop.f32.mrb[0].mxu0
        %2218 = vmatprep.mubr.f32.mxu0 0.0
        %2219 = vmatmul.mubr.f32.gmra.mrb[0].mxu0 %v1557
        %v2220 = vpop.f32.mrb[0].mxu0
        %v2221 = vadd.f32 0.0, %v2220
        %v2222 = vpop.f32.mrb[0].mxu0
        %2223 = vmatprep.mubr.f32.mxu0 0.0
        %2224 = vmatmul.mubr.f32.gmra.mrb[0].mxu0 %v1560
        %v2225 = vpop.f32.mrb[0].mxu0
        %v2226 = vadd.f32 0.0, %v2225
        %v2227 = vpop.f32.mrb[0].mxu0
        %2228 = vmatprep.mubr.f32.mxu0 0.0
        %2229 = vmatmul.mubr.f32.gmra.mrb[0].mxu0 %v1563
        %v2230 = vpop.f32.mrb[0].mxu0
        %v2231 = vadd.f32 0.0, %v2230
        %v2232 = vpop.f32.mrb[0].mxu0
        %2233 = vmatprep.mubr.f32.mxu0 0.0
        %2234 = vmatmul.mubr.f32.gmra.mrb[0].mxu0 %v1566
        %v2235 = vpop.f32.mrb[0].mxu0
        %v2236 = vadd.f32 0.0, %v2235
        %v2237 = vpop.f32.mrb[0].mxu0
        %2238 = vmatprep.mubr.f32.mxu0 0.0
        %2239 = vmatmul.mubr.f32.gmra.mrb[0].mxu0 %v1569
        %v2240 = vpop.f32.mrb[0].mxu0
        %v2241 = vadd.f32 0.0, %v2240
        %v2242 = vpop.f32.mrb[0].mxu0
        %2243 = vmatprep.mubr.f32.mxu0 0.0
        %2244 = vmatmul.mubr.f32.gmra.mrb[0].mxu0 %v1572
        %v2245 = vpop.f32.mrb[0].mxu0
        %v2246 = vadd.f32 0.0, %v2245
        %v2247 = vpop.f32.mrb[0].mxu0
        %2248 = vmatprep.mubr.f32.mxu0 0.0
        %2249 = vmatmul.mubr.f32.gmra.mrb[0].mxu0 %v1575
        %v2250 = vpop.f32.mrb[0].mxu0
        %v2251 = vadd.f32 0.0, %v2250
        %v2252 = vpop.f32.mrb[0].mxu0
        %2253 = vmatprep.mubr.f32.mxu0 0.0
        %2254 = vmatmul.mubr.f32.gmra.mrb[0].mxu0 %v1578
        %v2255 = vpop.f32.mrb[0].mxu0
        %v2256 = vadd.f32 0.0, %v2255
        %v2257 = vpop.f32.mrb[0].mxu0
        %2258 = vmatprep.mubr.f32.mxu0 0.0
        %2259 = vmatmul.mubr.f32.gmra.mrb[0].mxu0 %v1581
        %v2260 = vpop.f32.mrb[0].mxu0
        %v2261 = vadd.f32 0.0, %v2260
        %v2262 = vpop.f32.mrb[0].mxu0
        %2263 = vmatprep.mubr.f32.mxu0 0.0
        %2264 = vmatmul.mubr.f32.gmra.mrb[0].mxu0 %v1584
        %v2265 = vpop.f32.mrb[0].mxu0
        %v2266 = vadd.f32 0.0, %v2265
        %v2267 = vpop.f32.mrb[0].mxu0
        %2268 = vmatprep.mubr.f32.mxu0 0.0
        %2269 = vmatmul.mubr.f32.gmra.mrb[0].mxu0 %v1587
        %v2270 = vpop.f32.mrb[0].mxu0
        %v2271 = vadd.f32 0.0, %v2270
        %v2272 = vpop.f32.mrb[0].mxu0
        %2273 = vmatprep.mubr.f32.mxu0 0.0
        %2274 = vmatmul.mubr.f32.gmra.mrb[0].mxu0 %v1590
        %v2275 = vpop.f32.mrb[0].mxu0
        %v2276 = vadd.f32 0.0, %v2275
        %v2277 = vpop.f32.mrb[0].mxu0
        %2278 = vmatprep.mubr.f32.mxu0 0.0
        %2279 = vmatmul.mubr.f32.gmra.mrb[0].mxu0 %v1593
        %v2280 = vpop.f32.mrb[0].mxu0
        %v2281 = vadd.f32 0.0, %v2280
        %v2282 = vpop.f32.mrb[0].mxu0
        %2283 = vmatprep.mubr.f32.mxu0 0.0
        %2284 = vmatmul.mubr.f32.gmra.mrb[0].mxu0 %v1596
        %v2285 = vpop.f32.mrb[0].mxu0
        %v2286 = vadd.f32 0.0, %v2285
        %v2287 = vpop.f32.mrb[0].mxu0
        %2288 = vmatprep.mubr.f32.mxu0 0.0
        %2289 = vmatmul.mubr.f32.gmra.mrb[0].mxu0 %v1599
        %v2290 = vpop.f32.mrb[0].mxu0
        %v2291 = vadd.f32 0.0, %v2290
        %v2292 = vpop.f32.mrb[0].mxu0
        %2293 = vmatprep.mubr.f32.mxu0 0.0
        %2294 = vmatmul.mubr.f32.gmra.mrb[0].mxu0 %v1602
        %v2295 = vpop.f32.mrb[0].mxu0
        %v2296 = vadd.f32 0.0, %v2295
        %v2297 = vpop.f32.mrb[0].mxu0
        %2298 = vmatprep.mubr.f32.mxu0 0.0
        %2299 = vmatmul.mubr.f32.gmra.mrb[0].mxu0 %v1605
        %v2300 = vpop.f32.mrb[0].mxu0
        %v2301 = vadd.f32 0.0, %v2300
        %v2302 = vpop.f32.mrb[0].mxu0
        %2303 = vmatprep.mubr.f32.mxu0 0.0
        %2304 = vmatmul.mubr.f32.gmra.mrb[0].mxu0 %v1608
        %v2305 = vpop.f32.mrb[0].mxu0
        %v2306 = vadd.f32 0.0, %v2305
        %v2307 = vpop.f32.mrb[0].mxu0
        %2308 = vmatprep.mubr.f32.mxu0 0.0
        %2309 = vmatmul.mubr.f32.gmra.mrb[0].mxu0 %v1611
        %v2310 = vpop.f32.mrb[0].mxu0
        %v2311 = vadd.f32 0.0, %v2310
        %v2312 = vpop.f32.mrb[0].mxu0
        %2313 = vmatprep.mubr.f32.mxu0 0.0
        %2314 = vmatmul.mubr.f32.gmra.mrb[0].mxu0 %v2094
        %v2315 = vpop.f32.mrb[0].mxu0
        %v2316 = vadd.f32 0.0, %v2315
        %v2317 = vpop.f32.mrb[0].mxu0
        %2318 = vmatprep.mubr.f32.mxu0 0.0
        %2319 = vmatmul.mubr.f32.gmra.mrb[0].mxu0 %v2097
        %v2320 = vpop.f32.mrb[0].mxu0
        %v2321 = vadd.f32 0.0, %v2320
        %v2322 = vpop.f32.mrb[0].mxu0
        %2323 = vdwg.mxu0
        %v2324 = vadd.f32 %v1911, %v2166
        %v2325 = vadd.f32 %v1916, %v2171
        %v2326 = vadd.f32 %v1921, %v2176
        %v2327 = vadd.f32 %v1926, %v2181
        %v2328 = vadd.f32 %v1931, %v2186
        %v2329 = vadd.f32 %v1936, %v2191
        %v2330 = vadd.f32 %v1941, %v2196
        %v2331 = vadd.f32 %v1946, %v2201
        %v2332 = vadd.f32 %v1951, %v2206
        %v2333 = vadd.f32 %v1956, %v2211
        %v2334 = vadd.f32 %v1961, %v2216
        %v2335 = vadd.f32 %v1966, %v2221
        %v2336 = vadd.f32 %v1971, %v2226
        %v2337 = vadd.f32 %v1976, %v2231
        %v2338 = vadd.f32 %v1981, %v2236
        %v2339 = vadd.f32 %v1986, %v2241
        %v2340 = vadd.f32 %v1991, %v2246
        %v2341 = vadd.f32 %v1996, %v2251
        %v2342 = vadd.f32 %v2001, %v2256
        %v2343 = vadd.f32 %v2006, %v2261
        %v2344 = vadd.f32 %v2011, %v2266
        %v2345 = vadd.f32 %v2016, %v2271
        %v2346 = vadd.f32 %v2021, %v2276
        %v2347 = vadd.f32 %v2026, %v2281
        %v2348 = vadd.f32 %v2031, %v2286
        %v2349 = vadd.f32 %v2036, %v2291
        %v2350 = vadd.f32 %v2041, %v2296
        %v2351 = vadd.f32 %v2046, %v2301
        %v2352 = vadd.f32 %v2051, %v2306
        %v2353 = vadd.f32 %v2056, %v2311
        %v2354 = vadd.f32 %v2061, %v2316
        %v2355 = vadd.f32 %v2066, %v2321
        %v2357 = vlaneseq
        %v2358 = vshrl.u32 %v2357, 7
        %v2359 = vsub.s32 0, %v2358
        %v2360 = vrot.slane %v396, %v2359
        %v2362 = vmul.f32 %v2324, %v2360
        %v2363 = vmul.f32 %v2325, %v2360
        %v2364 = vmul.f32 %v2326, %v2360
        %v2365 = vmul.f32 %v2327, %v2360
        %v2366 = vmul.f32 %v2328, %v2360
        %v2367 = vmul.f32 %v2329, %v2360
        %v2368 = vmul.f32 %v2330, %v2360
        %v2369 = vmul.f32 %v2331, %v2360
        %v2370 = vmul.f32 %v2332, %v2360
        %v2371 = vmul.f32 %v2333, %v2360
        %v2372 = vmul.f32 %v2334, %v2360
        %v2373 = vmul.f32 %v2335, %v2360
        %v2374 = vmul.f32 %v2336, %v2360
        %v2375 = vmul.f32 %v2337, %v2360
        %v2376 = vmul.f32 %v2338, %v2360
        %v2377 = vmul.f32 %v2339, %v2360
        %v2378 = vmul.f32 %v2340, %v2360
        %v2379 = vmul.f32 %v2341, %v2360
        %v2380 = vmul.f32 %v2342, %v2360
        %v2381 = vmul.f32 %v2343, %v2360
        %v2382 = vmul.f32 %v2344, %v2360
        %v2383 = vmul.f32 %v2345, %v2360
        %v2384 = vmul.f32 %v2346, %v2360
        %v2385 = vmul.f32 %v2347, %v2360
        %v2386 = vmul.f32 %v2348, %v2360
        %v2387 = vmul.f32 %v2349, %v2360
        %v2388 = vmul.f32 %v2350, %v2360
        %v2389 = vmul.f32 %v2351, %v2360
        %v2390 = vmul.f32 %v2352, %v2360
        %v2391 = vmul.f32 %v2353, %v2360
        %v2392 = vmul.f32 %v2354, %v2360
        %v2393 = vmul.f32 %v2355, %v2360
        %v2395 = vlaneseq
        %v2396 = vshrl.u32 %v2395, 7
        %v2397 = vsub.s32 0, %v2396
        %v2398 = vrot.slane %v397, %v2397
        %v2400 = vadd.f32 %v2362, %v2398
        %v2401 = vadd.f32 %v2363, %v2398
        %v2402 = vadd.f32 %v2364, %v2398
        %v2403 = vadd.f32 %v2365, %v2398
        %v2404 = vadd.f32 %v2366, %v2398
        %v2405 = vadd.f32 %v2367, %v2398
        %v2406 = vadd.f32 %v2368, %v2398
        %v2407 = vadd.f32 %v2369, %v2398
        %v2408 = vadd.f32 %v2370, %v2398
        %v2409 = vadd.f32 %v2371, %v2398
        %v2410 = vadd.f32 %v2372, %v2398
        %v2411 = vadd.f32 %v2373, %v2398
        %v2412 = vadd.f32 %v2374, %v2398
        %v2413 = vadd.f32 %v2375, %v2398
        %v2414 = vadd.f32 %v2376, %v2398
        %v2415 = vadd.f32 %v2377, %v2398
        %v2416 = vadd.f32 %v2378, %v2398
        %v2417 = vadd.f32 %v2379, %v2398
        %v2418 = vadd.f32 %v2380, %v2398
        %v2419 = vadd.f32 %v2381, %v2398
        %v2420 = vadd.f32 %v2382, %v2398
        %v2421 = vadd.f32 %v2383, %v2398
        %v2422 = vadd.f32 %v2384, %v2398
        %v2423 = vadd.f32 %v2385, %v2398
        %v2424 = vadd.f32 %v2386, %v2398
        %v2425 = vadd.f32 %v2387, %v2398
        %v2426 = vadd.f32 %v2388, %v2398
        %v2427 = vadd.f32 %v2389, %v2398
        %v2428 = vadd.f32 %v2390, %v2398
        %v2429 = vadd.f32 %v2391, %v2398
        %v2430 = vadd.f32 %v2392, %v2398
        %v2431 = vadd.f32 %v2393, %v2398
        %v2432 = vmax.f32 %v2400, 0.0
        %v2433 = vmax.f32 %v2401, 0.0
        %v2434 = vmax.f32 %v2402, 0.0
        %v2435 = vmax.f32 %v2403, 0.0
        %v2436 = vmax.f32 %v2404, 0.0
        %v2437 = vmax.f32 %v2405, 0.0
        %v2438 = vmax.f32 %v2406, 0.0
        %v2439 = vmax.f32 %v2407, 0.0
        %v2440 = vmax.f32 %v2408, 0.0
        %v2441 = vmax.f32 %v2409, 0.0
        %v2442 = vmax.f32 %v2410, 0.0
        %v2443 = vmax.f32 %v2411, 0.0
        %v2444 = vmax.f32 %v2412, 0.0
        %v2445 = vmax.f32 %v2413, 0.0
        %v2446 = vmax.f32 %v2414, 0.0
        %v2447 = vmax.f32 %v2415, 0.0
        %v2448 = vmax.f32 %v2416, 0.0
        %v2449 = vmax.f32 %v2417, 0.0
        %v2450 = vmax.f32 %v2418, 0.0
        %v2451 = vmax.f32 %v2419, 0.0
        %v2452 = vmax.f32 %v2420, 0.0
        %v2453 = vmax.f32 %v2421, 0.0
        %v2454 = vmax.f32 %v2422, 0.0
        %v2455 = vmax.f32 %v2423, 0.0
        %v2456 = vmax.f32 %v2424, 0.0
        %v2457 = vmax.f32 %v2425, 0.0
        %v2458 = vmax.f32 %v2426, 0.0
        %v2459 = vmax.f32 %v2427, 0.0
        %v2460 = vmax.f32 %v2428, 0.0
        %v2461 = vmax.f32 %v2429, 0.0
        %v2462 = vmax.f32 %v2430, 0.0
        %v2463 = vmax.f32 %v2431, 0.0
        %v2464 = vld [vmem:[%s3] sm:$0xff]
        %v2466 = vsel %vm869, %v2432, 0
        %v2469 = vsel %vm869, %v2433, 0
        %v2472 = vsel %vm869, %v2434, 0
        %v2475 = vsel %vm869, %v2435, 0
        %v2478 = vsel %vm869, %v2436, 0
        %v2481 = vsel %vm869, %v2437, 0
        %v2484 = vsel %vm869, %v2438, 0
        %v2487 = vsel %vm869, %v2439, 0
        %v2490 = vsel %vm869, %v2440, 0
        %v2493 = vsel %vm869, %v2441, 0
        %v2496 = vsel %vm869, %v2442, 0
        %v2499 = vsel %vm869, %v2443, 0
        %v2502 = vsel %vm869, %v2444, 0
        %v2505 = vsel %vm869, %v2445, 0
        %v2508 = vsel %vm869, %v2446, 0
        %v2511 = vsel %vm869, %v2447, 0
        %v2514 = vsel %vm869, %v2448, 0
        %v2517 = vsel %vm869, %v2449, 0
        %v2520 = vsel %vm869, %v2450, 0
        %v2523 = vsel %vm869, %v2451, 0
        %v2526 = vsel %vm869, %v2452, 0
        %v2529 = vsel %vm869, %v2453, 0
        %v2532 = vsel %vm869, %v2454, 0
        %v2535 = vsel %vm869, %v2455, 0
        %v2538 = vsel %vm869, %v2456, 0
        %v2541 = vsel %vm869, %v2457, 0
        %v2544 = vsel %vm869, %v2458, 0
        %v2547 = vsel %vm869, %v2459, 0
        %v2550 = vsel %vm869, %v2460, 0
        %v2553 = vsel %vm869, %v2461, 0
        %v2556 = vsel %vm869, %v2462, 0
        %v2559 = vsel %vm869, %v2463, 0
        %2561 = vmatprep.subr.mxu0 0.0
        %2562 = vmatpush1.msra.mxu0 %v2464
        %2563 = vmatprep.subr.mxu0 0.0
        %2564 = vmatpush1.msra.mxu0 0.0
        %2565 = vmatprep.subr.mxu0 0.0
        %2566 = vmatpush1.msra.mxu0 0.0
        %2567 = vmatprep.subr.mxu0 0.0
        %2568 = vmatpush1.msra.mxu0 0.0
        %2569 = vmatprep.subr.mxu0 0.0
        %2570 = vmatpush1.msra.mxu0 0.0
        %2571 = vmatprep.subr.mxu0 0.0
        %2572 = vmatpush1.msra.mxu0 0.0
        %2573 = vmatprep.subr.mxu0 0.0
        %2574 = vmatpush1.msra.mxu0 0.0
        %2575 = vmatprep.subr.mxu0 0.0
        %2576 = vmatpush1.msra.mxu0 0.0
        %2577 = vmatprep.subr.mxu0 0.0
        %2578 = vmatpush1.msra.mxu0 0.0
        %2579 = vmatprep.subr.mxu0 0.0
        %2580 = vmatpush1.msra.mxu0 0.0
        %2581 = vmatprep.subr.mxu0 0.0
        %2582 = vmatpush1.msra.mxu0 0.0
        %2583 = vmatprep.subr.mxu0 0.0
        %2584 = vmatpush1.msra.mxu0 0.0
        %2585 = vmatprep.subr.mxu0 0.0
        %2586 = vmatpush1.msra.mxu0 0.0
        %2587 = vmatprep.subr.mxu0 0.0
        %2588 = vmatpush1.msra.mxu0 0.0
        %2589 = vmatprep.subr.mxu0 0.0
        %2590 = vmatpush1.msra.mxu0 0.0
        %2591 = vmatprep.subr.mxu0 0.0
        %2592 = vmatpush1.msra.mxu0 0.0
        %2593 = vmatprep.subr.mxu0 0.0
        %2594 = vmatpush1.msra.mxu0 0.0
        %2595 = vmatprep.subr.mxu0 0.0
        %2596 = vmatpush1.msra.mxu0 0.0
        %2597 = vmatprep.subr.mxu0 0.0
        %2598 = vmatpush1.msra.mxu0 0.0
        %2599 = vmatprep.subr.mxu0 0.0
        %2600 = vmatpush1.msra.mxu0 0.0
        %2601 = vmatprep.subr.mxu0 0.0
        %2602 = vmatpush1.msra.mxu0 0.0
        %2603 = vmatprep.subr.mxu0 0.0
        %2604 = vmatpush1.msra.mxu0 0.0
        %2605 = vmatprep.subr.mxu0 0.0
        %2606 = vmatpush1.msra.mxu0 0.0
        %2607 = vmatprep.subr.mxu0 0.0
        %2608 = vmatpush1.msra.mxu0 0.0
        %2609 = vmatprep.subr.mxu0 0.0
        %2610 = vmatpush1.msra.mxu0 0.0
        %2611 = vmatprep.subr.mxu0 0.0
        %2612 = vmatpush1.msra.mxu0 0.0
        %2613 = vmatprep.subr.mxu0 0.0
        %2614 = vmatpush1.msra.mxu0 0.0
        %2615 = vmatprep.subr.mxu0 0.0
        %2616 = vmatpush1.msra.mxu0 0.0
        %2617 = vmatprep.subr.mxu0 0.0
        %2618 = vmatpush1.msra.mxu0 0.0
        %2619 = vmatprep.subr.mxu0 0.0
        %2620 = vmatpush1.msra.mxu0 0.0
        %2621 = vmatprep.subr.mxu0 0.0
        %2622 = vmatpush1.msra.mxu0 0.0
        %2623 = vmatprep.subr.mxu0 0.0
        %2624 = vmatpush1.msra.mxu0 0.0
        %2625 = vmatprep.mubr.f32.mxu0 0.0
        %2626 = vmatmul.mubr.f32.gmra.mrb[0].mxu0 %v2466
        %v2627 = vpop.f32.mrb[0].mxu0
        %v2628 = vadd.f32 0.0, %v2627
        %v2629 = vpop.f32.mrb[0].mxu0
        %2630 = vmatprep.mubr.f32.mxu0 0.0
        %2631 = vmatmul.mubr.f32.gmra.mrb[0].mxu0 %v2469
        %v2632 = vpop.f32.mrb[0].mxu0
        %v2633 = vadd.f32 0.0, %v2632
        %v2634 = vpop.f32.mrb[0].mxu0
        %2635 = vmatprep.mubr.f32.mxu0 0.0
        %2636 = vmatmul.mubr.f32.gmra.mrb[0].mxu0 %v2472
        %v2637 = vpop.f32.mrb[0].mxu0
        %v2638 = vadd.f32 0.0, %v2637
        %v2639 = vpop.f32.mrb[0].mxu0
        %2640 = vmatprep.mubr.f32.mxu0 0.0
        %2641 = vmatmul.mubr.f32.gmra.mrb[0].mxu0 %v2475
        %v2642 = vpop.f32.mrb[0].mxu0
        %v2643 = vadd.f32 0.0, %v2642
        %v2644 = vpop.f32.mrb[0].mxu0
        %2645 = vmatprep.mubr.f32.mxu0 0.0
        %2646 = vmatmul.mubr.f32.gmra.mrb[0].mxu0 %v2478
        %v2647 = vpop.f32.mrb[0].mxu0
        %v2648 = vadd.f32 0.0, %v2647
        %v2649 = vpop.f32.mrb[0].mxu0
        %2650 = vmatprep.mubr.f32.mxu0 0.0
        %2651 = vmatmul.mubr.f32.gmra.mrb[0].mxu0 %v2481
        %v2652 = vpop.f32.mrb[0].mxu0
        %v2653 = vadd.f32 0.0, %v2652
        %v2654 = vpop.f32.mrb[0].mxu0
        %2655 = vmatprep.mubr.f32.mxu0 0.0
        %2656 = vmatmul.mubr.f32.gmra.mrb[0].mxu0 %v2484
        %v2657 = vpop.f32.mrb[0].mxu0
        %v2658 = vadd.f32 0.0, %v2657
        %v2659 = vpop.f32.mrb[0].mxu0
        %2660 = vmatprep.mubr.f32.mxu0 0.0
        %2661 = vmatmul.mubr.f32.gmra.mrb[0].mxu0 %v2487
        %v2662 = vpop.f32.mrb[0].mxu0
        %v2663 = vadd.f32 0.0, %v2662
        %v2664 = vpop.f32.mrb[0].mxu0
        %2665 = vmatprep.mubr.f32.mxu0 0.0
        %2666 = vmatmul.mubr.f32.gmra.mrb[0].mxu0 %v2490
        %v2667 = vpop.f32.mrb[0].mxu0
        %v2668 = vadd.f32 0.0, %v2667
        %v2669 = vpop.f32.mrb[0].mxu0
        %2670 = vmatprep.mubr.f32.mxu0 0.0
        %2671 = vmatmul.mubr.f32.gmra.mrb[0].mxu0 %v2493
        %v2672 = vpop.f32.mrb[0].mxu0
        %v2673 = vadd.f32 0.0, %v2672
        %v2674 = vpop.f32.mrb[0].mxu0
        %2675 = vmatprep.mubr.f32.mxu0 0.0
        %2676 = vmatmul.mubr.f32.gmra.mrb[0].mxu0 %v2496
        %v2677 = vpop.f32.mrb[0].mxu0
        %v2678 = vadd.f32 0.0, %v2677
        %v2679 = vpop.f32.mrb[0].mxu0
        %2680 = vmatprep.mubr.f32.mxu0 0.0
        %2681 = vmatmul.mubr.f32.gmra.mrb[0].mxu0 %v2499
        %v2682 = vpop.f32.mrb[0].mxu0
        %v2683 = vadd.f32 0.0, %v2682
        %v2684 = vpop.f32.mrb[0].mxu0
        %2685 = vmatprep.mubr.f32.mxu0 0.0
        %2686 = vmatmul.mubr.f32.gmra.mrb[0].mxu0 %v2502
        %v2687 = vpop.f32.mrb[0].mxu0
        %v2688 = vadd.f32 0.0, %v2687
        %v2689 = vpop.f32.mrb[0].mxu0
        %2690 = vmatprep.mubr.f32.mxu0 0.0
        %2691 = vmatmul.mubr.f32.gmra.mrb[0].mxu0 %v2505
        %v2692 = vpop.f32.mrb[0].mxu0
        %v2693 = vadd.f32 0.0, %v2692
        %v2694 = vpop.f32.mrb[0].mxu0
        %2695 = vmatprep.mubr.f32.mxu0 0.0
        %2696 = vmatmul.mubr.f32.gmra.mrb[0].mxu0 %v2508
        %v2697 = vpop.f32.mrb[0].mxu0
        %v2698 = vadd.f32 0.0, %v2697
        %v2699 = vpop.f32.mrb[0].mxu0
        %2700 = vmatprep.mubr.f32.mxu0 0.0
        %2701 = vmatmul.mubr.f32.gmra.mrb[0].mxu0 %v2511
        %v2702 = vpop.f32.mrb[0].mxu0
        %v2703 = vadd.f32 0.0, %v2702
        %v2704 = vpop.f32.mrb[0].mxu0
        %2705 = vmatprep.mubr.f32.mxu0 0.0
        %2706 = vmatmul.mubr.f32.gmra.mrb[0].mxu0 %v2514
        %v2707 = vpop.f32.mrb[0].mxu0
        %v2708 = vadd.f32 0.0, %v2707
        %v2709 = vpop.f32.mrb[0].mxu0
        %2710 = vmatprep.mubr.f32.mxu0 0.0
        %2711 = vmatmul.mubr.f32.gmra.mrb[0].mxu0 %v2517
        %v2712 = vpop.f32.mrb[0].mxu0
        %v2713 = vadd.f32 0.0, %v2712
        %v2714 = vpop.f32.mrb[0].mxu0
        %2715 = vmatprep.mubr.f32.mxu0 0.0
        %2716 = vmatmul.mubr.f32.gmra.mrb[0].mxu0 %v2520
        %v2717 = vpop.f32.mrb[0].mxu0
        %v2718 = vadd.f32 0.0, %v2717
        %v2719 = vpop.f32.mrb[0].mxu0
        %2720 = vmatprep.mubr.f32.mxu0 0.0
        %2721 = vmatmul.mubr.f32.gmra.mrb[0].mxu0 %v2523
        %v2722 = vpop.f32.mrb[0].mxu0
        %v2723 = vadd.f32 0.0, %v2722
        %v2724 = vpop.f32.mrb[0].mxu0
        %2725 = vmatprep.mubr.f32.mxu0 0.0
        %2726 = vmatmul.mubr.f32.gmra.mrb[0].mxu0 %v2526
        %v2727 = vpop.f32.mrb[0].mxu0
        %v2728 = vadd.f32 0.0, %v2727
        %v2729 = vpop.f32.mrb[0].mxu0
        %2730 = vmatprep.mubr.f32.mxu0 0.0
        %2731 = vmatmul.mubr.f32.gmra.mrb[0].mxu0 %v2529
        %v2732 = vpop.f32.mrb[0].mxu0
        %v2733 = vadd.f32 0.0, %v2732
        %v2734 = vpop.f32.mrb[0].mxu0
        %2735 = vmatprep.mubr.f32.mxu0 0.0
        %2736 = vmatmul.mubr.f32.gmra.mrb[0].mxu0 %v2532
        %v2737 = vpop.f32.mrb[0].mxu0
        %v2738 = vadd.f32 0.0, %v2737
        %v2739 = vpop.f32.mrb[0].mxu0
        %2740 = vmatprep.mubr.f32.mxu0 0.0
        %2741 = vmatmul.mubr.f32.gmra.mrb[0].mxu0 %v2535
        %v2742 = vpop.f32.mrb[0].mxu0
        %v2743 = vadd.f32 0.0, %v2742
        %v2744 = vpop.f32.mrb[0].mxu0
        %2745 = vmatprep.mubr.f32.mxu0 0.0
        %2746 = vmatmul.mubr.f32.gmra.mrb[0].mxu0 %v2538
        %v2747 = vpop.f32.mrb[0].mxu0
        %v2748 = vadd.f32 0.0, %v2747
        %v2749 = vpop.f32.mrb[0].mxu0
        %2750 = vmatprep.mubr.f32.mxu0 0.0
        %2751 = vmatmul.mubr.f32.gmra.mrb[0].mxu0 %v2541
        %v2752 = vpop.f32.mrb[0].mxu0
        %v2753 = vadd.f32 0.0, %v2752
        %v2754 = vpop.f32.mrb[0].mxu0
        %2755 = vmatprep.mubr.f32.mxu0 0.0
        %2756 = vmatmul.mubr.f32.gmra.mrb[0].mxu0 %v2544
        %v2757 = vpop.f32.mrb[0].mxu0
        %v2758 = vadd.f32 0.0, %v2757
        %v2759 = vpop.f32.mrb[0].mxu0
        %2760 = vmatprep.mubr.f32.mxu0 0.0
        %2761 = vmatmul.mubr.f32.gmra.mrb[0].mxu0 %v2547
        %v2762 = vpop.f32.mrb[0].mxu0
        %v2763 = vadd.f32 0.0, %v2762
        %v2764 = vpop.f32.mrb[0].mxu0
        %2765 = vmatprep.mubr.f32.mxu0 0.0
        %2766 = vmatmul.mubr.f32.gmra.mrb[0].mxu0 %v2550
        %v2767 = vpop.f32.mrb[0].mxu0
        %v2768 = vadd.f32 0.0, %v2767
        %v2769 = vpop.f32.mrb[0].mxu0
        %2770 = vmatprep.mubr.f32.mxu0 0.0
        %2771 = vmatmul.mubr.f32.gmra.mrb[0].mxu0 %v2553
        %v2772 = vpop.f32.mrb[0].mxu0
        %v2773 = vadd.f32 0.0, %v2772
        %v2774 = vpop.f32.mrb[0].mxu0
        %2775 = vmatprep.mubr.f32.mxu0 0.0
        %2776 = vmatmul.mubr.f32.gmra.mrb[0].mxu0 %v2556
        %v2777 = vpop.f32.mrb[0].mxu0
        %v2778 = vadd.f32 0.0, %v2777
        %v2779 = vpop.f32.mrb[0].mxu0
        %2780 = vmatprep.mubr.f32.mxu0 0.0
        %2781 = vmatmul.mubr.f32.gmra.mrb[0].mxu0 %v2559
        %v2782 = vpop.f32.mrb[0].mxu0
        %v2783 = vadd.f32 0.0, %v2782
        %v2784 = vpop.f32.mrb[0].mxu0
        %2785 = vdwg.mxu0
        %v2787 = vlaneseq
        %v2788 = vshrl.u32 %v2787, 7
        %v2789 = vsub.s32 0, %v2788
        %v2790 = vrot.slane %v398, %v2789
        %v2792 = vmul.f32 %v2628, %v2790
        %v2793 = vmul.f32 %v2633, %v2790
        %v2794 = vmul.f32 %v2638, %v2790
        %v2795 = vmul.f32 %v2643, %v2790
        %v2796 = vmul.f32 %v2648, %v2790
        %v2797 = vmul.f32 %v2653, %v2790
        %v2798 = vmul.f32 %v2658, %v2790
        %v2799 = vmul.f32 %v2663, %v2790
        %v2800 = vmul.f32 %v2668, %v2790
        %v2801 = vmul.f32 %v2673, %v2790
        %v2802 = vmul.f32 %v2678, %v2790
        %v2803 = vmul.f32 %v2683, %v2790
        %v2804 = vmul.f32 %v2688, %v2790
        %v2805 = vmul.f32 %v2693, %v2790
        %v2806 = vmul.f32 %v2698, %v2790
        %v2807 = vmul.f32 %v2703, %v2790
        %v2808 = vmul.f32 %v2708, %v2790
        %v2809 = vmul.f32 %v2713, %v2790
        %v2810 = vmul.f32 %v2718, %v2790
        %v2811 = vmul.f32 %v2723, %v2790
        %v2812 = vmul.f32 %v2728, %v2790
        %v2813 = vmul.f32 %v2733, %v2790
        %v2814 = vmul.f32 %v2738, %v2790
        %v2815 = vmul.f32 %v2743, %v2790
        %v2816 = vmul.f32 %v2748, %v2790
        %v2817 = vmul.f32 %v2753, %v2790
        %v2818 = vmul.f32 %v2758, %v2790
        %v2819 = vmul.f32 %v2763, %v2790
        %v2820 = vmul.f32 %v2768, %v2790
        %v2821 = vmul.f32 %v2773, %v2790
        %v2822 = vmul.f32 %v2778, %v2790
        %v2823 = vmul.f32 %v2783, %v2790
        %v2825 = vlaneseq
        %v2826 = vshrl.u32 %v2825, 7
        %v2827 = vsub.s32 0, %v2826
        %v2828 = vrot.slane %v399, %v2827
        %v2830 = vadd.f32 %v2792, %v2828
        %v2831 = vadd.f32 %v2793, %v2828
        %v2832 = vadd.f32 %v2794, %v2828
        %v2833 = vadd.f32 %v2795, %v2828
        %v2834 = vadd.f32 %v2796, %v2828
        %v2835 = vadd.f32 %v2797, %v2828
        %v2836 = vadd.f32 %v2798, %v2828
        %v2837 = vadd.f32 %v2799, %v2828
        %v2838 = vadd.f32 %v2800, %v2828
        %v2839 = vadd.f32 %v2801, %v2828
        %v2840 = vadd.f32 %v2802, %v2828
        %v2841 = vadd.f32 %v2803, %v2828
        %v2842 = vadd.f32 %v2804, %v2828
        %v2843 = vadd.f32 %v2805, %v2828
        %v2844 = vadd.f32 %v2806, %v2828
        %v2845 = vadd.f32 %v2807, %v2828
        %v2846 = vadd.f32 %v2808, %v2828
        %v2847 = vadd.f32 %v2809, %v2828
        %v2848 = vadd.f32 %v2810, %v2828
        %v2849 = vadd.f32 %v2811, %v2828
        %v2850 = vadd.f32 %v2812, %v2828
        %v2851 = vadd.f32 %v2813, %v2828
        %v2852 = vadd.f32 %v2814, %v2828
        %v2853 = vadd.f32 %v2815, %v2828
        %v2854 = vadd.f32 %v2816, %v2828
        %v2855 = vadd.f32 %v2817, %v2828
        %v2856 = vadd.f32 %v2818, %v2828
        %v2857 = vadd.f32 %v2819, %v2828
        %v2858 = vadd.f32 %v2820, %v2828
        %v2859 = vadd.f32 %v2821, %v2828
        %v2860 = vadd.f32 %v2822, %v2828
        %v2861 = vadd.f32 %v2823, %v2828
        %v2862 = vld [vmem:[%s405] sm:$0xff]
        %v2863 = vld [vmem:[%s405 + $0x8] sm:$0xff]
        %v2864 = vld [vmem:[%s405 + $0x10] sm:$0xff]
        %v2865 = vld [vmem:[%s405 + $0x18] sm:$0xff]
        %v2866 = vld [vmem:[%s405 + $0x20] sm:$0xff]
        %v2867 = vld [vmem:[%s405 + $0x28] sm:$0xff]
        %v2868 = vld [vmem:[%s405 + $0x30] sm:$0xff]
        %v2869 = vld [vmem:[%s405 + $0x38] sm:$0xff]
        %v2870 = vld [vmem:[%s405 + $0x40] sm:$0xff]
        %v2871 = vld [vmem:[%s405 + $0x48] sm:$0xff]
        %v2872 = vld [vmem:[%s405 + $0x50] sm:$0xff]
        %v2873 = vld [vmem:[%s405 + $0x58] sm:$0xff]
        %v2874 = vld [vmem:[%s405 + $0x60] sm:$0xff]
        %v2875 = vld [vmem:[%s405 + $0x68] sm:$0xff]
        %v2876 = vld [vmem:[%s405 + $0x70] sm:$0xff]
        %v2877 = vld [vmem:[%s405 + $0x78] sm:$0xff]
        %v2878 = vld [vmem:[%s405 + $0x80] sm:$0xff]
        %v2879 = vld [vmem:[%s405 + $0x88] sm:$0xff]
        %v2880 = vld [vmem:[%s405 + $0x90] sm:$0xff]
        %v2881 = vld [vmem:[%s405 + $0x98] sm:$0xff]
        %v2882 = vld [vmem:[%s405 + $0xa0] sm:$0xff]
        %v2883 = vld [vmem:[%s405 + $0xa8] sm:$0xff]
        %v2884 = vld [vmem:[%s405 + $0xb0] sm:$0xff]
        %v2885 = vld [vmem:[%s405 + $0xb8] sm:$0xff]
        %v2886 = vld [vmem:[%s405 + $0xc0] sm:$0xff]
        %v2887 = vld [vmem:[%s405 + $0xc8] sm:$0xff]
        %v2888 = vld [vmem:[%s405 + $0xd0] sm:$0xff]
        %v2889 = vld [vmem:[%s405 + $0xd8] sm:$0xff]
        %v2890 = vld [vmem:[%s405 + $0xe0] sm:$0xff]
        %v2891 = vld [vmem:[%s405 + $0xe8] sm:$0xff]
        %v2892 = vld [vmem:[%s405 + $0xf0] sm:$0xff]
        %v2893 = vld [vmem:[%s405 + $0xf8] sm:$0xff]
        %v2894 = vadd.f32 %v2830, %v2862
        %v2895 = vadd.f32 %v2831, %v2863
        %v2896 = vadd.f32 %v2832, %v2864
        %v2897 = vadd.f32 %v2833, %v2865
        %v2898 = vadd.f32 %v2834, %v2866
        %v2899 = vadd.f32 %v2835, %v2867
        %v2900 = vadd.f32 %v2836, %v2868
        %v2901 = vadd.f32 %v2837, %v2869
        %v2902 = vadd.f32 %v2838, %v2870
        %v2903 = vadd.f32 %v2839, %v2871
        %v2904 = vadd.f32 %v2840, %v2872
        %v2905 = vadd.f32 %v2841, %v2873
        %v2906 = vadd.f32 %v2842, %v2874
        %v2907 = vadd.f32 %v2843, %v2875
        %v2908 = vadd.f32 %v2844, %v2876
        %v2909 = vadd.f32 %v2845, %v2877
        %v2910 = vadd.f32 %v2846, %v2878
        %v2911 = vadd.f32 %v2847, %v2879
        %v2912 = vadd.f32 %v2848, %v2880
        %v2913 = vadd.f32 %v2849, %v2881
        %v2914 = vadd.f32 %v2850, %v2882
        %v2915 = vadd.f32 %v2851, %v2883
        %v2916 = vadd.f32 %v2852, %v2884
        %v2917 = vadd.f32 %v2853, %v2885
        %v2918 = vadd.f32 %v2854, %v2886
        %v2919 = vadd.f32 %v2855, %v2887
        %v2920 = vadd.f32 %v2856, %v2888
        %v2921 = vadd.f32 %v2857, %v2889
        %v2922 = vadd.f32 %v2858, %v2890
        %v2923 = vadd.f32 %v2859, %v2891
        %v2924 = vadd.f32 %v2860, %v2892
        %v2925 = vadd.f32 %v2861, %v2893
        %v2926 = vmax.f32 %v2894, 0.0
        %v2927 = vmax.f32 %v2895, 0.0
        %v2928 = vmax.f32 %v2896, 0.0
        %v2929 = vmax.f32 %v2897, 0.0
        %v2930 = vmax.f32 %v2898, 0.0
        %v2931 = vmax.f32 %v2899, 0.0
        %v2932 = vmax.f32 %v2900, 0.0
        %v2933 = vmax.f32 %v2901, 0.0
        %v2934 = vmax.f32 %v2902, 0.0
        %v2935 = vmax.f32 %v2903, 0.0
        %v2936 = vmax.f32 %v2904, 0.0
        %v2937 = vmax.f32 %v2905, 0.0
        %v2938 = vmax.f32 %v2906, 0.0
        %v2939 = vmax.f32 %v2907, 0.0
        %v2940 = vmax.f32 %v2908, 0.0
        %v2941 = vmax.f32 %v2909, 0.0
        %v2942 = vmax.f32 %v2910, 0.0
        %v2943 = vmax.f32 %v2911, 0.0
        %v2944 = vmax.f32 %v2912, 0.0
        %v2945 = vmax.f32 %v2913, 0.0
        %v2946 = vmax.f32 %v2914, 0.0
        %v2947 = vmax.f32 %v2915, 0.0
        %v2948 = vmax.f32 %v2916, 0.0
        %v2949 = vmax.f32 %v2917, 0.0
        %v2950 = vmax.f32 %v2918, 0.0
        %v2951 = vmax.f32 %v2919, 0.0
        %v2952 = vmax.f32 %v2920, 0.0
        %v2953 = vmax.f32 %v2921, 0.0
        %v2954 = vmax.f32 %v2922, 0.0
        %v2955 = vmax.f32 %v2923, 0.0
        %v2956 = vmax.f32 %v2924, 0.0
        %v2957 = vmax.f32 %v2925, 0.0
        %2958 = vst.msk [vmem:[%s391] sm:$0xff] %vm438, %v2926
        %2959 = vst.msk [vmem:[%s391 + $0x8] sm:$0xff] %vm438, %v2927
        %2960 = vst.msk [vmem:[%s391 + $0x10] sm:$0xff] %vm438, %v2928
        %2961 = vst.msk [vmem:[%s391 + $0x18] sm:$0xff] %vm438, %v2929
        %2962 = vst.msk [vmem:[%s391 + $0x20] sm:$0xff] %vm438, %v2930
        %2963 = vst.msk [vmem:[%s391 + $0x28] sm:$0xff] %vm438, %v2931
        %2964 = vst.msk [vmem:[%s391 + $0x30] sm:$0xff] %vm438, %v2932
        %2965 = vst.msk [vmem:[%s391 + $0x38] sm:$0xff] %vm438, %v2933
        %2966 = vst.msk [vmem:[%s391 + $0x40] sm:$0xff] %vm438, %v2934
        %2967 = vst.msk [vmem:[%s391 + $0x48] sm:$0xff] %vm438, %v2935
        %2968 = vst.msk [vmem:[%s391 + $0x50] sm:$0xff] %vm438, %v2936
        %2969 = vst.msk [vmem:[%s391 + $0x58] sm:$0xff] %vm438, %v2937
        %2970 = vst.msk [vmem:[%s391 + $0x60] sm:$0xff] %vm438, %v2938
        %2971 = vst.msk [vmem:[%s391 + $0x68] sm:$0xff] %vm438, %v2939
        %2972 = vst.msk [vmem:[%s391 + $0x70] sm:$0xff] %vm438, %v2940
        %2973 = vst.msk [vmem:[%s391 + $0x78] sm:$0xff] %vm438, %v2941
        %2974 = vst.msk [vmem:[%s391 + $0x80] sm:$0xff] %vm438, %v2942
        %2975 = vst.msk [vmem:[%s391 + $0x88] sm:$0xff] %vm438, %v2943
        %2976 = vst.msk [vmem:[%s391 + $0x90] sm:$0xff] %vm438, %v2944
        %2977 = vst.msk [vmem:[%s391 + $0x98] sm:$0xff] %vm438, %v2945
        %2978 = vst.msk [vmem:[%s391 + $0xa0] sm:$0xff] %vm438, %v2946
        %2979 = vst.msk [vmem:[%s391 + $0xa8] sm:$0xff] %vm438, %v2947
        %2980 = vst.msk [vmem:[%s391 + $0xb0] sm:$0xff] %vm438, %v2948
        %2981 = vst.msk [vmem:[%s391 + $0xb8] sm:$0xff] %vm438, %v2949
        %2982 = vst.msk [vmem:[%s391 + $0xc0] sm:$0xff] %vm438, %v2950
        %2983 = vst.msk [vmem:[%s391 + $0xc8] sm:$0xff] %vm438, %v2951
        %2984 = vst.msk [vmem:[%s391 + $0xd0] sm:$0xff] %vm438, %v2952
        %2985 = vst.msk [vmem:[%s391 + $0xd8] sm:$0xff] %vm438, %v2953
        %2986 = vst.msk [vmem:[%s391 + $0xe0] sm:$0xff] %vm438, %v2954
        %2987 = vst.msk [vmem:[%s391 + $0xe8] sm:$0xff] %vm438, %v2955
        %2988 = vst.msk [vmem:[%s391 + $0xf0] sm:$0xff] %vm438, %v2956
        %2989 = vst.msk [vmem:[%s391 + $0xf8] sm:$0xff] %vm438, %v2957
        %s2990 = sand.u32 %s264, 1
        %s2991 = scalar_lea.sflag [#allocation5], %s2990
        %s2992 = sand.u32 %s264, 1
        %s2993 = smul.addr %s2992, 256
        %s2994 = scalar_lea.vmem [#allocation6], %s2993
        // Predicated region
        $region65: #{bottleneck_forward.1} parent=59 // pred_check
          %p2995 = pneg %p274
        $region66: #{bottleneck_forward.1} parent=59 // pred_check_branch
          %2997 = sbr.rel (%p2995) target = $region68
        $region67: #{bottleneck_forward.1} parent=59 // pred_region
          %s2998 = smul.u32 16, %s32
          %s3000 = ssub.s32 4096, 4096
          %3001 = vsyncadd %s2991, %s3000
          %s3002 = smul.addr %s2998, 2
          %s3003 = smul.addr %s31, 32
          %s3004 = sadd.s32 %s3002, %s3003
          %s3005 = smul.addr %s3004, 128
          %s3006 = scalar_lea.hbm %s10, %s3005
          %s3007 = sshll.u32 %s2994, 4
          %s3008 = int_to_ptr.vmem [resolvable:$true] %s3007
          %3013 = dma.vmem_to_hbm [thread:$0]  %s3008, 4096, %s3006, %s2991, 128, 128, 8
        $region68: #{bottleneck_forward.1} parent=59 // pred_fallthru
          _
      $region60: #{bottleneck_forward.1} parent=5 // pred_fallthru
        _
      %p3014 = scmp.le.s32.totalorder 2, %s22
      // Predicated region
      $region69: #{bottleneck_forward.1} parent=5 // pred_check
        %p3015 = pneg %p3014
      $region70: #{bottleneck_forward.1} parent=5 // pred_check_branch
        %3017 = sbr.rel (%p3015) target = $region72
      $region71: #{bottleneck_forward.1} parent=5 // pred_region
        %s3018 = ssub.s32 %s22, 2
        // Predicated region
        $region73: #{bottleneck_forward.1} parent=71 // pred_check
          %p3019 = pneg %p280
        $region74: #{bottleneck_forward.1} parent=71 // pred_check_branch
          %3021 = sbr.rel (%p3019) target = $region76
        $region75: #{bottleneck_forward.1} parent=71 // pred_region
          %s3022 = sand.u32 %s265, 1
          %s3023 = scalar_lea.sflag [#allocation5], %s3022
          %s3024 = sand.u32 %s265, 1
          %s3025 = smul.addr %s3024, 256
          %s3026 = scalar_lea.vmem [#allocation6], %s3025
          %3027 = dma.done %s3023, 4096
        $region76: #{bottleneck_forward.1} parent=71 // pred_fallthru
          _
      $region72: #{bottleneck_forward.1} parent=5 // pred_fallthru
        _
    $region6: #{bottleneck_forward.1} parent=1 // loop_footer
      %s26 = sadd.s32 1, %s22
    $region7: #{bottleneck_forward.1} parent=1 // loop_footer_branch
      %21 = sbr.rel target = $region3
    $region8: #{bottleneck_forward.1} parent=1 // loop_exit
      _
    %3028 = vsyncpa [#allocation4], 1
    %s3029 = scalar_lea.sflag [#allocation4], 1
    %3030 = vsyncpa %s3029, 1
    %3031 = vsyncpa [#allocation5], 1
    %s3032 = scalar_lea.sflag [#allocation5], 1
    %3033 = vsyncpa %s3032, 1

</llo_original>
